<compile_context>
chip_gen: v5e
topology: v5e:2x2
jax: 0.10.0
libtpu: 0.0.40
codegen_flags: <defaults>
</compile_context>

<pallas_src>
import jax
import jax.numpy as jnp
from jax.experimental import pallas as pl
from jax.experimental.pallas import tpu as pltpu

LN_EPS = 1e-5  # PyTorch nn.LayerNorm default
_HIDDEN_DIMS = (512, 256, 128, 256, 512)


def _linear(h, w_ref, b_ref):
    """h @ W + b; h is already the MXU operand dtype (bf16), accumulate in f32."""
    return jnp.dot(h, w_ref[...], preferred_element_type=jnp.float32) + b_ref[...]


def _ln_relu_bf16(h, g_ref, b_ref):
    """Single-pass LayerNorm + ReLU; moments in f32, fused relu+downcast to bf16."""
    inv_n = 1.0 / h.shape[-1]                       # compile-time constant
    s1 = jnp.sum(h, axis=-1, keepdims=True)
    s2 = jnp.sum(h * h, axis=-1, keepdims=True)
    mean = s1 * inv_n
    var = jnp.maximum(s2 * inv_n - mean * mean, 0.0)   # guard cancellation
    inv_std = jax.lax.rsqrt(var + LN_EPS)
    y = (h - mean) * inv_std * g_ref[...] + b_ref[...]
    # NOTE: on v6e/v7x the affine/ReLU could run in packed bf16 for a further
    # ~2x VPU win; kept in f32 here so the same kernel is also optimal-safe on v5e.
    return jnp.maximum(y, 0.0).astype(jnp.bfloat16)


def soh_kernel(
    x_ref,
    # encoder
    w1, b1, g1, be1,
    w2, b2, g2, be2,
    w3, b3, g3, be3,
    # decoder (first two blocks)
    w4, b4, g4, be4,
    w5, b5, g5, be5,
    # final decoder Linear + skip Linear (separate weights, fused bias b6s = b6+bs)
    w6, ws, b6s,
    out_ref,
):
    x = x_ref[...].astype(jnp.bfloat16)              # cast once; reused by skip

    # ---------------- encoder ----------------  (Dropout = identity in eval mode)
    h = _ln_relu_bf16(_linear(x, w1, b1), g1, be1)       # Linear(D,512)+LN+ReLU
    h = _ln_relu_bf16(_linear(h, w2, b2), g2, be2)       # Linear(512,256)+LN+ReLU
    enc = _ln_relu_bf16(_linear(h, w3, b3), g3, be3)     # Linear(256,128)+LN+ReLU

    # ---------------- decoder ----------------
    d = _ln_relu_bf16(_linear(enc, w4, b4), g4, be4)     # Linear(128,256)+LN+ReLU
    d = _ln_relu_bf16(_linear(d, w5, b5), g5, be5)       # Linear(256,512)+LN+ReLU

    # decoded + skip: two accumulating matmuls into one f32 accumulator.
    out = (jnp.dot(d, w6[...], preferred_element_type=jnp.float32)
           + jnp.dot(x, ws[...], preferred_element_type=jnp.float32)
           + b6s[...])
    out_ref[...] = out.astype(out_ref.dtype)


def _const_spec(arr):
    """Grid-invariant (weight/bias/LN) block: whole array, constant block index."""
    nd = arr.ndim
    return pl.BlockSpec(arr.shape, lambda i, _nd=nd: (0,) * _nd)


def _choose_tile(B, block_batch):
    """Sublane-aligned batch tile; >= 2 tiles when B allows (feeds both v7x TCs)."""
    TB = max(8, (min(block_batch, B) // 8) * 8)
    nb = pl.cdiv(B, TB)
    if nb < 2 and B >= 16:
        TB = max(8, (((B + 1) // 2) // 8) * 8)
        nb = pl.cdiv(B, TB)
    return TB, nb


def _vmem_limit_bytes(kparams, TB, D):
    """Real footprint + headroom; stays well under v7x's 64 MiB physical VMEM."""
    weight_bytes = sum(int(p.size) * p.dtype.itemsize for p in kparams)
    io_bytes = 2 * 2 * TB * D * 4                      # double-buffered x/out (f32)
    act_bytes = TB * sum(_HIDDEN_DIMS) * 4             # live intermediates (f32)
    est = weight_bytes + io_bytes + 2 * act_bytes + (4 << 20)
    return int(min(max(est, 16 << 20), 48 << 20))


def soh_predictor_forward(x, kernel_params, *, block_batch=512,
                          out_dtype=jnp.float32):
    """x: [B, D] f32 (D % 128 == 0).  kernel_params: prepare_kernel_params() output."""
    B, D = x.shape
    assert D % 128 == 0, "input_dim must be a multiple of 128 (pad on the host)"

    TB, nb = _choose_tile(B, block_batch)

    in_specs = [pl.BlockSpec((TB, D), lambda i: (i, 0))]          # x: batch-tiled
    in_specs += [_const_spec(p) for p in kernel_params]
    out_spec = pl.BlockSpec((TB, D), lambda i: (i, 0))

    flops = 2 * B * (D * 512 + 512 * 256 + 256 * 128
                     + 128 * 256 + 256 * 512 + 512 * D + D * D)
    bytes_accessed = (int(x.size) * x.dtype.itemsize
                      + B * D * jnp.dtype(out_dtype).itemsize
                      + sum(int(p.size) * p.dtype.itemsize for p in kernel_params))

    return pl.pallas_call(
        soh_kernel,
        out_shape=jax.ShapeDtypeStruct((B, D), out_dtype),
        grid_spec=pltpu.PrefetchScalarGridSpec(
            num_scalar_prefetch=0,
            grid=(nb,),
            in_specs=in_specs,
            out_specs=out_spec,
        ),
        compiler_params=pltpu.CompilerParams(
            dimension_semantics=("parallel",),       # batch tiles shard across TCs
            vmem_limit_bytes=_vmem_limit_bytes(kernel_params, TB, D),
        ),
        cost_estimate=pl.CostEstimate(
            flops=flops, transcendentals=5 * B, bytes_accessed=bytes_accessed),
    )(x, *kernel_params)


# ----------------------------------------------------------------------------
# Parameter construction (PyTorch-layout, f32) and kernel-ready packing.
# ----------------------------------------------------------------------------
def init_params(key, input_dim):
    """Synthetic f32 parameters mirroring the PyTorch module. Weights are [in, out]."""
    dims = [
        (input_dim, 512), (512, 256), (256, 128),   # encoder linears
        (128, 256), (256, 512), (512, input_dim),   # decoder linears
        (input_dim, input_dim),                     # skip
    ]
    ln_dims = [512, 256, 128, 256, 512]

    keys = jax.random.split(key, 2 * len(dims))
    weights, biases = [], []
    for i, (din, dout) in enumerate(dims):
        bound = 1.0 / (din ** 0.5)
        weights.append(jax.random.uniform(keys[2 * i], (din, dout),
                                          jnp.float32, -bound, bound))
        biases.append(jax.random.uniform(keys[2 * i + 1], (1, dout),
                                         jnp.float32, -bound, bound))

    gammas = [jnp.ones((1, d), jnp.float32) for d in ln_dims]
    betas = [jnp.zeros((1, d), jnp.float32) for d in ln_dims]

    return (
        weights[0], biases[0], gammas[0], betas[0],   # enc L1 + LN
        weights[1], biases[1], gammas[1], betas[1],   # enc L2 + LN
        weights[2], biases[2], gammas[2], betas[2],   # enc L3 + LN
        weights[3], biases[3], gammas[3], betas[3],   # dec L1 + LN
        weights[4], biases[4], gammas[4], betas[4],   # dec L2 + LN
        weights[5], biases[5],                        # dec L3
        weights[6], biases[6],                        # skip
    )


def prepare_kernel_params(params):
    """Cast weights to bf16; keep W6/Ws separate (two accumulating matmuls), fuse biases."""
    (w1, b1, g1, be1, w2, b2, g2, be2, w3, b3, g3, be3,
     w4, b4, g4, be4, w5, b5, g5, be5, w6, b6, ws, bs) = params
    bf = lambda w: w.astype(jnp.bfloat16)
    b6s = b6 + bs                                     # [1, D] f32
    return (bf(w1), b1, g1, be1,
            bf(w2), b2, g2, be2,
            bf(w3), b3, g3, be3,
            bf(w4), b4, g4, be4,
            bf(w5), b5, g5, be5,
            bf(w6), bf(ws), b6s)


def reference_forward(x, params):
    """Pure-JAX f32 reference mirroring the PyTorch module structure."""
    (w1, b1, g1, be1, w2, b2, g2, be2, w3, b3, g3, be3,
     w4, b4, g4, be4, w5, b5, g5, be5, w6, b6, ws, bs) = params
    P = jax.lax.Precision.HIGHEST

    def lin(h, w, b):
        return jnp.dot(h, w, precision=P) + b

    def lnr(h, g, b):
        m = h.mean(-1, keepdims=True)
        v = ((h - m) ** 2).mean(-1, keepdims=True)
        return jax.nn.relu((h - m) / jnp.sqrt(v + LN_EPS) * g + b)

    h = lnr(lin(x, w1, b1), g1, be1)
    h = lnr(lin(h, w2, b2), g2, be2)
    enc = lnr(lin(h, w3, b3), g3, be3)
    d = lnr(lin(enc, w4, b4), g4, be4)
    d = lnr(lin(d, w5, b5), g5, be5)
    decoded = lin(d, w6, b6)
    return decoded + lin(x, ws, bs)


if __name__ == "__main__":
    INPUT_DIM = 128   # lane-aligned input_dim
    BATCH = 32        # sublane-aligned batch

    key = jax.random.PRNGKey(0)
    kx, kp = jax.random.split(key)
    x = jax.random.normal(kx, (BATCH, INPUT_DIM), jnp.float32)

    params = init_params(kp, INPUT_DIM)          # f32, PyTorch-style layout
    kparams = prepare_kernel_params(params)      # bf16 weights, fused final bias

    # block_batch=8 exercises multi-step batch pipelining (4 tiles) at this small
    # demo shape; production default is 512.
    out = soh_predictor_forward(x, kparams, block_batch=8)
    out = jax.block_until_ready(out)

    ref = reference_forward(x, params)
    assert out.shape == (BATCH, INPUT_DIM)
    # bf16 weights/activations in the kernel vs. f32 reference -> loose tolerance.
    assert jnp.allclose(out, ref, atol=5e-2, rtol=5e-2), "mismatch vs reference"

    print("KERNEL_OK")
</pallas_src>

<mosaic_0001>
module attributes {stable_mosaic.version = 11 : i64} {
  func.func @soh_kernel(%arg0: i32, %arg1: memref<8x128xf32, #tpu.memory_space<vmem>>, %arg2: memref<128x512xbf16, #tpu.memory_space<vmem>>, %arg3: memref<1x512xf32, #tpu.memory_space<vmem>>, %arg4: memref<1x512xf32, #tpu.memory_space<vmem>>, %arg5: memref<1x512xf32, #tpu.memory_space<vmem>>, %arg6: memref<512x256xbf16, #tpu.memory_space<vmem>>, %arg7: memref<1x256xf32, #tpu.memory_space<vmem>>, %arg8: memref<1x256xf32, #tpu.memory_space<vmem>>, %arg9: memref<1x256xf32, #tpu.memory_space<vmem>>, %arg10: memref<256x128xbf16, #tpu.memory_space<vmem>>, %arg11: memref<1x128xf32, #tpu.memory_space<vmem>>, %arg12: memref<1x128xf32, #tpu.memory_space<vmem>>, %arg13: memref<1x128xf32, #tpu.memory_space<vmem>>, %arg14: memref<128x256xbf16, #tpu.memory_space<vmem>>, %arg15: memref<1x256xf32, #tpu.memory_space<vmem>>, %arg16: memref<1x256xf32, #tpu.memory_space<vmem>>, %arg17: memref<1x256xf32, #tpu.memory_space<vmem>>, %arg18: memref<256x512xbf16, #tpu.memory_space<vmem>>, %arg19: memref<1x512xf32, #tpu.memory_space<vmem>>, %arg20: memref<1x512xf32, #tpu.memory_space<vmem>>, %arg21: memref<1x512xf32, #tpu.memory_space<vmem>>, %arg22: memref<512x128xbf16, #tpu.memory_space<vmem>>, %arg23: memref<128x128xbf16, #tpu.memory_space<vmem>>, %arg24: memref<1x128xf32, #tpu.memory_space<vmem>>, %arg25: memref<8x128xf32, #tpu.memory_space<vmem>>) attributes {dimension_semantics = [#tpu.dimension_semantics<parallel>], iteration_bounds = array<i64: 4>, scalar_prefetch = 0 : i64, scratch_operands = 0 : i64, tpu.core_type = #tpu.core_type<tc>, window_params = [{transform_indices = @transform_0, window_bounds = array<i64: 8, 128>}, {pipeline_mode = #tpu.pipeline_mode<synchronous>, transform_indices = @transform_1, window_bounds = array<i64: 128, 512>}, {pipeline_mode = #tpu.pipeline_mode<synchronous>, transform_indices = @transform_2, window_bounds = array<i64: 1, 512>}, {pipeline_mode = #tpu.pipeline_mode<synchronous>, transform_indices = @transform_3, window_bounds = array<i64: 1, 512>}, {pipeline_mode = #tpu.pipeline_mode<synchronous>, transform_indices = @transform_4, window_bounds = array<i64: 1, 512>}, {pipeline_mode = #tpu.pipeline_mode<synchronous>, transform_indices = @transform_5, window_bounds = array<i64: 512, 256>}, {pipeline_mode = #tpu.pipeline_mode<synchronous>, transform_indices = @transform_6, window_bounds = array<i64: 1, 256>}, {pipeline_mode = #tpu.pipeline_mode<synchronous>, transform_indices = @transform_7, window_bounds = array<i64: 1, 256>}, {pipeline_mode = #tpu.pipeline_mode<synchronous>, transform_indices = @transform_8, window_bounds = array<i64: 1, 256>}, {pipeline_mode = #tpu.pipeline_mode<synchronous>, transform_indices = @transform_9, window_bounds = array<i64: 256, 128>}, {pipeline_mode = #tpu.pipeline_mode<synchronous>, transform_indices = @transform_10, window_bounds = array<i64: 1, 128>}, {pipeline_mode = #tpu.pipeline_mode<synchronous>, transform_indices = @transform_11, window_bounds = array<i64: 1, 128>}, {pipeline_mode = #tpu.pipeline_mode<synchronous>, transform_indices = @transform_12, window_bounds = array<i64: 1, 128>}, {pipeline_mode = #tpu.pipeline_mode<synchronous>, transform_indices = @transform_13, window_bounds = array<i64: 128, 256>}, {pipeline_mode = #tpu.pipeline_mode<synchronous>, transform_indices = @transform_14, window_bounds = array<i64: 1, 256>}, {pipeline_mode = #tpu.pipeline_mode<synchronous>, transform_indices = @transform_15, window_bounds = array<i64: 1, 256>}, {pipeline_mode = #tpu.pipeline_mode<synchronous>, transform_indices = @transform_16, window_bounds = array<i64: 1, 256>}, {pipeline_mode = #tpu.pipeline_mode<synchronous>, transform_indices = @transform_17, window_bounds = array<i64: 256, 512>}, {pipeline_mode = #tpu.pipeline_mode<synchronous>, transform_indices = @transform_18, window_bounds = array<i64: 1, 512>}, {pipeline_mode = #tpu.pipeline_mode<synchronous>, transform_indices = @transform_19, window_bounds = array<i64: 1, 512>}, {pipeline_mode = #tpu.pipeline_mode<synchronous>, transform_indices = @transform_20, window_bounds = array<i64: 1, 512>}, {pipeline_mode = #tpu.pipeline_mode<synchronous>, transform_indices = @transform_21, window_bounds = array<i64: 512, 128>}, {pipeline_mode = #tpu.pipeline_mode<synchronous>, transform_indices = @transform_22, window_bounds = array<i64: 128, 128>}, {pipeline_mode = #tpu.pipeline_mode<synchronous>, transform_indices = @transform_23, window_bounds = array<i64: 1, 128>}, {transform_indices = @transform_24, window_bounds = array<i64: 8, 128>}]} {
    %c0 = arith.constant 0 : index
    %c0_0 = arith.constant 0 : index
    %0 = vector.load %arg1[%c0, %c0_0] : memref<8x128xf32, #tpu.memory_space<vmem>>, vector<8x128xf32>
    %1 = arith.truncf %0 : vector<8x128xf32> to vector<8x128xbf16>
    %c0_1 = arith.constant 0 : index
    %c0_2 = arith.constant 0 : index
    %2 = vector.load %arg2[%c0_1, %c0_2] : memref<128x512xbf16, #tpu.memory_space<vmem>>, vector<128x512xbf16>
    %cst = arith.constant dense<0.000000e+00> : vector<8x512xf32>
    %3 = tpu.matmul %1, %2, %cst {dimension_numbers = #tpu.dot_dimension_numbers<[1], [0], [0], [1], [0, 0, 1, 1], [], []>} : vector<8x128xbf16>, vector<128x512xbf16>, vector<8x512xf32> -> vector<8x512xf32>
    %c0_3 = arith.constant 0 : index
    %c0_4 = arith.constant 0 : index
    %4 = vector.load %arg3[%c0_3, %c0_4] : memref<1x512xf32, #tpu.memory_space<vmem>>, vector<1x512xf32>
    %5 = vector.broadcast %4 : vector<1x512xf32> to vector<8x512xf32>
    %6 = arith.addf %3, %5 : vector<8x512xf32>
    %cst_5 = arith.constant dense<0.000000e+00> : vector<8xf32>
    %7 = vector.multi_reduction <add>, %6, %cst_5 [1] : vector<8x512xf32> to vector<8xf32>
    %8 = vector.shape_cast %7 : vector<8xf32> to vector<8x1xf32>
    %9 = arith.mulf %6, %6 : vector<8x512xf32>
    %cst_6 = arith.constant dense<0.000000e+00> : vector<8xf32>
    %10 = vector.multi_reduction <add>, %9, %cst_6 [1] : vector<8x512xf32> to vector<8xf32>
    %11 = vector.shape_cast %10 : vector<8xf32> to vector<8x1xf32>
    %cst_7 = arith.constant 0.001953125 : f32
    %12 = vector.broadcast %cst_7 : f32 to vector<8x1xf32>
    %13 = arith.mulf %8, %12 : vector<8x1xf32>
    %cst_8 = arith.constant 0.001953125 : f32
    %14 = vector.broadcast %cst_8 : f32 to vector<8x1xf32>
    %15 = arith.mulf %11, %14 : vector<8x1xf32>
    %16 = arith.mulf %13, %13 : vector<8x1xf32>
    %17 = arith.subf %15, %16 : vector<8x1xf32>
    %cst_9 = arith.constant 0.000000e+00 : f32
    %18 = vector.broadcast %cst_9 : f32 to vector<8x1xf32>
    %19 = arith.maximumf %17, %18 : vector<8x1xf32>
    %cst_10 = arith.constant 9.99999974E-6 : f32
    %20 = vector.broadcast %cst_10 : f32 to vector<8x1xf32>
    %21 = arith.addf %19, %20 : vector<8x1xf32>
    %22 = math.rsqrt %21 : vector<8x1xf32>
    %23 = vector.broadcast %13 : vector<8x1xf32> to vector<8x512xf32>
    %24 = arith.subf %6, %23 : vector<8x512xf32>
    %25 = vector.broadcast %22 : vector<8x1xf32> to vector<8x512xf32>
    %26 = arith.mulf %24, %25 : vector<8x512xf32>
    %c0_11 = arith.constant 0 : index
    %c0_12 = arith.constant 0 : index
    %27 = vector.load %arg4[%c0_11, %c0_12] : memref<1x512xf32, #tpu.memory_space<vmem>>, vector<1x512xf32>
    %28 = vector.broadcast %27 : vector<1x512xf32> to vector<8x512xf32>
    %29 = arith.mulf %26, %28 : vector<8x512xf32>
    %c0_13 = arith.constant 0 : index
    %c0_14 = arith.constant 0 : index
    %30 = vector.load %arg5[%c0_13, %c0_14] : memref<1x512xf32, #tpu.memory_space<vmem>>, vector<1x512xf32>
    %31 = vector.broadcast %30 : vector<1x512xf32> to vector<8x512xf32>
    %32 = arith.addf %29, %31 : vector<8x512xf32>
    %cst_15 = arith.constant 0.000000e+00 : f32
    %33 = vector.broadcast %cst_15 : f32 to vector<8x512xf32>
    %34 = arith.maximumf %32, %33 : vector<8x512xf32>
    %35 = arith.truncf %34 : vector<8x512xf32> to vector<8x512xbf16>
    %c0_16 = arith.constant 0 : index
    %c0_17 = arith.constant 0 : index
    %36 = vector.load %arg6[%c0_16, %c0_17] : memref<512x256xbf16, #tpu.memory_space<vmem>>, vector<512x256xbf16>
    %cst_18 = arith.constant dense<0.000000e+00> : vector<8x256xf32>
    %37 = tpu.matmul %35, %36, %cst_18 {dimension_numbers = #tpu.dot_dimension_numbers<[1], [0], [0], [1], [0, 0, 1, 1], [], []>} : vector<8x512xbf16>, vector<512x256xbf16>, vector<8x256xf32> -> vector<8x256xf32>
    %c0_19 = arith.constant 0 : index
    %c0_20 = arith.constant 0 : index
    %38 = vector.load %arg7[%c0_19, %c0_20] : memref<1x256xf32, #tpu.memory_space<vmem>>, vector<1x256xf32>
    %39 = vector.broadcast %38 : vector<1x256xf32> to vector<8x256xf32>
    %40 = arith.addf %37, %39 : vector<8x256xf32>
    %cst_21 = arith.constant dense<0.000000e+00> : vector<8xf32>
    %41 = vector.multi_reduction <add>, %40, %cst_21 [1] : vector<8x256xf32> to vector<8xf32>
    %42 = vector.shape_cast %41 : vector<8xf32> to vector<8x1xf32>
    %43 = arith.mulf %40, %40 : vector<8x256xf32>
    %cst_22 = arith.constant dense<0.000000e+00> : vector<8xf32>
    %44 = vector.multi_reduction <add>, %43, %cst_22 [1] : vector<8x256xf32> to vector<8xf32>
    %45 = vector.shape_cast %44 : vector<8xf32> to vector<8x1xf32>
    %cst_23 = arith.constant 3.906250e-03 : f32
    %46 = vector.broadcast %cst_23 : f32 to vector<8x1xf32>
    %47 = arith.mulf %42, %46 : vector<8x1xf32>
    %cst_24 = arith.constant 3.906250e-03 : f32
    %48 = vector.broadcast %cst_24 : f32 to vector<8x1xf32>
    %49 = arith.mulf %45, %48 : vector<8x1xf32>
    %50 = arith.mulf %47, %47 : vector<8x1xf32>
    %51 = arith.subf %49, %50 : vector<8x1xf32>
    %cst_25 = arith.constant 0.000000e+00 : f32
    %52 = vector.broadcast %cst_25 : f32 to vector<8x1xf32>
    %53 = arith.maximumf %51, %52 : vector<8x1xf32>
    %cst_26 = arith.constant 9.99999974E-6 : f32
    %54 = vector.broadcast %cst_26 : f32 to vector<8x1xf32>
    %55 = arith.addf %53, %54 : vector<8x1xf32>
    %56 = math.rsqrt %55 : vector<8x1xf32>
    %57 = vector.broadcast %47 : vector<8x1xf32> to vector<8x256xf32>
    %58 = arith.subf %40, %57 : vector<8x256xf32>
    %59 = vector.broadcast %56 : vector<8x1xf32> to vector<8x256xf32>
    %60 = arith.mulf %58, %59 : vector<8x256xf32>
    %c0_27 = arith.constant 0 : index
    %c0_28 = arith.constant 0 : index
    %61 = vector.load %arg8[%c0_27, %c0_28] : memref<1x256xf32, #tpu.memory_space<vmem>>, vector<1x256xf32>
    %62 = vector.broadcast %61 : vector<1x256xf32> to vector<8x256xf32>
    %63 = arith.mulf %60, %62 : vector<8x256xf32>
    %c0_29 = arith.constant 0 : index
    %c0_30 = arith.constant 0 : index
    %64 = vector.load %arg9[%c0_29, %c0_30] : memref<1x256xf32, #tpu.memory_space<vmem>>, vector<1x256xf32>
    %65 = vector.broadcast %64 : vector<1x256xf32> to vector<8x256xf32>
    %66 = arith.addf %63, %65 : vector<8x256xf32>
    %cst_31 = arith.constant 0.000000e+00 : f32
    %67 = vector.broadcast %cst_31 : f32 to vector<8x256xf32>
    %68 = arith.maximumf %66, %67 : vector<8x256xf32>
    %69 = arith.truncf %68 : vector<8x256xf32> to vector<8x256xbf16>
    %c0_32 = arith.constant 0 : index
    %c0_33 = arith.constant 0 : index
    %70 = vector.load %arg10[%c0_32, %c0_33] : memref<256x128xbf16, #tpu.memory_space<vmem>>, vector<256x128xbf16>
    %cst_34 = arith.constant dense<0.000000e+00> : vector<8x128xf32>
    %71 = tpu.matmul %69, %70, %cst_34 {dimension_numbers = #tpu.dot_dimension_numbers<[1], [0], [0], [1], [0, 0, 1, 1], [], []>} : vector<8x256xbf16>, vector<256x128xbf16>, vector<8x128xf32> -> vector<8x128xf32>
    %c0_35 = arith.constant 0 : index
    %c0_36 = arith.constant 0 : index
    %72 = vector.load %arg11[%c0_35, %c0_36] : memref<1x128xf32, #tpu.memory_space<vmem>>, vector<1x128xf32>
    %73 = vector.broadcast %72 : vector<1x128xf32> to vector<8x128xf32>
    %74 = arith.addf %71, %73 : vector<8x128xf32>
    %cst_37 = arith.constant dense<0.000000e+00> : vector<8xf32>
    %75 = vector.multi_reduction <add>, %74, %cst_37 [1] : vector<8x128xf32> to vector<8xf32>
    %76 = vector.shape_cast %75 : vector<8xf32> to vector<8x1xf32>
    %77 = arith.mulf %74, %74 : vector<8x128xf32>
    %cst_38 = arith.constant dense<0.000000e+00> : vector<8xf32>
    %78 = vector.multi_reduction <add>, %77, %cst_38 [1] : vector<8x128xf32> to vector<8xf32>
    %79 = vector.shape_cast %78 : vector<8xf32> to vector<8x1xf32>
    %cst_39 = arith.constant 7.812500e-03 : f32
    %80 = vector.broadcast %cst_39 : f32 to vector<8x1xf32>
    %81 = arith.mulf %76, %80 : vector<8x1xf32>
    %cst_40 = arith.constant 7.812500e-03 : f32
    %82 = vector.broadcast %cst_40 : f32 to vector<8x1xf32>
    %83 = arith.mulf %79, %82 : vector<8x1xf32>
    %84 = arith.mulf %81, %81 : vector<8x1xf32>
    %85 = arith.subf %83, %84 : vector<8x1xf32>
    %cst_41 = arith.constant 0.000000e+00 : f32
    %86 = vector.broadcast %cst_41 : f32 to vector<8x1xf32>
    %87 = arith.maximumf %85, %86 : vector<8x1xf32>
    %cst_42 = arith.constant 9.99999974E-6 : f32
    %88 = vector.broadcast %cst_42 : f32 to vector<8x1xf32>
    %89 = arith.addf %87, %88 : vector<8x1xf32>
    %90 = math.rsqrt %89 : vector<8x1xf32>
    %91 = vector.broadcast %81 : vector<8x1xf32> to vector<8x128xf32>
    %92 = arith.subf %74, %91 : vector<8x128xf32>
    %93 = vector.broadcast %90 : vector<8x1xf32> to vector<8x128xf32>
    %94 = arith.mulf %92, %93 : vector<8x128xf32>
    %c0_43 = arith.constant 0 : index
    %c0_44 = arith.constant 0 : index
    %95 = vector.load %arg12[%c0_43, %c0_44] : memref<1x128xf32, #tpu.memory_space<vmem>>, vector<1x128xf32>
    %96 = vector.broadcast %95 : vector<1x128xf32> to vector<8x128xf32>
    %97 = arith.mulf %94, %96 : vector<8x128xf32>
    %c0_45 = arith.constant 0 : index
    %c0_46 = arith.constant 0 : index
    %98 = vector.load %arg13[%c0_45, %c0_46] : memref<1x128xf32, #tpu.memory_space<vmem>>, vector<1x128xf32>
    %99 = vector.broadcast %98 : vector<1x128xf32> to vector<8x128xf32>
    %100 = arith.addf %97, %99 : vector<8x128xf32>
    %cst_47 = arith.constant 0.000000e+00 : f32
    %101 = vector.broadcast %cst_47 : f32 to vector<8x128xf32>
    %102 = arith.maximumf %100, %101 : vector<8x128xf32>
    %103 = arith.truncf %102 : vector<8x128xf32> to vector<8x128xbf16>
    %c0_48 = arith.constant 0 : index
    %c0_49 = arith.constant 0 : index
    %104 = vector.load %arg14[%c0_48, %c0_49] : memref<128x256xbf16, #tpu.memory_space<vmem>>, vector<128x256xbf16>
    %cst_50 = arith.constant dense<0.000000e+00> : vector<8x256xf32>
    %105 = tpu.matmul %103, %104, %cst_50 {dimension_numbers = #tpu.dot_dimension_numbers<[1], [0], [0], [1], [0, 0, 1, 1], [], []>} : vector<8x128xbf16>, vector<128x256xbf16>, vector<8x256xf32> -> vector<8x256xf32>
    %c0_51 = arith.constant 0 : index
    %c0_52 = arith.constant 0 : index
    %106 = vector.load %arg15[%c0_51, %c0_52] : memref<1x256xf32, #tpu.memory_space<vmem>>, vector<1x256xf32>
    %107 = vector.broadcast %106 : vector<1x256xf32> to vector<8x256xf32>
    %108 = arith.addf %105, %107 : vector<8x256xf32>
    %cst_53 = arith.constant dense<0.000000e+00> : vector<8xf32>
    %109 = vector.multi_reduction <add>, %108, %cst_53 [1] : vector<8x256xf32> to vector<8xf32>
    %110 = vector.shape_cast %109 : vector<8xf32> to vector<8x1xf32>
    %111 = arith.mulf %108, %108 : vector<8x256xf32>
    %cst_54 = arith.constant dense<0.000000e+00> : vector<8xf32>
    %112 = vector.multi_reduction <add>, %111, %cst_54 [1] : vector<8x256xf32> to vector<8xf32>
    %113 = vector.shape_cast %112 : vector<8xf32> to vector<8x1xf32>
    %cst_55 = arith.constant 3.906250e-03 : f32
    %114 = vector.broadcast %cst_55 : f32 to vector<8x1xf32>
    %115 = arith.mulf %110, %114 : vector<8x1xf32>
    %cst_56 = arith.constant 3.906250e-03 : f32
    %116 = vector.broadcast %cst_56 : f32 to vector<8x1xf32>
    %117 = arith.mulf %113, %116 : vector<8x1xf32>
    %118 = arith.mulf %115, %115 : vector<8x1xf32>
    %119 = arith.subf %117, %118 : vector<8x1xf32>
    %cst_57 = arith.constant 0.000000e+00 : f32
    %120 = vector.broadcast %cst_57 : f32 to vector<8x1xf32>
    %121 = arith.maximumf %119, %120 : vector<8x1xf32>
    %cst_58 = arith.constant 9.99999974E-6 : f32
    %122 = vector.broadcast %cst_58 : f32 to vector<8x1xf32>
    %123 = arith.addf %121, %122 : vector<8x1xf32>
    %124 = math.rsqrt %123 : vector<8x1xf32>
    %125 = vector.broadcast %115 : vector<8x1xf32> to vector<8x256xf32>
    %126 = arith.subf %108, %125 : vector<8x256xf32>
    %127 = vector.broadcast %124 : vector<8x1xf32> to vector<8x256xf32>
    %128 = arith.mulf %126, %127 : vector<8x256xf32>
    %c0_59 = arith.constant 0 : index
    %c0_60 = arith.constant 0 : index
    %129 = vector.load %arg16[%c0_59, %c0_60] : memref<1x256xf32, #tpu.memory_space<vmem>>, vector<1x256xf32>
    %130 = vector.broadcast %129 : vector<1x256xf32> to vector<8x256xf32>
    %131 = arith.mulf %128, %130 : vector<8x256xf32>
    %c0_61 = arith.constant 0 : index
    %c0_62 = arith.constant 0 : index
    %132 = vector.load %arg17[%c0_61, %c0_62] : memref<1x256xf32, #tpu.memory_space<vmem>>, vector<1x256xf32>
    %133 = vector.broadcast %132 : vector<1x256xf32> to vector<8x256xf32>
    %134 = arith.addf %131, %133 : vector<8x256xf32>
    %cst_63 = arith.constant 0.000000e+00 : f32
    %135 = vector.broadcast %cst_63 : f32 to vector<8x256xf32>
    %136 = arith.maximumf %134, %135 : vector<8x256xf32>
    %137 = arith.truncf %136 : vector<8x256xf32> to vector<8x256xbf16>
    %c0_64 = arith.constant 0 : index
    %c0_65 = arith.constant 0 : index
    %138 = vector.load %arg18[%c0_64, %c0_65] : memref<256x512xbf16, #tpu.memory_space<vmem>>, vector<256x512xbf16>
    %cst_66 = arith.constant dense<0.000000e+00> : vector<8x512xf32>
    %139 = tpu.matmul %137, %138, %cst_66 {dimension_numbers = #tpu.dot_dimension_numbers<[1], [0], [0], [1], [0, 0, 1, 1], [], []>} : vector<8x256xbf16>, vector<256x512xbf16>, vector<8x512xf32> -> vector<8x512xf32>
    %c0_67 = arith.constant 0 : index
    %c0_68 = arith.constant 0 : index
    %140 = vector.load %arg19[%c0_67, %c0_68] : memref<1x512xf32, #tpu.memory_space<vmem>>, vector<1x512xf32>
    %141 = vector.broadcast %140 : vector<1x512xf32> to vector<8x512xf32>
    %142 = arith.addf %139, %141 : vector<8x512xf32>
    %cst_69 = arith.constant dense<0.000000e+00> : vector<8xf32>
    %143 = vector.multi_reduction <add>, %142, %cst_69 [1] : vector<8x512xf32> to vector<8xf32>
    %144 = vector.shape_cast %143 : vector<8xf32> to vector<8x1xf32>
    %145 = arith.mulf %142, %142 : vector<8x512xf32>
    %cst_70 = arith.constant dense<0.000000e+00> : vector<8xf32>
    %146 = vector.multi_reduction <add>, %145, %cst_70 [1] : vector<8x512xf32> to vector<8xf32>
    %147 = vector.shape_cast %146 : vector<8xf32> to vector<8x1xf32>
    %cst_71 = arith.constant 0.001953125 : f32
    %148 = vector.broadcast %cst_71 : f32 to vector<8x1xf32>
    %149 = arith.mulf %144, %148 : vector<8x1xf32>
    %cst_72 = arith.constant 0.001953125 : f32
    %150 = vector.broadcast %cst_72 : f32 to vector<8x1xf32>
    %151 = arith.mulf %147, %150 : vector<8x1xf32>
    %152 = arith.mulf %149, %149 : vector<8x1xf32>
    %153 = arith.subf %151, %152 : vector<8x1xf32>
    %cst_73 = arith.constant 0.000000e+00 : f32
    %154 = vector.broadcast %cst_73 : f32 to vector<8x1xf32>
    %155 = arith.maximumf %153, %154 : vector<8x1xf32>
    %cst_74 = arith.constant 9.99999974E-6 : f32
    %156 = vector.broadcast %cst_74 : f32 to vector<8x1xf32>
    %157 = arith.addf %155, %156 : vector<8x1xf32>
    %158 = math.rsqrt %157 : vector<8x1xf32>
    %159 = vector.broadcast %149 : vector<8x1xf32> to vector<8x512xf32>
    %160 = arith.subf %142, %159 : vector<8x512xf32>
    %161 = vector.broadcast %158 : vector<8x1xf32> to vector<8x512xf32>
    %162 = arith.mulf %160, %161 : vector<8x512xf32>
    %c0_75 = arith.constant 0 : index
    %c0_76 = arith.constant 0 : index
    %163 = vector.load %arg20[%c0_75, %c0_76] : memref<1x512xf32, #tpu.memory_space<vmem>>, vector<1x512xf32>
    %164 = vector.broadcast %163 : vector<1x512xf32> to vector<8x512xf32>
    %165 = arith.mulf %162, %164 : vector<8x512xf32>
    %c0_77 = arith.constant 0 : index
    %c0_78 = arith.constant 0 : index
    %166 = vector.load %arg21[%c0_77, %c0_78] : memref<1x512xf32, #tpu.memory_space<vmem>>, vector<1x512xf32>
    %167 = vector.broadcast %166 : vector<1x512xf32> to vector<8x512xf32>
    %168 = arith.addf %165, %167 : vector<8x512xf32>
    %cst_79 = arith.constant 0.000000e+00 : f32
    %169 = vector.broadcast %cst_79 : f32 to vector<8x512xf32>
    %170 = arith.maximumf %168, %169 : vector<8x512xf32>
    %171 = arith.truncf %170 : vector<8x512xf32> to vector<8x512xbf16>
    %c0_80 = arith.constant 0 : index
    %c0_81 = arith.constant 0 : index
    %172 = vector.load %arg22[%c0_80, %c0_81] : memref<512x128xbf16, #tpu.memory_space<vmem>>, vector<512x128xbf16>
    %cst_82 = arith.constant dense<0.000000e+00> : vector<8x128xf32>
    %173 = tpu.matmul %171, %172, %cst_82 {dimension_numbers = #tpu.dot_dimension_numbers<[1], [0], [0], [1], [0, 0, 1, 1], [], []>} : vector<8x512xbf16>, vector<512x128xbf16>, vector<8x128xf32> -> vector<8x128xf32>
    %c0_83 = arith.constant 0 : index
    %c0_84 = arith.constant 0 : index
    %174 = vector.load %arg23[%c0_83, %c0_84] : memref<128x128xbf16, #tpu.memory_space<vmem>>, vector<128x128xbf16>
    %cst_85 = arith.constant dense<0.000000e+00> : vector<8x128xf32>
    %175 = tpu.matmul %1, %174, %cst_85 {dimension_numbers = #tpu.dot_dimension_numbers<[1], [0], [0], [1], [0, 0, 1, 1], [], []>} : vector<8x128xbf16>, vector<128x128xbf16>, vector<8x128xf32> -> vector<8x128xf32>
    %176 = arith.addf %173, %175 : vector<8x128xf32>
    %c0_86 = arith.constant 0 : index
    %c0_87 = arith.constant 0 : index
    %177 = vector.load %arg24[%c0_86, %c0_87] : memref<1x128xf32, #tpu.memory_space<vmem>>, vector<1x128xf32>
    %178 = vector.broadcast %177 : vector<1x128xf32> to vector<8x128xf32>
    %179 = arith.addf %176, %178 : vector<8x128xf32>
    %c0_88 = arith.constant 0 : index
    %c0_89 = arith.constant 0 : index
    %180 = vector.load %arg25[%c0_88, %c0_89] : memref<8x128xf32, #tpu.memory_space<vmem>>, vector<8x128xf32>
    tpu.vector_store %arg25[%c0_88, %c0_89], %179 {strides = array<i32>} : memref<8x128xf32, #tpu.memory_space<vmem>>, vector<8x128xf32>,
    return
  }
  func.func @transform_0(%arg0: i32) -> (i32, i32) {
    %c0_i32 = arith.constant 0 : i32
    %c0_i32_0 = arith.constant 0 : i32
    return %arg0, %c0_i32 : i32, i32
  }
  func.func @transform_1(%arg0: i32) -> (i32, i32) {
    %c0_i32 = arith.constant 0 : i32
    %c0_i32_0 = arith.constant 0 : i32
    %c0_i32_1 = arith.constant 0 : i32
    return %c0_i32, %c0_i32_0 : i32, i32
  }
  func.func @transform_2(%arg0: i32) -> (i32, i32) {
    %c0_i32 = arith.constant 0 : i32
    %c0_i32_0 = arith.constant 0 : i32
    %c0_i32_1 = arith.constant 0 : i32
    return %c0_i32, %c0_i32_0 : i32, i32
  }
  func.func @transform_3(%arg0: i32) -> (i32, i32) {
    %c0_i32 = arith.constant 0 : i32
    %c0_i32_0 = arith.constant 0 : i32
    %c0_i32_1 = arith.constant 0 : i32
    return %c0_i32, %c0_i32_0 : i32, i32
  }
  func.func @transform_4(%arg0: i32) -> (i32, i32) {
    %c0_i32 = arith.constant 0 : i32
    %c0_i32_0 = arith.constant 0 : i32
    %c0_i32_1 = arith.constant 0 : i32
    return %c0_i32, %c0_i32_0 : i32, i32
  }
  func.func @transform_5(%arg0: i32) -> (i32, i32) {
    %c0_i32 = arith.constant 0 : i32
    %c0_i32_0 = arith.constant 0 : i32
    %c0_i32_1 = arith.constant 0 : i32
    return %c0_i32, %c0_i32_0 : i32, i32
  }
  func.func @transform_6(%arg0: i32) -> (i32, i32) {
    %c0_i32 = arith.constant 0 : i32
    %c0_i32_0 = arith.constant 0 : i32
    %c0_i32_1 = arith.constant 0 : i32
    return %c0_i32, %c0_i32_0 : i32, i32
  }
  func.func @transform_7(%arg0: i32) -> (i32, i32) {
    %c0_i32 = arith.constant 0 : i32
    %c0_i32_0 = arith.constant 0 : i32
    %c0_i32_1 = arith.constant 0 : i32
    return %c0_i32, %c0_i32_0 : i32, i32
  }
  func.func @transform_8(%arg0: i32) -> (i32, i32) {
    %c0_i32 = arith.constant 0 : i32
    %c0_i32_0 = arith.constant 0 : i32
    %c0_i32_1 = arith.constant 0 : i32
    return %c0_i32, %c0_i32_0 : i32, i32
  }
  func.func @transform_9(%arg0: i32) -> (i32, i32) {
    %c0_i32 = arith.constant 0 : i32
    %c0_i32_0 = arith.constant 0 : i32
    %c0_i32_1 = arith.constant 0 : i32
    return %c0_i32, %c0_i32_0 : i32, i32
  }
  func.func @transform_10(%arg0: i32) -> (i32, i32) {
    %c0_i32 = arith.constant 0 : i32
    %c0_i32_0 = arith.constant 0 : i32
    %c0_i32_1 = arith.constant 0 : i32
    return %c0_i32, %c0_i32_0 : i32, i32
  }
  func.func @transform_11(%arg0: i32) -> (i32, i32) {
    %c0_i32 = arith.constant 0 : i32
    %c0_i32_0 = arith.constant 0 : i32
    %c0_i32_1 = arith.constant 0 : i32
    return %c0_i32, %c0_i32_0 : i32, i32
  }
  func.func @transform_12(%arg0: i32) -> (i32, i32) {
    %c0_i32 = arith.constant 0 : i32
    %c0_i32_0 = arith.constant 0 : i32
    %c0_i32_1 = arith.constant 0 : i32
    return %c0_i32, %c0_i32_0 : i32, i32
  }
  func.func @transform_13(%arg0: i32) -> (i32, i32) {
    %c0_i32 = arith.constant 0 : i32
    %c0_i32_0 = arith.constant 0 : i32
    %c0_i32_1 = arith.constant 0 : i32
    return %c0_i32, %c0_i32_0 : i32, i32
  }
  func.func @transform_14(%arg0: i32) -> (i32, i32) {
    %c0_i32 = arith.constant 0 : i32
    %c0_i32_0 = arith.constant 0 : i32
    %c0_i32_1 = arith.constant 0 : i32
    return %c0_i32, %c0_i32_0 : i32, i32
  }
  func.func @transform_15(%arg0: i32) -> (i32, i32) {
    %c0_i32 = arith.constant 0 : i32
    %c0_i32_0 = arith.constant 0 : i32
    %c0_i32_1 = arith.constant 0 : i32
    return %c0_i32, %c0_i32_0 : i32, i32
  }
  func.func @transform_16(%arg0: i32) -> (i32, i32) {
    %c0_i32 = arith.constant 0 : i32
    %c0_i32_0 = arith.constant 0 : i32
    %c0_i32_1 = arith.constant 0 : i32
    return %c0_i32, %c0_i32_0 : i32, i32
  }
  func.func @transform_17(%arg0: i32) -> (i32, i32) {
    %c0_i32 = arith.constant 0 : i32
    %c0_i32_0 = arith.constant 0 : i32
    %c0_i32_1 = arith.constant 0 : i32
    return %c0_i32, %c0_i32_0 : i32, i32
  }
  func.func @transform_18(%arg0: i32) -> (i32, i32) {
    %c0_i32 = arith.constant 0 : i32
    %c0_i32_0 = arith.constant 0 : i32
    %c0_i32_1 = arith.constant 0 : i32
    return %c0_i32, %c0_i32_0 : i32, i32
  }
  func.func @transform_19(%arg0: i32) -> (i32, i32) {
    %c0_i32 = arith.constant 0 : i32
    %c0_i32_0 = arith.constant 0 : i32
    %c0_i32_1 = arith.constant 0 : i32
    return %c0_i32, %c0_i32_0 : i32, i32
  }
  func.func @transform_20(%arg0: i32) -> (i32, i32) {
    %c0_i32 = arith.constant 0 : i32
    %c0_i32_0 = arith.constant 0 : i32
    %c0_i32_1 = arith.constant 0 : i32
    return %c0_i32, %c0_i32_0 : i32, i32
  }
  func.func @transform_21(%arg0: i32) -> (i32, i32) {
    %c0_i32 = arith.constant 0 : i32
    %c0_i32_0 = arith.constant 0 : i32
    %c0_i32_1 = arith.constant 0 : i32
    return %c0_i32, %c0_i32_0 : i32, i32
  }
  func.func @transform_22(%arg0: i32) -> (i32, i32) {
    %c0_i32 = arith.constant 0 : i32
    %c0_i32_0 = arith.constant 0 : i32
    %c0_i32_1 = arith.constant 0 : i32
    return %c0_i32, %c0_i32_0 : i32, i32
  }
  func.func @transform_23(%arg0: i32) -> (i32, i32) {
    %c0_i32 = arith.constant 0 : i32
    %c0_i32_0 = arith.constant 0 : i32
    %c0_i32_1 = arith.constant 0 : i32
    return %c0_i32, %c0_i32_0 : i32, i32
  }
  func.func @transform_24(%arg0: i32) -> (i32, i32) {
    %c0_i32 = arith.constant 0 : i32
    %c0_i32_0 = arith.constant 0 : i32
    return %arg0, %c0_i32 : i32, i32
  }
}

</mosaic_0001>

<llo_original>
// kernel: tpu_custom_call.1
$region0: #{tpu_custom_call.1}
  #allocation0 [shape = 'u32[]', space=smem, size = 0x4, offset = 0x4, fixed_abs, tag = 'smem constant byte address 0x4 - core index']
  #allocation1 [shape = 'u32[72,128]{1,0:T(1,128)}', space=vmem, size = 0x9000, scoped, tag = 'internal scratch']
  %s0 = inlined_call_operand.hbm [shape: f32[32,128], index: 0, kind: input, shape index: {}]
  %s1 = inlined_call_operand.hbm [shape: bf16[128,512], index: 1, kind: input, shape index: {}]
  %s2 = inlined_call_operand.hbm [shape: f32[1,512], index: 2, kind: input, shape index: {}]
  %s3 = inlined_call_operand.hbm [shape: f32[1,512], index: 3, kind: input, shape index: {}]
  %s4 = inlined_call_operand.hbm [shape: f32[1,512], index: 4, kind: input, shape index: {}]
  %s5 = inlined_call_operand.hbm [shape: bf16[512,256], index: 5, kind: input, shape index: {}]
  %s6 = inlined_call_operand.hbm [shape: f32[1,256], index: 6, kind: input, shape index: {}]
  %s7 = inlined_call_operand.hbm [shape: f32[1,256], index: 7, kind: input, shape index: {}]
  %s8 = inlined_call_operand.hbm [shape: f32[1,256], index: 8, kind: input, shape index: {}]
  %s9 = inlined_call_operand.hbm [shape: bf16[256,128], index: 9, kind: input, shape index: {}]
  %s10 = inlined_call_operand.hbm [shape: f32[1,128], index: 10, kind: input, shape index: {}]
  %s11 = inlined_call_operand.hbm [shape: f32[1,128], index: 11, kind: input, shape index: {}]
  %s12 = inlined_call_operand.hbm [shape: f32[1,128], index: 12, kind: input, shape index: {}]
  %s13 = inlined_call_operand.hbm [shape: bf16[128,256], index: 13, kind: input, shape index: {}]
  %s14 = inlined_call_operand.hbm [shape: f32[1,256], index: 14, kind: input, shape index: {}]
  %s15 = inlined_call_operand.vmem [shape: f32[1,256], index: 15, kind: input, shape index: {}]
  %s16 = inlined_call_operand.hbm [shape: f32[1,256], index: 16, kind: input, shape index: {}]
  %s17 = inlined_call_operand.hbm [shape: bf16[256,512], index: 17, kind: input, shape index: {}]
  %s18 = inlined_call_operand.vmem [shape: f32[1,512], index: 18, kind: input, shape index: {}]
  %s19 = inlined_call_operand.vmem [shape: f32[1,512], index: 19, kind: input, shape index: {}]
  %s20 = inlined_call_operand.vmem [shape: f32[1,512], index: 20, kind: input, shape index: {}]
  %s21 = inlined_call_operand.hbm [shape: bf16[512,128], index: 21, kind: input, shape index: {}]
  %s22 = inlined_call_operand.hbm [shape: bf16[128,128], index: 22, kind: input, shape index: {}]
  %s23 = inlined_call_operand.vmem [shape: f32[1,128], index: 23, kind: input, shape index: {}]
  %s24 = inlined_call_operand.hbm [shape: f32[32,128], index: 24, kind: output, shape index: {}]
  %s25 = sld [smem:[#allocation0]]
  $region205: #{tpu_custom_call.1} parent=0
    _
  %s27 = ssub.s32 1, %s25
  %s28 = scalar_select 0, %s27, %s25
  $region1: #{tpu_custom_call.1} parent=0
    #allocation2 [shape = 'u8[8192]{0}', space=vmem, size = 0x2000, scoped, tag = 'input window, operand 0']
    #allocation3 [shape = 's32[2]{0}', space=sflag, size = 0x8, scoped, tag = 'scoped memory for tpu_custom_call.1']
    #allocation4 [shape = 's32[2]{0}', space=sflag, size = 0x8, scoped, tag = 'scoped memory for tpu_custom_call.1']
    #allocation5 [shape = 'u8[131072]{0}', space=vmem, size = 0x20000, scoped, tag = 'input window, operand 1, single buffered']
    #allocation6 [shape = 's32[1]{0}', space=sflag, size = 0x4, scoped, tag = 'scoped memory for tpu_custom_call.1']
    #allocation7 [shape = 'u8[2048]{0}', space=vmem, size = 0x800, scoped, tag = 'input window, operand 2, single buffered']
    #allocation8 [shape = 'u8[2048]{0}', space=vmem, size = 0x800, scoped, tag = 'input window, operand 3, single buffered']
    #allocation9 [shape = 's32[1]{0}', space=sflag, size = 0x4, scoped, tag = 'scoped memory for tpu_custom_call.1']
    #allocation10 [shape = 'u8[2048]{0}', space=vmem, size = 0x800, scoped, tag = 'input window, operand 4, single buffered']
    #allocation11 [shape = 'u8[262144]{0}', space=vmem, size = 0x40000, scoped, tag = 'input window, operand 5, single buffered']
    #allocation12 [shape = 's32[1]{0}', space=sflag, size = 0x4, scoped, tag = 'scoped memory for tpu_custom_call.1']
    #allocation13 [shape = 'u8[1024]{0}', space=vmem, size = 0x400, scoped, tag = 'input window, operand 6, single buffered']
    #allocation14 [shape = 'u8[1024]{0}', space=vmem, size = 0x400, scoped, tag = 'input window, operand 7, single buffered']
    #allocation15 [shape = 's32[1]{0}', space=sflag, size = 0x4, scoped, tag = 'scoped memory for tpu_custom_call.1']
    #allocation16 [shape = 'u8[1024]{0}', space=vmem, size = 0x400, scoped, tag = 'input window, operand 8, single buffered']
    #allocation17 [shape = 'u8[65536]{0}', space=vmem, size = 0x10000, scoped, tag = 'input window, operand 9, single buffered']
    #allocation18 [shape = 's32[1]{0}', space=sflag, size = 0x4, scoped, tag = 'scoped memory for tpu_custom_call.1']
    #allocation19 [shape = 'u8[512]{0}', space=vmem, size = 0x400, scoped, tag = 'input window, operand 10, single buffered']
    #allocation20 [shape = 'u8[512]{0}', space=vmem, size = 0x400, scoped, tag = 'input window, operand 11, single buffered']
    #allocation21 [shape = 's32[1]{0}', space=sflag, size = 0x4, scoped, tag = 'scoped memory for tpu_custom_call.1']
    #allocation22 [shape = 'u8[512]{0}', space=vmem, size = 0x400, scoped, tag = 'input window, operand 12, single buffered']
    #allocation23 [shape = 'u8[65536]{0}', space=vmem, size = 0x10000, scoped, tag = 'input window, operand 13, single buffered']
    #allocation24 [shape = 's32[1]{0}', space=sflag, size = 0x4, scoped, tag = 'scoped memory for tpu_custom_call.1']
    #allocation25 [shape = 'u8[1024]{0}', space=vmem, size = 0x400, scoped, tag = 'input window, operand 14, single buffered']
    #allocation26 [shape = 'u8[1024]{0}', space=vmem, size = 0x400, scoped, tag = 'input window, operand 16, single buffered']
    #allocation27 [shape = 's32[1]{0}', space=sflag, size = 0x4, scoped, tag = 'scoped memory for tpu_custom_call.1']
    #allocation28 [shape = 'u8[262144]{0}', space=vmem, size = 0x40000, scoped, tag = 'input window, operand 17, single buffered']
    #allocation29 [shape = 'u8[131072]{0}', space=vmem, size = 0x20000, scoped, tag = 'input window, operand 21, single buffered']
    #allocation30 [shape = 's32[1]{0}', space=sflag, size = 0x4, scoped, tag = 'scoped memory for tpu_custom_call.1']
    #allocation31 [shape = 'u8[32768]{0}', space=vmem, size = 0x8000, scoped, tag = 'input window, operand 22, single buffered']
    #allocation32 [shape = 'u8[8192]{0}', space=vmem, size = 0x2000, scoped, tag = 'output window, operand 0']
    %29 = vsyncpa [#allocation3], 0
    %s30 = scalar_lea.sflag [#allocation3], 1
    %31 = vsyncpa %s30, 0
    %32 = vsyncpa [#allocation6], 0
    %33 = vsyncpa [#allocation9], 0
    %34 = vsyncpa [#allocation12], 0
    %35 = vsyncpa [#allocation15], 0
    %36 = vsyncpa [#allocation18], 0
    %37 = vsyncpa [#allocation21], 0
    %38 = vsyncpa [#allocation24], 0
    %39 = vsyncpa [#allocation27], 0
    %40 = vsyncpa [#allocation30], 0
    %41 = vsyncpa [#allocation4], 0
    %s42 = scalar_lea.sflag [#allocation4], 1
    %43 = vsyncpa %s42, 0
    loop: start=0, step=1, limit=6
    $region2: #{tpu_custom_call.1} parent=1 // loop_pre_header
      _
    $region3: #{tpu_custom_call.1} parent=1 // loop_header
      %s45 = sphi 0, %s49
      %p46 = scmp.ge.s32.totalorder %s45, 6
      %s55 = sphi 0, %s57
      %s58 = sphi 0, %s55
      %s59 = sphi 0, %s58
      %s75 = sphi 0, %s59
      %s79 = sphi 0, %s79
      %s81 = sphi 0, %s79
      %s82 = sphi 0, %s81
      %s96 = sphi 0, %s82
      %s100 = sphi 0, %s100
      %s102 = sphi 0, %s100
      %s103 = sphi 0, %s102
      %s117 = sphi 0, %s103
      %s121 = sphi 0, %s121
      %s123 = sphi 0, %s121
      %s124 = sphi 0, %s123
      %s138 = sphi 0, %s124
      %s142 = sphi 0, %s142
      %s144 = sphi 0, %s142
      %s145 = sphi 0, %s144
      %s159 = sphi 0, %s145
      %s163 = sphi 0, %s163
      %s165 = sphi 0, %s163
      %s166 = sphi 0, %s165
      %s180 = sphi 0, %s166
      %s184 = sphi 0, %s184
      %s186 = sphi 0, %s184
      %s187 = sphi 0, %s186
      %s201 = sphi 0, %s187
      %s205 = sphi 0, %s205
      %s207 = sphi 0, %s205
      %s208 = sphi 0, %s207
      %s222 = sphi 0, %s208
      %s226 = sphi 0, %s226
      %s228 = sphi 0, %s226
      %s229 = sphi 0, %s228
      %s243 = sphi 0, %s229
      %s247 = sphi 0, %s247
      %s249 = sphi 0, %s247
      %s250 = sphi 0, %s249
      %s264 = sphi 0, %s250
      %s268 = sphi 0, %s268
      %s270 = sphi 0, %s268
      %s271 = sphi 0, %s270
      %s285 = sphi 0, %s271
      %s289 = sphi 0, %s289
      %s291 = sphi 0, %s289
      %s292 = sphi 0, %s291
      %s306 = sphi 0, %s292
      %s310 = sphi 0, %s310
      %s312 = sphi 0, %s310
      %s313 = sphi 0, %s312
      %s327 = sphi 0, %s313
      %s331 = sphi 0, %s331
      %s333 = sphi 0, %s331
      %s334 = sphi 0, %s333
      %s348 = sphi 0, %s334
      %s352 = sphi 0, %s352
      %s354 = sphi 0, %s352
      %s355 = sphi 0, %s354
      %s369 = sphi 0, %s355
      %s373 = sphi 0, %s373
      %s375 = sphi 0, %s373
      %s376 = sphi 0, %s375
      %s390 = sphi 0, %s376
      %s394 = sphi 0, %s394
      %s396 = sphi 0, %s394
      %s397 = sphi 0, %s396
      %s411 = sphi 0, %s397
      %s415 = sphi 0, %s415
      %s417 = sphi 0, %s415
      %s418 = sphi 0, %s417
      %s432 = sphi 0, %s418
      %s436 = sphi 0, %s436
      %s438 = sphi 0, %s436
      %s439 = sphi 0, %s438
      %s453 = sphi 0, %s439
      %s457 = sphi 0, %s457
      %s459 = sphi 0, %s457
      %s460 = sphi 0, %s459
      %s474 = sphi 0, %s460
      %s478 = sphi 0, %s478
      %s480 = sphi 0, %s478
      %s481 = sphi 0, %s480
      %s495 = sphi 0, %s481
      %s499 = sphi 0, %s499
      %s501 = sphi 0, %s499
      %s502 = sphi 0, %s501
      %s516 = sphi 0, %s502
      %s520 = sphi 0, %s520
      %s522 = sphi 0, %s520
      %s523 = sphi 0, %s522
      %s537 = sphi 0, %s523
      %s541 = sphi 0, %s541
      %s543 = sphi 0, %s541
      %s544 = sphi 0, %s543
      %s558 = sphi 0, %s544
      %s564 = sphi 0, %s566
      %s567 = sphi 0, %s564
      %s568 = sphi 0, %s567
      %s584 = sphi 0, %s568
    $region4: #{tpu_custom_call.1} parent=1 // loop_header_branch
      %48 = sbr.rel (%p46) target = $region8
    $region5: #{tpu_custom_call.1} parent=1 // loop_body
      %s50 = ssub.s32 %s45, 1
      %s51 = ssub.s32 %s45, 2
      %s52 = sadd.s32 %s45, 1
      %s53 = ssub.s32 %s45, %s52
      %p54 = scmp.eq.s32.totalorder %s53, 0
      %s56 = sadd.s32 %s55, 1
      %s57 = scalar_select %p54, %s55, %s56
      %p60 = pneg %p54
      %p61 = scmp.eq.s32.totalorder %s45, 3
      %p62 = por %p60, %p61
      %p63 = scmp.ne.s32.totalorder %s55, %s58
      %p64 = scmp.eq.s32.totalorder %s45, 0
      %p65 = por %p63, %p64
      %p66 = scmp.ne.s32.totalorder %s55, %s58
      %p67 = scmp.eq.s32.totalorder %s50, 3
      %p68 = por %p66, %p67
      %p69 = scmp.ne.s32.totalorder %s58, %s59
      %p70 = scmp.eq.s32.totalorder %s50, 0
      %p71 = por %p69, %p70
      %p72 = scmp.ne.s32.totalorder %s58, %s59
      %p73 = scmp.eq.s32.totalorder %s51, 3
      %p74 = por %p72, %p73
      %p76 = scmp.ne.s32.totalorder %s59, %s75
      %p77 = scmp.eq.s32.totalorder %s51, 0
      %p78 = por %p76, %p77
      %s80 = sadd.s32 %s79, 1
      %p83 = scmp.eq.s32.totalorder %s45, 3
      %p84 = scmp.ne.s32.totalorder %s79, %s81
      %p85 = scmp.eq.s32.totalorder %s45, 0
      %p86 = por %p84, %p85
      %p87 = scmp.ne.s32.totalorder %s79, %s81
      %p88 = scmp.eq.s32.totalorder %s50, 3
      %p89 = por %p87, %p88
      %p90 = scmp.ne.s32.totalorder %s81, %s82
      %p91 = scmp.eq.s32.totalorder %s50, 0
      %p92 = por %p90, %p91
      %p93 = scmp.ne.s32.totalorder %s81, %s82
      %p94 = scmp.eq.s32.totalorder %s51, 3
      %p95 = por %p93, %p94
      %p97 = scmp.ne.s32.totalorder %s82, %s96
      %p98 = scmp.eq.s32.totalorder %s51, 0
      %p99 = por %p97, %p98
      %s101 = sadd.s32 %s100, 1
      %p104 = scmp.eq.s32.totalorder %s45, 3
      %p105 = scmp.ne.s32.totalorder %s100, %s102
      %p106 = scmp.eq.s32.totalorder %s45, 0
      %p107 = por %p105, %p106
      %p108 = scmp.ne.s32.totalorder %s100, %s102
      %p109 = scmp.eq.s32.totalorder %s50, 3
      %p110 = por %p108, %p109
      %p111 = scmp.ne.s32.totalorder %s102, %s103
      %p112 = scmp.eq.s32.totalorder %s50, 0
      %p113 = por %p111, %p112
      %p114 = scmp.ne.s32.totalorder %s102, %s103
      %p115 = scmp.eq.s32.totalorder %s51, 3
      %p116 = por %p114, %p115
      %p118 = scmp.ne.s32.totalorder %s103, %s117
      %p119 = scmp.eq.s32.totalorder %s51, 0
      %p120 = por %p118, %p119
      %s122 = sadd.s32 %s121, 1
      %p125 = scmp.eq.s32.totalorder %s45, 3
      %p126 = scmp.ne.s32.totalorder %s121, %s123
      %p127 = scmp.eq.s32.totalorder %s45, 0
      %p128 = por %p126, %p127
      %p129 = scmp.ne.s32.totalorder %s121, %s123
      %p130 = scmp.eq.s32.totalorder %s50, 3
      %p131 = por %p129, %p130
      %p132 = scmp.ne.s32.totalorder %s123, %s124
      %p133 = scmp.eq.s32.totalorder %s50, 0
      %p134 = por %p132, %p133
      %p135 = scmp.ne.s32.totalorder %s123, %s124
      %p136 = scmp.eq.s32.totalorder %s51, 3
      %p137 = por %p135, %p136
      %p139 = scmp.ne.s32.totalorder %s124, %s138
      %p140 = scmp.eq.s32.totalorder %s51, 0
      %p141 = por %p139, %p140
      %s143 = sadd.s32 %s142, 1
      %p146 = scmp.eq.s32.totalorder %s45, 3
      %p147 = scmp.ne.s32.totalorder %s142, %s144
      %p148 = scmp.eq.s32.totalorder %s45, 0
      %p149 = por %p147, %p148
      %p150 = scmp.ne.s32.totalorder %s142, %s144
      %p151 = scmp.eq.s32.totalorder %s50, 3
      %p152 = por %p150, %p151
      %p153 = scmp.ne.s32.totalorder %s144, %s145
      %p154 = scmp.eq.s32.totalorder %s50, 0
      %p155 = por %p153, %p154
      %p156 = scmp.ne.s32.totalorder %s144, %s145
      %p157 = scmp.eq.s32.totalorder %s51, 3
      %p158 = por %p156, %p157
      %p160 = scmp.ne.s32.totalorder %s145, %s159
      %p161 = scmp.eq.s32.totalorder %s51, 0
      %p162 = por %p160, %p161
      %s164 = sadd.s32 %s163, 1
      %p167 = scmp.eq.s32.totalorder %s45, 3
      %p168 = scmp.ne.s32.totalorder %s163, %s165
      %p169 = scmp.eq.s32.totalorder %s45, 0
      %p170 = por %p168, %p169
      %p171 = scmp.ne.s32.totalorder %s163, %s165
      %p172 = scmp.eq.s32.totalorder %s50, 3
      %p173 = por %p171, %p172
      %p174 = scmp.ne.s32.totalorder %s165, %s166
      %p175 = scmp.eq.s32.totalorder %s50, 0
      %p176 = por %p174, %p175
      %p177 = scmp.ne.s32.totalorder %s165, %s166
      %p178 = scmp.eq.s32.totalorder %s51, 3
      %p179 = por %p177, %p178
      %p181 = scmp.ne.s32.totalorder %s166, %s180
      %p182 = scmp.eq.s32.totalorder %s51, 0
      %p183 = por %p181, %p182
      %s185 = sadd.s32 %s184, 1
      %p188 = scmp.eq.s32.totalorder %s45, 3
      %p189 = scmp.ne.s32.totalorder %s184, %s186
      %p190 = scmp.eq.s32.totalorder %s45, 0
      %p191 = por %p189, %p190
      %p192 = scmp.ne.s32.totalorder %s184, %s186
      %p193 = scmp.eq.s32.totalorder %s50, 3
      %p194 = por %p192, %p193
      %p195 = scmp.ne.s32.totalorder %s186, %s187
      %p196 = scmp.eq.s32.totalorder %s50, 0
      %p197 = por %p195, %p196
      %p198 = scmp.ne.s32.totalorder %s186, %s187
      %p199 = scmp.eq.s32.totalorder %s51, 3
      %p200 = por %p198, %p199
      %p202 = scmp.ne.s32.totalorder %s187, %s201
      %p203 = scmp.eq.s32.totalorder %s51, 0
      %p204 = por %p202, %p203
      %s206 = sadd.s32 %s205, 1
      %p209 = scmp.eq.s32.totalorder %s45, 3
      %p210 = scmp.ne.s32.totalorder %s205, %s207
      %p211 = scmp.eq.s32.totalorder %s45, 0
      %p212 = por %p210, %p211
      %p213 = scmp.ne.s32.totalorder %s205, %s207
      %p214 = scmp.eq.s32.totalorder %s50, 3
      %p215 = por %p213, %p214
      %p216 = scmp.ne.s32.totalorder %s207, %s208
      %p217 = scmp.eq.s32.totalorder %s50, 0
      %p218 = por %p216, %p217
      %p219 = scmp.ne.s32.totalorder %s207, %s208
      %p220 = scmp.eq.s32.totalorder %s51, 3
      %p221 = por %p219, %p220
      %p223 = scmp.ne.s32.totalorder %s208, %s222
      %p224 = scmp.eq.s32.totalorder %s51, 0
      %p225 = por %p223, %p224
      %s227 = sadd.s32 %s226, 1
      %p230 = scmp.eq.s32.totalorder %s45, 3
      %p231 = scmp.ne.s32.totalorder %s226, %s228
      %p232 = scmp.eq.s32.totalorder %s45, 0
      %p233 = por %p231, %p232
      %p234 = scmp.ne.s32.totalorder %s226, %s228
      %p235 = scmp.eq.s32.totalorder %s50, 3
      %p236 = por %p234, %p235
      %p237 = scmp.ne.s32.totalorder %s228, %s229
      %p238 = scmp.eq.s32.totalorder %s50, 0
      %p239 = por %p237, %p238
      %p240 = scmp.ne.s32.totalorder %s228, %s229
      %p241 = scmp.eq.s32.totalorder %s51, 3
      %p242 = por %p240, %p241
      %p244 = scmp.ne.s32.totalorder %s229, %s243
      %p245 = scmp.eq.s32.totalorder %s51, 0
      %p246 = por %p244, %p245
      %s248 = sadd.s32 %s247, 1
      %p251 = scmp.eq.s32.totalorder %s45, 3
      %p252 = scmp.ne.s32.totalorder %s247, %s249
      %p253 = scmp.eq.s32.totalorder %s45, 0
      %p254 = por %p252, %p253
      %p255 = scmp.ne.s32.totalorder %s247, %s249
      %p256 = scmp.eq.s32.totalorder %s50, 3
      %p257 = por %p255, %p256
      %p258 = scmp.ne.s32.totalorder %s249, %s250
      %p259 = scmp.eq.s32.totalorder %s50, 0
      %p260 = por %p258, %p259
      %p261 = scmp.ne.s32.totalorder %s249, %s250
      %p262 = scmp.eq.s32.totalorder %s51, 3
      %p263 = por %p261, %p262
      %p265 = scmp.ne.s32.totalorder %s250, %s264
      %p266 = scmp.eq.s32.totalorder %s51, 0
      %p267 = por %p265, %p266
      %s269 = sadd.s32 %s268, 1
      %p272 = scmp.eq.s32.totalorder %s45, 3
      %p273 = scmp.ne.s32.totalorder %s268, %s270
      %p274 = scmp.eq.s32.totalorder %s45, 0
      %p275 = por %p273, %p274
      %p276 = scmp.ne.s32.totalorder %s268, %s270
      %p277 = scmp.eq.s32.totalorder %s50, 3
      %p278 = por %p276, %p277
      %p279 = scmp.ne.s32.totalorder %s270, %s271
      %p280 = scmp.eq.s32.totalorder %s50, 0
      %p281 = por %p279, %p280
      %p282 = scmp.ne.s32.totalorder %s270, %s271
      %p283 = scmp.eq.s32.totalorder %s51, 3
      %p284 = por %p282, %p283
      %p286 = scmp.ne.s32.totalorder %s271, %s285
      %p287 = scmp.eq.s32.totalorder %s51, 0
      %p288 = por %p286, %p287
      %s290 = sadd.s32 %s289, 1
      %p293 = scmp.eq.s32.totalorder %s45, 3
      %p294 = scmp.ne.s32.totalorder %s289, %s291
      %p295 = scmp.eq.s32.totalorder %s45, 0
      %p296 = por %p294, %p295
      %p297 = scmp.ne.s32.totalorder %s289, %s291
      %p298 = scmp.eq.s32.totalorder %s50, 3
      %p299 = por %p297, %p298
      %p300 = scmp.ne.s32.totalorder %s291, %s292
      %p301 = scmp.eq.s32.totalorder %s50, 0
      %p302 = por %p300, %p301
      %p303 = scmp.ne.s32.totalorder %s291, %s292
      %p304 = scmp.eq.s32.totalorder %s51, 3
      %p305 = por %p303, %p304
      %p307 = scmp.ne.s32.totalorder %s292, %s306
      %p308 = scmp.eq.s32.totalorder %s51, 0
      %p309 = por %p307, %p308
      %s311 = sadd.s32 %s310, 1
      %p314 = scmp.eq.s32.totalorder %s45, 3
      %p315 = scmp.ne.s32.totalorder %s310, %s312
      %p316 = scmp.eq.s32.totalorder %s45, 0
      %p317 = por %p315, %p316
      %p318 = scmp.ne.s32.totalorder %s310, %s312
      %p319 = scmp.eq.s32.totalorder %s50, 3
      %p320 = por %p318, %p319
      %p321 = scmp.ne.s32.totalorder %s312, %s313
      %p322 = scmp.eq.s32.totalorder %s50, 0
      %p323 = por %p321, %p322
      %p324 = scmp.ne.s32.totalorder %s312, %s313
      %p325 = scmp.eq.s32.totalorder %s51, 3
      %p326 = por %p324, %p325
      %p328 = scmp.ne.s32.totalorder %s313, %s327
      %p329 = scmp.eq.s32.totalorder %s51, 0
      %p330 = por %p328, %p329
      %s332 = sadd.s32 %s331, 1
      %p335 = scmp.eq.s32.totalorder %s45, 3
      %p336 = scmp.ne.s32.totalorder %s331, %s333
      %p337 = scmp.eq.s32.totalorder %s45, 0
      %p338 = por %p336, %p337
      %p339 = scmp.ne.s32.totalorder %s331, %s333
      %p340 = scmp.eq.s32.totalorder %s50, 3
      %p341 = por %p339, %p340
      %p342 = scmp.ne.s32.totalorder %s333, %s334
      %p343 = scmp.eq.s32.totalorder %s50, 0
      %p344 = por %p342, %p343
      %p345 = scmp.ne.s32.totalorder %s333, %s334
      %p346 = scmp.eq.s32.totalorder %s51, 3
      %p347 = por %p345, %p346
      %p349 = scmp.ne.s32.totalorder %s334, %s348
      %p350 = scmp.eq.s32.totalorder %s51, 0
      %p351 = por %p349, %p350
      %s353 = sadd.s32 %s352, 1
      %p356 = scmp.eq.s32.totalorder %s45, 3
      %p357 = scmp.ne.s32.totalorder %s352, %s354
      %p358 = scmp.eq.s32.totalorder %s45, 0
      %p359 = por %p357, %p358
      %p360 = scmp.ne.s32.totalorder %s352, %s354
      %p361 = scmp.eq.s32.totalorder %s50, 3
      %p362 = por %p360, %p361
      %p363 = scmp.ne.s32.totalorder %s354, %s355
      %p364 = scmp.eq.s32.totalorder %s50, 0
      %p365 = por %p363, %p364
      %p366 = scmp.ne.s32.totalorder %s354, %s355
      %p367 = scmp.eq.s32.totalorder %s51, 3
      %p368 = por %p366, %p367
      %p370 = scmp.ne.s32.totalorder %s355, %s369
      %p371 = scmp.eq.s32.totalorder %s51, 0
      %p372 = por %p370, %p371
      %s374 = sadd.s32 %s373, 1
      %p377 = scmp.eq.s32.totalorder %s45, 3
      %p378 = scmp.ne.s32.totalorder %s373, %s375
      %p379 = scmp.eq.s32.totalorder %s45, 0
      %p380 = por %p378, %p379
      %p381 = scmp.ne.s32.totalorder %s373, %s375
      %p382 = scmp.eq.s32.totalorder %s50, 3
      %p383 = por %p381, %p382
      %p384 = scmp.ne.s32.totalorder %s375, %s376
      %p385 = scmp.eq.s32.totalorder %s50, 0
      %p386 = por %p384, %p385
      %p387 = scmp.ne.s32.totalorder %s375, %s376
      %p388 = scmp.eq.s32.totalorder %s51, 3
      %p389 = por %p387, %p388
      %p391 = scmp.ne.s32.totalorder %s376, %s390
      %p392 = scmp.eq.s32.totalorder %s51, 0
      %p393 = por %p391, %p392
      %s395 = sadd.s32 %s394, 1
      %p398 = scmp.eq.s32.totalorder %s45, 3
      %p399 = scmp.ne.s32.totalorder %s394, %s396
      %p400 = scmp.eq.s32.totalorder %s45, 0
      %p401 = por %p399, %p400
      %p402 = scmp.ne.s32.totalorder %s394, %s396
      %p403 = scmp.eq.s32.totalorder %s50, 3
      %p404 = por %p402, %p403
      %p405 = scmp.ne.s32.totalorder %s396, %s397
      %p406 = scmp.eq.s32.totalorder %s50, 0
      %p407 = por %p405, %p406
      %p408 = scmp.ne.s32.totalorder %s396, %s397
      %p409 = scmp.eq.s32.totalorder %s51, 3
      %p410 = por %p408, %p409
      %p412 = scmp.ne.s32.totalorder %s397, %s411
      %p413 = scmp.eq.s32.totalorder %s51, 0
      %p414 = por %p412, %p413
      %s416 = sadd.s32 %s415, 1
      %p419 = scmp.eq.s32.totalorder %s45, 3
      %p420 = scmp.ne.s32.totalorder %s415, %s417
      %p421 = scmp.eq.s32.totalorder %s45, 0
      %p422 = por %p420, %p421
      %p423 = scmp.ne.s32.totalorder %s415, %s417
      %p424 = scmp.eq.s32.totalorder %s50, 3
      %p425 = por %p423, %p424
      %p426 = scmp.ne.s32.totalorder %s417, %s418
      %p427 = scmp.eq.s32.totalorder %s50, 0
      %p428 = por %p426, %p427
      %p429 = scmp.ne.s32.totalorder %s417, %s418
      %p430 = scmp.eq.s32.totalorder %s51, 3
      %p431 = por %p429, %p430
      %p433 = scmp.ne.s32.totalorder %s418, %s432
      %p434 = scmp.eq.s32.totalorder %s51, 0
      %p435 = por %p433, %p434
      %s437 = sadd.s32 %s436, 1
      %p440 = scmp.eq.s32.totalorder %s45, 3
      %p441 = scmp.ne.s32.totalorder %s436, %s438
      %p442 = scmp.eq.s32.totalorder %s45, 0
      %p443 = por %p441, %p442
      %p444 = scmp.ne.s32.totalorder %s436, %s438
      %p445 = scmp.eq.s32.totalorder %s50, 3
      %p446 = por %p444, %p445
      %p447 = scmp.ne.s32.totalorder %s438, %s439
      %p448 = scmp.eq.s32.totalorder %s50, 0
      %p449 = por %p447, %p448
      %p450 = scmp.ne.s32.totalorder %s438, %s439
      %p451 = scmp.eq.s32.totalorder %s51, 3
      %p452 = por %p450, %p451
      %p454 = scmp.ne.s32.totalorder %s439, %s453
      %p455 = scmp.eq.s32.totalorder %s51, 0
      %p456 = por %p454, %p455
      %s458 = sadd.s32 %s457, 1
      %p461 = scmp.eq.s32.totalorder %s45, 3
      %p462 = scmp.ne.s32.totalorder %s457, %s459
      %p463 = scmp.eq.s32.totalorder %s45, 0
      %p464 = por %p462, %p463
      %p465 = scmp.ne.s32.totalorder %s457, %s459
      %p466 = scmp.eq.s32.totalorder %s50, 3
      %p467 = por %p465, %p466
      %p468 = scmp.ne.s32.totalorder %s459, %s460
      %p469 = scmp.eq.s32.totalorder %s50, 0
      %p470 = por %p468, %p469
      %p471 = scmp.ne.s32.totalorder %s459, %s460
      %p472 = scmp.eq.s32.totalorder %s51, 3
      %p473 = por %p471, %p472
      %p475 = scmp.ne.s32.totalorder %s460, %s474
      %p476 = scmp.eq.s32.totalorder %s51, 0
      %p477 = por %p475, %p476
      %s479 = sadd.s32 %s478, 1
      %p482 = scmp.eq.s32.totalorder %s45, 3
      %p483 = scmp.ne.s32.totalorder %s478, %s480
      %p484 = scmp.eq.s32.totalorder %s45, 0
      %p485 = por %p483, %p484
      %p486 = scmp.ne.s32.totalorder %s478, %s480
      %p487 = scmp.eq.s32.totalorder %s50, 3
      %p488 = por %p486, %p487
      %p489 = scmp.ne.s32.totalorder %s480, %s481
      %p490 = scmp.eq.s32.totalorder %s50, 0
      %p491 = por %p489, %p490
      %p492 = scmp.ne.s32.totalorder %s480, %s481
      %p493 = scmp.eq.s32.totalorder %s51, 3
      %p494 = por %p492, %p493
      %p496 = scmp.ne.s32.totalorder %s481, %s495
      %p497 = scmp.eq.s32.totalorder %s51, 0
      %p498 = por %p496, %p497
      %s500 = sadd.s32 %s499, 1
      %p503 = scmp.eq.s32.totalorder %s45, 3
      %p504 = scmp.ne.s32.totalorder %s499, %s501
      %p505 = scmp.eq.s32.totalorder %s45, 0
      %p506 = por %p504, %p505
      %p507 = scmp.ne.s32.totalorder %s499, %s501
      %p508 = scmp.eq.s32.totalorder %s50, 3
      %p509 = por %p507, %p508
      %p510 = scmp.ne.s32.totalorder %s501, %s502
      %p511 = scmp.eq.s32.totalorder %s50, 0
      %p512 = por %p510, %p511
      %p513 = scmp.ne.s32.totalorder %s501, %s502
      %p514 = scmp.eq.s32.totalorder %s51, 3
      %p515 = por %p513, %p514
      %p517 = scmp.ne.s32.totalorder %s502, %s516
      %p518 = scmp.eq.s32.totalorder %s51, 0
      %p519 = por %p517, %p518
      %s521 = sadd.s32 %s520, 1
      %p524 = scmp.eq.s32.totalorder %s45, 3
      %p525 = scmp.ne.s32.totalorder %s520, %s522
      %p526 = scmp.eq.s32.totalorder %s45, 0
      %p527 = por %p525, %p526
      %p528 = scmp.ne.s32.totalorder %s520, %s522
      %p529 = scmp.eq.s32.totalorder %s50, 3
      %p530 = por %p528, %p529
      %p531 = scmp.ne.s32.totalorder %s522, %s523
      %p532 = scmp.eq.s32.totalorder %s50, 0
      %p533 = por %p531, %p532
      %p534 = scmp.ne.s32.totalorder %s522, %s523
      %p535 = scmp.eq.s32.totalorder %s51, 3
      %p536 = por %p534, %p535
      %p538 = scmp.ne.s32.totalorder %s523, %s537
      %p539 = scmp.eq.s32.totalorder %s51, 0
      %p540 = por %p538, %p539
      %s542 = sadd.s32 %s541, 1
      %p545 = scmp.eq.s32.totalorder %s45, 3
      %p546 = scmp.ne.s32.totalorder %s541, %s543
      %p547 = scmp.eq.s32.totalorder %s45, 0
      %p548 = por %p546, %p547
      %p549 = scmp.ne.s32.totalorder %s541, %s543
      %p550 = scmp.eq.s32.totalorder %s50, 3
      %p551 = por %p549, %p550
      %p552 = scmp.ne.s32.totalorder %s543, %s544
      %p553 = scmp.eq.s32.totalorder %s50, 0
      %p554 = por %p552, %p553
      %p555 = scmp.ne.s32.totalorder %s543, %s544
      %p556 = scmp.eq.s32.totalorder %s51, 3
      %p557 = por %p555, %p556
      %p559 = scmp.ne.s32.totalorder %s544, %s558
      %p560 = scmp.eq.s32.totalorder %s51, 0
      %p561 = por %p559, %p560
      %s562 = ssub.s32 %s45, %s52
      %p563 = scmp.eq.s32.totalorder %s562, 0
      %s565 = sadd.s32 %s564, 1
      %s566 = scalar_select %p563, %s564, %s565
      %p569 = pneg %p563
      %p570 = scmp.eq.s32.totalorder %s45, 3
      %p571 = por %p569, %p570
      %p572 = scmp.ne.s32.totalorder %s564, %s567
      %p573 = scmp.eq.s32.totalorder %s45, 0
      %p574 = por %p572, %p573
      %p575 = scmp.ne.s32.totalorder %s564, %s567
      %p576 = scmp.eq.s32.totalorder %s50, 3
      %p577 = por %p575, %p576
      %p578 = scmp.ne.s32.totalorder %s567, %s568
      %p579 = scmp.eq.s32.totalorder %s50, 0
      %p580 = por %p578, %p579
      %p581 = scmp.ne.s32.totalorder %s567, %s568
      %p582 = scmp.eq.s32.totalorder %s51, 3
      %p583 = por %p581, %p582
      %p585 = scmp.ne.s32.totalorder %s568, %s584
      %p586 = scmp.eq.s32.totalorder %s51, 0
      %p587 = por %p585, %p586
      %p588 = scmp.le.s32.totalorder 1, %s45
      %p589 = scmp.lt.s32.totalorder %s45, 5
      %p590 = pnand %p588, %p589
      %p591 = pneg %p590
      // Predicated region
      $region9: #{tpu_custom_call.1} parent=5 // pred_check
        _
      $region10: #{tpu_custom_call.1} parent=5 // pred_check_branch
        %593 = sbr.rel (%p590) target = $region12
      $region11: #{tpu_custom_call.1} parent=5 // pred_region
        %s594 = ssub.s32 %s45, 1
        // Predicated region
        $region13: #{tpu_custom_call.1} parent=11 // pred_check
          %p595 = pneg %p92
        $region14: #{tpu_custom_call.1} parent=11 // pred_check_branch
          %597 = sbr.rel (%p595) target = $region16
        $region15: #{tpu_custom_call.1} parent=11 // pred_region
          %599 = vsyncadd [#allocation6], 0
          %s600 = sshll.u32 %s1, 4
          %s601 = int_to_ptr.hbm [resolvable:$true] %s600
          %s602 = sshll.u32 [#allocation5], 4
          %s603 = int_to_ptr.vmem [resolvable:$true] %s602
          %608 = dma.hbm_to_vmem [thread:$0]  %s601, 4096, %s603, [#allocation6], 256, 256, 16
        $region16: #{tpu_custom_call.1} parent=11 // pred_fallthru
          _
        // Predicated region
        $region17: #{tpu_custom_call.1} parent=11 // pred_check
          %p609 = pneg %p113
        $region18: #{tpu_custom_call.1} parent=11 // pred_check_branch
          %611 = sbr.rel (%p609) target = $region20
        $region19: #{tpu_custom_call.1} parent=11 // pred_region
          %613 = vsyncadd [#allocation6], 0
          %s615 = sshll.u32 %s2, 4
          %s616 = int_to_ptr.hbm [resolvable:$true] %s615
          %s617 = sshll.u32 [#allocation7], 4
          %s618 = int_to_ptr.vmem [resolvable:$true] %s617
          %620 = dma.hbm_to_vmem [thread:$0]  %s616, 64, %s618, [#allocation6]
        $region20: #{tpu_custom_call.1} parent=11 // pred_fallthru
          _
        // Predicated region
        $region21: #{tpu_custom_call.1} parent=11 // pred_check
          %p621 = pneg %p134
        $region22: #{tpu_custom_call.1} parent=11 // pred_check_branch
          %623 = sbr.rel (%p621) target = $region24
        $region23: #{tpu_custom_call.1} parent=11 // pred_region
          %625 = vsyncadd [#allocation9], 0
          %s627 = sshll.u32 %s3, 4
          %s628 = int_to_ptr.hbm [resolvable:$true] %s627
          %s629 = sshll.u32 [#allocation8], 4
          %s630 = int_to_ptr.vmem [resolvable:$true] %s629
          %632 = dma.hbm_to_vmem [thread:$0]  %s628, 64, %s630, [#allocation9]
        $region24: #{tpu_custom_call.1} parent=11 // pred_fallthru
          _
        // Predicated region
        $region25: #{tpu_custom_call.1} parent=11 // pred_check
          %p633 = pneg %p155
        $region26: #{tpu_custom_call.1} parent=11 // pred_check_branch
          %635 = sbr.rel (%p633) target = $region28
        $region27: #{tpu_custom_call.1} parent=11 // pred_region
          %637 = vsyncadd [#allocation9], 0
          %s639 = sshll.u32 %s4, 4
          %s640 = int_to_ptr.hbm [resolvable:$true] %s639
          %s641 = sshll.u32 [#allocation10], 4
          %s642 = int_to_ptr.vmem [resolvable:$true] %s641
          %644 = dma.hbm_to_vmem [thread:$0]  %s640, 64, %s642, [#allocation9]
        $region28: #{tpu_custom_call.1} parent=11 // pred_fallthru
          _
        // Predicated region
        $region29: #{tpu_custom_call.1} parent=11 // pred_check
          %p645 = pneg %p176
        $region30: #{tpu_custom_call.1} parent=11 // pred_check_branch
          %647 = sbr.rel (%p645) target = $region32
        $region31: #{tpu_custom_call.1} parent=11 // pred_region
          %649 = vsyncadd [#allocation12], 0
          %s650 = sshll.u32 %s5, 4
          %s651 = int_to_ptr.hbm [resolvable:$true] %s650
          %s652 = sshll.u32 [#allocation11], 4
          %s653 = int_to_ptr.vmem [resolvable:$true] %s652
          %658 = dma.hbm_to_vmem [thread:$0]  %s651, 8192, %s653, [#allocation12], 128, 128, 8
        $region32: #{tpu_custom_call.1} parent=11 // pred_fallthru
          _
        // Predicated region
        $region33: #{tpu_custom_call.1} parent=11 // pred_check
          %p659 = pneg %p197
        $region34: #{tpu_custom_call.1} parent=11 // pred_check_branch
          %661 = sbr.rel (%p659) target = $region36
        $region35: #{tpu_custom_call.1} parent=11 // pred_region
          %663 = vsyncadd [#allocation12], 0
          %s665 = sshll.u32 %s6, 4
          %s666 = int_to_ptr.hbm [resolvable:$true] %s665
          %s667 = sshll.u32 [#allocation13], 4
          %s668 = int_to_ptr.vmem [resolvable:$true] %s667
          %670 = dma.hbm_to_vmem [thread:$0]  %s666, 32, %s668, [#allocation12]
        $region36: #{tpu_custom_call.1} parent=11 // pred_fallthru
          _
        // Predicated region
        $region37: #{tpu_custom_call.1} parent=11 // pred_check
          %p671 = pneg %p218
        $region38: #{tpu_custom_call.1} parent=11 // pred_check_branch
          %673 = sbr.rel (%p671) target = $region40
        $region39: #{tpu_custom_call.1} parent=11 // pred_region
          %675 = vsyncadd [#allocation15], 0
          %s677 = sshll.u32 %s7, 4
          %s678 = int_to_ptr.hbm [resolvable:$true] %s677
          %s679 = sshll.u32 [#allocation14], 4
          %s680 = int_to_ptr.vmem [resolvable:$true] %s679
          %682 = dma.hbm_to_vmem [thread:$0]  %s678, 32, %s680, [#allocation15]
        $region40: #{tpu_custom_call.1} parent=11 // pred_fallthru
          _
        // Predicated region
        $region41: #{tpu_custom_call.1} parent=11 // pred_check
          %p683 = pneg %p239
        $region42: #{tpu_custom_call.1} parent=11 // pred_check_branch
          %685 = sbr.rel (%p683) target = $region44
        $region43: #{tpu_custom_call.1} parent=11 // pred_region
          %687 = vsyncadd [#allocation15], 0
          %s689 = sshll.u32 %s8, 4
          %s690 = int_to_ptr.hbm [resolvable:$true] %s689
          %s691 = sshll.u32 [#allocation16], 4
          %s692 = int_to_ptr.vmem [resolvable:$true] %s691
          %694 = dma.hbm_to_vmem [thread:$0]  %s690, 32, %s692, [#allocation15]
        $region44: #{tpu_custom_call.1} parent=11 // pred_fallthru
          _
        // Predicated region
        $region45: #{tpu_custom_call.1} parent=11 // pred_check
          %p695 = pneg %p260
        $region46: #{tpu_custom_call.1} parent=11 // pred_check_branch
          %697 = sbr.rel (%p695) target = $region48
        $region47: #{tpu_custom_call.1} parent=11 // pred_region
          %699 = vsyncadd [#allocation18], 0
          %s700 = sshll.u32 %s9, 4
          %s701 = int_to_ptr.hbm [resolvable:$true] %s700
          %s702 = sshll.u32 [#allocation17], 4
          %s703 = int_to_ptr.vmem [resolvable:$true] %s702
          %708 = dma.hbm_to_vmem [thread:$0]  %s701, 2048, %s703, [#allocation18], 64, 64, 4
        $region48: #{tpu_custom_call.1} parent=11 // pred_fallthru
          _
        // Predicated region
        $region49: #{tpu_custom_call.1} parent=11 // pred_check
          %p709 = pneg %p281
        $region50: #{tpu_custom_call.1} parent=11 // pred_check_branch
          %711 = sbr.rel (%p709) target = $region52
        $region51: #{tpu_custom_call.1} parent=11 // pred_region
          %713 = vsyncadd [#allocation18], 0
          %s715 = sshll.u32 %s10, 4
          %s716 = int_to_ptr.hbm [resolvable:$true] %s715
          %s717 = sshll.u32 [#allocation19], 4
          %s718 = int_to_ptr.vmem [resolvable:$true] %s717
          %720 = dma.hbm_to_vmem [thread:$0]  %s716, 16, %s718, [#allocation18]
        $region52: #{tpu_custom_call.1} parent=11 // pred_fallthru
          _
        // Predicated region
        $region53: #{tpu_custom_call.1} parent=11 // pred_check
          %p721 = pneg %p302
        $region54: #{tpu_custom_call.1} parent=11 // pred_check_branch
          %723 = sbr.rel (%p721) target = $region56
        $region55: #{tpu_custom_call.1} parent=11 // pred_region
          %725 = vsyncadd [#allocation21], 0
          %s727 = sshll.u32 %s11, 4
          %s728 = int_to_ptr.hbm [resolvable:$true] %s727
          %s729 = sshll.u32 [#allocation20], 4
          %s730 = int_to_ptr.vmem [resolvable:$true] %s729
          %732 = dma.hbm_to_vmem [thread:$0]  %s728, 16, %s730, [#allocation21]
        $region56: #{tpu_custom_call.1} parent=11 // pred_fallthru
          _
        // Predicated region
        $region57: #{tpu_custom_call.1} parent=11 // pred_check
          %p733 = pneg %p323
        $region58: #{tpu_custom_call.1} parent=11 // pred_check_branch
          %735 = sbr.rel (%p733) target = $region60
        $region59: #{tpu_custom_call.1} parent=11 // pred_region
          %737 = vsyncadd [#allocation21], 0
          %s739 = sshll.u32 %s12, 4
          %s740 = int_to_ptr.hbm [resolvable:$true] %s739
          %s741 = sshll.u32 [#allocation22], 4
          %s742 = int_to_ptr.vmem [resolvable:$true] %s741
          %744 = dma.hbm_to_vmem [thread:$0]  %s740, 16, %s742, [#allocation21]
        $region60: #{tpu_custom_call.1} parent=11 // pred_fallthru
          _
        // Predicated region
        $region61: #{tpu_custom_call.1} parent=11 // pred_check
          %p745 = pneg %p344
        $region62: #{tpu_custom_call.1} parent=11 // pred_check_branch
          %747 = sbr.rel (%p745) target = $region64
        $region63: #{tpu_custom_call.1} parent=11 // pred_region
          %749 = vsyncadd [#allocation24], 0
          %s750 = sshll.u32 %s13, 4
          %s751 = int_to_ptr.hbm [resolvable:$true] %s750
          %s752 = sshll.u32 [#allocation23], 4
          %s753 = int_to_ptr.vmem [resolvable:$true] %s752
          %758 = dma.hbm_to_vmem [thread:$0]  %s751, 2048, %s753, [#allocation24], 128, 128, 8
        $region64: #{tpu_custom_call.1} parent=11 // pred_fallthru
          _
        // Predicated region
        $region65: #{tpu_custom_call.1} parent=11 // pred_check
          %p759 = pneg %p365
        $region66: #{tpu_custom_call.1} parent=11 // pred_check_branch
          %761 = sbr.rel (%p759) target = $region68
        $region67: #{tpu_custom_call.1} parent=11 // pred_region
          %763 = vsyncadd [#allocation24], 0
          %s765 = sshll.u32 %s14, 4
          %s766 = int_to_ptr.hbm [resolvable:$true] %s765
          %s767 = sshll.u32 [#allocation25], 4
          %s768 = int_to_ptr.vmem [resolvable:$true] %s767
          %770 = dma.hbm_to_vmem [thread:$0]  %s766, 32, %s768, [#allocation24]
        $region68: #{tpu_custom_call.1} parent=11 // pred_fallthru
          _
        // Predicated region
        $region69: #{tpu_custom_call.1} parent=11 // pred_check
          %p771 = pneg %p386
        $region70: #{tpu_custom_call.1} parent=11 // pred_check_branch
          %773 = sbr.rel (%p771) target = $region72
        $region71: #{tpu_custom_call.1} parent=11 // pred_region
          _
        $region72: #{tpu_custom_call.1} parent=11 // pred_fallthru
          _
        // Predicated region
        $region73: #{tpu_custom_call.1} parent=11 // pred_check
          %p774 = pneg %p407
        $region74: #{tpu_custom_call.1} parent=11 // pred_check_branch
          %776 = sbr.rel (%p774) target = $region76
        $region75: #{tpu_custom_call.1} parent=11 // pred_region
          %778 = vsyncadd [#allocation27], 0
          %s780 = sshll.u32 %s16, 4
          %s781 = int_to_ptr.hbm [resolvable:$true] %s780
          %s782 = sshll.u32 [#allocation26], 4
          %s783 = int_to_ptr.vmem [resolvable:$true] %s782
          %785 = dma.hbm_to_vmem [thread:$0]  %s781, 32, %s783, [#allocation27]
        $region76: #{tpu_custom_call.1} parent=11 // pred_fallthru
          _
        // Predicated region
        $region77: #{tpu_custom_call.1} parent=11 // pred_check
          %p786 = pneg %p428
        $region78: #{tpu_custom_call.1} parent=11 // pred_check_branch
          %788 = sbr.rel (%p786) target = $region80
        $region79: #{tpu_custom_call.1} parent=11 // pred_region
          %790 = vsyncadd [#allocation27], 0
          %s791 = sshll.u32 %s17, 4
          %s792 = int_to_ptr.hbm [resolvable:$true] %s791
          %s793 = sshll.u32 [#allocation28], 4
          %s794 = int_to_ptr.vmem [resolvable:$true] %s793
          %799 = dma.hbm_to_vmem [thread:$0]  %s792, 8192, %s794, [#allocation27], 256, 256, 16
        $region80: #{tpu_custom_call.1} parent=11 // pred_fallthru
          _
        // Predicated region
        $region81: #{tpu_custom_call.1} parent=11 // pred_check
          %p800 = pneg %p449
        $region82: #{tpu_custom_call.1} parent=11 // pred_check_branch
          %802 = sbr.rel (%p800) target = $region84
        $region83: #{tpu_custom_call.1} parent=11 // pred_region
          _
        $region84: #{tpu_custom_call.1} parent=11 // pred_fallthru
          _
        // Predicated region
        $region85: #{tpu_custom_call.1} parent=11 // pred_check
          %p803 = pneg %p470
        $region86: #{tpu_custom_call.1} parent=11 // pred_check_branch
          %805 = sbr.rel (%p803) target = $region88
        $region87: #{tpu_custom_call.1} parent=11 // pred_region
          _
        $region88: #{tpu_custom_call.1} parent=11 // pred_fallthru
          _
        // Predicated region
        $region89: #{tpu_custom_call.1} parent=11 // pred_check
          %p806 = pneg %p491
        $region90: #{tpu_custom_call.1} parent=11 // pred_check_branch
          %808 = sbr.rel (%p806) target = $region92
        $region91: #{tpu_custom_call.1} parent=11 // pred_region
          _
        $region92: #{tpu_custom_call.1} parent=11 // pred_fallthru
          _
        // Predicated region
        $region93: #{tpu_custom_call.1} parent=11 // pred_check
          %p809 = pneg %p512
        $region94: #{tpu_custom_call.1} parent=11 // pred_check_branch
          %811 = sbr.rel (%p809) target = $region96
        $region95: #{tpu_custom_call.1} parent=11 // pred_region
          %813 = vsyncadd [#allocation30], 0
          %s814 = sshll.u32 %s21, 4
          %s815 = int_to_ptr.hbm [resolvable:$true] %s814
          %s816 = sshll.u32 [#allocation29], 4
          %s817 = int_to_ptr.vmem [resolvable:$true] %s816
          %822 = dma.hbm_to_vmem [thread:$0]  %s815, 4096, %s817, [#allocation30], 64, 64, 4
        $region96: #{tpu_custom_call.1} parent=11 // pred_fallthru
          _
        // Predicated region
        $region97: #{tpu_custom_call.1} parent=11 // pred_check
          %p823 = pneg %p533
        $region98: #{tpu_custom_call.1} parent=11 // pred_check_branch
          %825 = sbr.rel (%p823) target = $region100
        $region99: #{tpu_custom_call.1} parent=11 // pred_region
          %827 = vsyncadd [#allocation30], 0
          %s828 = sshll.u32 %s22, 4
          %s829 = int_to_ptr.hbm [resolvable:$true] %s828
          %s830 = sshll.u32 [#allocation31], 4
          %s831 = int_to_ptr.vmem [resolvable:$true] %s830
          %836 = dma.hbm_to_vmem [thread:$0]  %s829, 1024, %s831, [#allocation30], 64, 64, 4
        $region100: #{tpu_custom_call.1} parent=11 // pred_fallthru
          _
        // Predicated region
        $region101: #{tpu_custom_call.1} parent=11 // pred_check
          %p837 = pneg %p554
        $region102: #{tpu_custom_call.1} parent=11 // pred_check_branch
          %839 = sbr.rel (%p837) target = $region104
        $region103: #{tpu_custom_call.1} parent=11 // pred_region
          _
        $region104: #{tpu_custom_call.1} parent=11 // pred_fallthru
          _
      $region12: #{tpu_custom_call.1} parent=5 // pred_fallthru
        _
      %p840 = scmp.lt.s32.totalorder %s45, 4
      // Predicated region
      $region105: #{tpu_custom_call.1} parent=5 // pred_check
        %p841 = pneg %p840
      $region106: #{tpu_custom_call.1} parent=5 // pred_check_branch
        %843 = sbr.rel (%p841) target = $region108
      $region107: #{tpu_custom_call.1} parent=5 // pred_region
        // Predicated region
        $region109: #{tpu_custom_call.1} parent=107 // pred_check
          %p844 = pneg %p65
        $region110: #{tpu_custom_call.1} parent=107 // pred_check_branch
          %846 = sbr.rel (%p844) target = $region112
        $region111: #{tpu_custom_call.1} parent=107 // pred_region
          %s847 = sand.u32 %s55, 1
          %s848 = scalar_lea.sflag [#allocation3], %s847
          %s849 = sand.u32 %s55, 1
          %s850 = smul.addr %s849, 8
          %s851 = scalar_lea.vmem [#allocation2], %s850
          %853 = vsyncadd %s848, 0
          %s854 = smul.addr %s45, 8
          %s855 = scalar_lea.hbm %s0, %s854
          %s857 = sshll.u32 %s855, 4
          %s858 = int_to_ptr.hbm [resolvable:$true] %s857
          %s859 = sshll.u32 %s851, 4
          %s860 = int_to_ptr.vmem [resolvable:$true] %s859
          %862 = dma.hbm_to_vmem [thread:$0]  %s858, 128, %s860, %s848
        $region112: #{tpu_custom_call.1} parent=107 // pred_fallthru
          _
      $region108: #{tpu_custom_call.1} parent=5 // pred_fallthru
        _
      %p863 = scmp.le.s32.totalorder 1, %s45
      %p864 = scmp.lt.s32.totalorder %s45, 5
      %p865 = pnand %p863, %p864
      %p866 = pneg %p865
      // Predicated region
      $region113: #{tpu_custom_call.1} parent=5 // pred_check
        _
      $region114: #{tpu_custom_call.1} parent=5 // pred_check_branch
        %868 = sbr.rel (%p865) target = $region116
      $region115: #{tpu_custom_call.1} parent=5 // pred_region
        %s869 = ssub.s32 %s45, 1
        %s870 = sand.u32 %s58, 1
        %s871 = scalar_lea.sflag [#allocation3], %s870
        %s872 = sand.u32 %s58, 1
        %s873 = smul.addr %s872, 8
        %s874 = scalar_lea.vmem [#allocation2], %s873
        // Predicated region
        $region117: #{tpu_custom_call.1} parent=115 // pred_check
          %p875 = pneg %p71
        $region118: #{tpu_custom_call.1} parent=115 // pred_check_branch
          %877 = sbr.rel (%p875) target = $region120
        $region119: #{tpu_custom_call.1} parent=115 // pred_region
          %879 = dma.done %s871, 128
        $region120: #{tpu_custom_call.1} parent=115 // pred_fallthru
          _
        // Predicated region
        $region121: #{tpu_custom_call.1} parent=115 // pred_check
          %p880 = pneg %p92
        $region122: #{tpu_custom_call.1} parent=115 // pred_check_branch
          %882 = sbr.rel (%p880) target = $region124
        $region123: #{tpu_custom_call.1} parent=115 // pred_region
          %884 = dma.done [#allocation6], 4096
        $region124: #{tpu_custom_call.1} parent=115 // pred_fallthru
          _
        // Predicated region
        $region125: #{tpu_custom_call.1} parent=115 // pred_check
          %p885 = pneg %p113
        $region126: #{tpu_custom_call.1} parent=115 // pred_check_branch
          %887 = sbr.rel (%p885) target = $region128
        $region127: #{tpu_custom_call.1} parent=115 // pred_region
          %889 = dma.done [#allocation6], 64
        $region128: #{tpu_custom_call.1} parent=115 // pred_fallthru
          _
        // Predicated region
        $region129: #{tpu_custom_call.1} parent=115 // pred_check
          %p890 = pneg %p134
        $region130: #{tpu_custom_call.1} parent=115 // pred_check_branch
          %892 = sbr.rel (%p890) target = $region132
        $region131: #{tpu_custom_call.1} parent=115 // pred_region
          %894 = dma.done [#allocation9], 64
        $region132: #{tpu_custom_call.1} parent=115 // pred_fallthru
          _
        // Predicated region
        $region133: #{tpu_custom_call.1} parent=115 // pred_check
          %p895 = pneg %p155
        $region134: #{tpu_custom_call.1} parent=115 // pred_check_branch
          %897 = sbr.rel (%p895) target = $region136
        $region135: #{tpu_custom_call.1} parent=115 // pred_region
          %899 = dma.done [#allocation9], 64
        $region136: #{tpu_custom_call.1} parent=115 // pred_fallthru
          _
        // Predicated region
        $region137: #{tpu_custom_call.1} parent=115 // pred_check
          %p900 = pneg %p176
        $region138: #{tpu_custom_call.1} parent=115 // pred_check_branch
          %902 = sbr.rel (%p900) target = $region140
        $region139: #{tpu_custom_call.1} parent=115 // pred_region
          %904 = dma.done [#allocation12], 8192
        $region140: #{tpu_custom_call.1} parent=115 // pred_fallthru
          _
        // Predicated region
        $region141: #{tpu_custom_call.1} parent=115 // pred_check
          %p905 = pneg %p197
        $region142: #{tpu_custom_call.1} parent=115 // pred_check_branch
          %907 = sbr.rel (%p905) target = $region144
        $region143: #{tpu_custom_call.1} parent=115 // pred_region
          %909 = dma.done [#allocation12], 32
        $region144: #{tpu_custom_call.1} parent=115 // pred_fallthru
          _
        // Predicated region
        $region145: #{tpu_custom_call.1} parent=115 // pred_check
          %p910 = pneg %p218
        $region146: #{tpu_custom_call.1} parent=115 // pred_check_branch
          %912 = sbr.rel (%p910) target = $region148
        $region147: #{tpu_custom_call.1} parent=115 // pred_region
          %914 = dma.done [#allocation15], 32
        $region148: #{tpu_custom_call.1} parent=115 // pred_fallthru
          _
        // Predicated region
        $region149: #{tpu_custom_call.1} parent=115 // pred_check
          %p915 = pneg %p239
        $region150: #{tpu_custom_call.1} parent=115 // pred_check_branch
          %917 = sbr.rel (%p915) target = $region152
        $region151: #{tpu_custom_call.1} parent=115 // pred_region
          %919 = dma.done [#allocation15], 32
        $region152: #{tpu_custom_call.1} parent=115 // pred_fallthru
          _
        // Predicated region
        $region153: #{tpu_custom_call.1} parent=115 // pred_check
          %p920 = pneg %p260
        $region154: #{tpu_custom_call.1} parent=115 // pred_check_branch
          %922 = sbr.rel (%p920) target = $region156
        $region155: #{tpu_custom_call.1} parent=115 // pred_region
          %924 = dma.done [#allocation18], 2048
        $region156: #{tpu_custom_call.1} parent=115 // pred_fallthru
          _
        // Predicated region
        $region157: #{tpu_custom_call.1} parent=115 // pred_check
          %p925 = pneg %p281
        $region158: #{tpu_custom_call.1} parent=115 // pred_check_branch
          %927 = sbr.rel (%p925) target = $region160
        $region159: #{tpu_custom_call.1} parent=115 // pred_region
          %929 = dma.done [#allocation18], 16
        $region160: #{tpu_custom_call.1} parent=115 // pred_fallthru
          _
        // Predicated region
        $region161: #{tpu_custom_call.1} parent=115 // pred_check
          %p930 = pneg %p302
        $region162: #{tpu_custom_call.1} parent=115 // pred_check_branch
          %932 = sbr.rel (%p930) target = $region164
        $region163: #{tpu_custom_call.1} parent=115 // pred_region
          %934 = dma.done [#allocation21], 16
        $region164: #{tpu_custom_call.1} parent=115 // pred_fallthru
          _
        // Predicated region
        $region165: #{tpu_custom_call.1} parent=115 // pred_check
          %p935 = pneg %p323
        $region166: #{tpu_custom_call.1} parent=115 // pred_check_branch
          %937 = sbr.rel (%p935) target = $region168
        $region167: #{tpu_custom_call.1} parent=115 // pred_region
          %939 = dma.done [#allocation21], 16
        $region168: #{tpu_custom_call.1} parent=115 // pred_fallthru
          _
        // Predicated region
        $region169: #{tpu_custom_call.1} parent=115 // pred_check
          %p940 = pneg %p344
        $region170: #{tpu_custom_call.1} parent=115 // pred_check_branch
          %942 = sbr.rel (%p940) target = $region172
        $region171: #{tpu_custom_call.1} parent=115 // pred_region
          %944 = dma.done [#allocation24], 2048
        $region172: #{tpu_custom_call.1} parent=115 // pred_fallthru
          _
        // Predicated region
        $region173: #{tpu_custom_call.1} parent=115 // pred_check
          %p945 = pneg %p365
        $region174: #{tpu_custom_call.1} parent=115 // pred_check_branch
          %947 = sbr.rel (%p945) target = $region176
        $region175: #{tpu_custom_call.1} parent=115 // pred_region
          %949 = dma.done [#allocation24], 32
        $region176: #{tpu_custom_call.1} parent=115 // pred_fallthru
          _
        // Predicated region
        $region177: #{tpu_custom_call.1} parent=115 // pred_check
          %p950 = pneg %p407
        $region178: #{tpu_custom_call.1} parent=115 // pred_check_branch
          %952 = sbr.rel (%p950) target = $region180
        $region179: #{tpu_custom_call.1} parent=115 // pred_region
          %954 = dma.done [#allocation27], 32
        $region180: #{tpu_custom_call.1} parent=115 // pred_fallthru
          _
        // Predicated region
        $region181: #{tpu_custom_call.1} parent=115 // pred_check
          %p955 = pneg %p428
        $region182: #{tpu_custom_call.1} parent=115 // pred_check_branch
          %957 = sbr.rel (%p955) target = $region184
        $region183: #{tpu_custom_call.1} parent=115 // pred_region
          %959 = dma.done [#allocation27], 8192
        $region184: #{tpu_custom_call.1} parent=115 // pred_fallthru
          _
        // Predicated region
        $region185: #{tpu_custom_call.1} parent=115 // pred_check
          %p960 = pneg %p512
        $region186: #{tpu_custom_call.1} parent=115 // pred_check_branch
          %962 = sbr.rel (%p960) target = $region188
        $region187: #{tpu_custom_call.1} parent=115 // pred_region
          %964 = dma.done [#allocation30], 4096
        $region188: #{tpu_custom_call.1} parent=115 // pred_fallthru
          _
        // Predicated region
        $region189: #{tpu_custom_call.1} parent=115 // pred_check
          %p965 = pneg %p533
        $region190: #{tpu_custom_call.1} parent=115 // pred_check_branch
          %967 = sbr.rel (%p965) target = $region192
        $region191: #{tpu_custom_call.1} parent=115 // pred_region
          %969 = dma.done [#allocation30], 1024
        $region192: #{tpu_custom_call.1} parent=115 // pred_fallthru
          _
        %s970 = sand.u32 %s58, 1
        %s971 = scalar_lea.sflag [#allocation3], %s970
        %s972 = sand.u32 %s58, 1
        %s973 = smul.addr %s972, 8
        %s974 = scalar_lea.vmem [#allocation2], %s973
        %p975 = pneg %p71
        %p976 = pneg %p68
        %p977 = pneg %p92
        %p978 = pneg %p89
        %p979 = pneg %p113
        %p980 = pneg %p110
        %p981 = pneg %p134
        %p982 = pneg %p131
        %p983 = pneg %p155
        %p984 = pneg %p152
        %p985 = pneg %p176
        %p986 = pneg %p173
        %p987 = pneg %p197
        %p988 = pneg %p194
        %p989 = pneg %p218
        %p990 = pneg %p215
        %p991 = pneg %p239
        %p992 = pneg %p236
        %p993 = pneg %p260
        %p994 = pneg %p257
        %p995 = pneg %p281
        %p996 = pneg %p278
        %p997 = pneg %p302
        %p998 = pneg %p299
        %p999 = pneg %p323
        %p1000 = pneg %p320
        %p1001 = pneg %p344
        %p1002 = pneg %p341
        %p1003 = pneg %p365
        %p1004 = pneg %p362
        %p1005 = pneg %p386
        %p1006 = pneg %p383
        %p1007 = pneg %p407
        %p1008 = pneg %p404
        %p1009 = pneg %p428
        %p1010 = pneg %p425
        %p1011 = pneg %p449
        %p1012 = pneg %p446
        %p1013 = pneg %p470
        %p1014 = pneg %p467
        %p1015 = pneg %p491
        %p1016 = pneg %p488
        %p1017 = pneg %p512
        %p1018 = pneg %p509
        %p1019 = pneg %p533
        %p1020 = pneg %p530
        %p1021 = pneg %p554
        %p1022 = pneg %p551
        %p1023 = pneg %p580
        %p1024 = pneg %p577
        %s1025 = sand.u32 %s567, 1
        %s1026 = scalar_lea.sflag [#allocation4], %s1025
        %s1027 = sand.u32 %s567, 1
        %s1028 = smul.addr %s1027, 8
        %s1029 = scalar_lea.vmem [#allocation32], %s1028
        %v1030 = vld [vmem:[%s874] sm:$0xff]
        %v1031 = vpack.c.bf16 %v1030, %v1030
        %v1032 = vld [vmem:[#allocation5] sm:$0xff]
        %v1033 = vld [vmem:[#allocation5 + $0x8] sm:$0xff]
        %v1034 = vld [vmem:[#allocation5 + $0x10] sm:$0xff]
        %v1035 = vld [vmem:[#allocation5 + $0x18] sm:$0xff]
        %v1036 = vld [vmem:[#allocation5 + $0x20] sm:$0xff]
        %v1037 = vld [vmem:[#allocation5 + $0x28] sm:$0xff]
        %v1038 = vld [vmem:[#allocation5 + $0x30] sm:$0xff]
        %v1039 = vld [vmem:[#allocation5 + $0x38] sm:$0xff]
        %v1040 = vld [vmem:[#allocation5 + $0x40] sm:$0xff]
        %v1041 = vld [vmem:[#allocation5 + $0x48] sm:$0xff]
        %v1042 = vld [vmem:[#allocation5 + $0x50] sm:$0xff]
        %v1043 = vld [vmem:[#allocation5 + $0x58] sm:$0xff]
        %v1044 = vld [vmem:[#allocation5 + $0x60] sm:$0xff]
        %v1045 = vld [vmem:[#allocation5 + $0x68] sm:$0xff]
        %v1046 = vld [vmem:[#allocation5 + $0x70] sm:$0xff]
        %v1047 = vld [vmem:[#allocation5 + $0x78] sm:$0xff]
        %v1048 = vld [vmem:[#allocation5 + $0x80] sm:$0xff]
        %v1049 = vld [vmem:[#allocation5 + $0x88] sm:$0xff]
        %v1050 = vld [vmem:[#allocation5 + $0x90] sm:$0xff]
        %v1051 = vld [vmem:[#allocation5 + $0x98] sm:$0xff]
        %v1052 = vld [vmem:[#allocation5 + $0xa0] sm:$0xff]
        %v1053 = vld [vmem:[#allocation5 + $0xa8] sm:$0xff]
        %v1054 = vld [vmem:[#allocation5 + $0xb0] sm:$0xff]
        %v1055 = vld [vmem:[#allocation5 + $0xb8] sm:$0xff]
        %v1056 = vld [vmem:[#allocation5 + $0xc0] sm:$0xff]
        %v1057 = vld [vmem:[#allocation5 + $0xc8] sm:$0xff]
        %v1058 = vld [vmem:[#allocation5 + $0xd0] sm:$0xff]
        %v1059 = vld [vmem:[#allocation5 + $0xd8] sm:$0xff]
        %v1060 = vld [vmem:[#allocation5 + $0xe0] sm:$0xff]
        %v1061 = vld [vmem:[#allocation5 + $0xe8] sm:$0xff]
        %v1062 = vld [vmem:[#allocation5 + $0xf0] sm:$0xff]
        %v1063 = vld [vmem:[#allocation5 + $0xf8] sm:$0xff]
        %v1064 = vld [vmem:[#allocation7] sm:$0xf]
        %v1066 = vperm.slane %v1064, 0
        %v1067 = vperm.slane %v1064, 1
        %v1068 = vperm.slane %v1064, 2
        %v1069 = vperm.slane %v1064, 3
        %v1106 = vunpack.c.l.b16 %v1032
        %v1107 = vunpack.c.h.b16 %v1032
        %v1108 = vunpack.c.l.b16 %v1033
        %v1109 = vunpack.c.h.b16 %v1033
        %v1110 = vunpack.c.l.b16 %v1034
        %v1111 = vunpack.c.h.b16 %v1034
        %v1112 = vunpack.c.l.b16 %v1035
        %v1113 = vunpack.c.h.b16 %v1035
        %v1114 = vunpack.c.l.b16 %v1036
        %v1115 = vunpack.c.h.b16 %v1036
        %v1116 = vunpack.c.l.b16 %v1037
        %v1117 = vunpack.c.h.b16 %v1037
        %v1118 = vunpack.c.l.b16 %v1038
        %v1119 = vunpack.c.h.b16 %v1038
        %v1120 = vunpack.c.l.b16 %v1039
        %v1121 = vunpack.c.h.b16 %v1039
        %v1122 = vunpack.c.l.b16 %v1040
        %v1123 = vunpack.c.h.b16 %v1040
        %v1124 = vunpack.c.l.b16 %v1041
        %v1125 = vunpack.c.h.b16 %v1041
        %v1126 = vunpack.c.l.b16 %v1042
        %v1127 = vunpack.c.h.b16 %v1042
        %v1128 = vunpack.c.l.b16 %v1043
        %v1129 = vunpack.c.h.b16 %v1043
        %v1130 = vunpack.c.l.b16 %v1044
        %v1131 = vunpack.c.h.b16 %v1044
        %v1132 = vunpack.c.l.b16 %v1045
        %v1133 = vunpack.c.h.b16 %v1045
        %v1134 = vunpack.c.l.b16 %v1046
        %v1135 = vunpack.c.h.b16 %v1046
        %v1136 = vunpack.c.l.b16 %v1047
        %v1137 = vunpack.c.h.b16 %v1047
        %v1138 = vunpack.c.l.b16 %v1048
        %v1139 = vunpack.c.h.b16 %v1048
        %v1140 = vunpack.c.l.b16 %v1049
        %v1141 = vunpack.c.h.b16 %v1049
        %v1142 = vunpack.c.l.b16 %v1050
        %v1143 = vunpack.c.h.b16 %v1050
        %v1144 = vunpack.c.l.b16 %v1051
        %v1145 = vunpack.c.h.b16 %v1051
        %v1146 = vunpack.c.l.b16 %v1052
        %v1147 = vunpack.c.h.b16 %v1052
        %v1148 = vunpack.c.l.b16 %v1053
        %v1149 = vunpack.c.h.b16 %v1053
        %v1150 = vunpack.c.l.b16 %v1054
        %v1151 = vunpack.c.h.b16 %v1054
        %v1152 = vunpack.c.l.b16 %v1055
        %v1153 = vunpack.c.h.b16 %v1055
        %v1154 = vunpack.c.l.b16 %v1056
        %v1155 = vunpack.c.h.b16 %v1056
        %v1156 = vunpack.c.l.b16 %v1057
        %v1157 = vunpack.c.h.b16 %v1057
        %v1158 = vunpack.c.l.b16 %v1058
        %v1159 = vunpack.c.h.b16 %v1058
        %v1160 = vunpack.c.l.b16 %v1059
        %v1161 = vunpack.c.h.b16 %v1059
        %v1162 = vunpack.c.l.b16 %v1060
        %v1163 = vunpack.c.h.b16 %v1060
        %v1164 = vunpack.c.l.b16 %v1061
        %v1165 = vunpack.c.h.b16 %v1061
        %v1166 = vunpack.c.l.b16 %v1062
        %v1167 = vunpack.c.h.b16 %v1062
        %v1168 = vunpack.c.l.b16 %v1063
        %v1169 = vunpack.c.h.b16 %v1063
        %v1170 = vpack.c.b16 %v1110, %v1106
        %v1171 = vpack.c.b16 %v1111, %v1107
        %v1172 = vpack.c.b16 %v1112, %v1108
        %v1173 = vpack.c.b16 %v1113, %v1109
        %v1174 = vpack.c.b16 %v1118, %v1114
        %v1175 = vpack.c.b16 %v1119, %v1115
        %v1176 = vpack.c.b16 %v1120, %v1116
        %v1177 = vpack.c.b16 %v1121, %v1117
        %v1178 = vpack.c.b16 %v1126, %v1122
        %v1179 = vpack.c.b16 %v1127, %v1123
        %v1180 = vpack.c.b16 %v1128, %v1124
        %v1181 = vpack.c.b16 %v1129, %v1125
        %v1182 = vpack.c.b16 %v1134, %v1130
        %v1183 = vpack.c.b16 %v1135, %v1131
        %v1184 = vpack.c.b16 %v1136, %v1132
        %v1185 = vpack.c.b16 %v1137, %v1133
        %v1186 = vpack.c.b16 %v1142, %v1138
        %v1187 = vpack.c.b16 %v1143, %v1139
        %v1188 = vpack.c.b16 %v1144, %v1140
        %v1189 = vpack.c.b16 %v1145, %v1141
        %v1190 = vpack.c.b16 %v1150, %v1146
        %v1191 = vpack.c.b16 %v1151, %v1147
        %v1192 = vpack.c.b16 %v1152, %v1148
        %v1193 = vpack.c.b16 %v1153, %v1149
        %v1194 = vpack.c.b16 %v1158, %v1154
        %v1195 = vpack.c.b16 %v1159, %v1155
        %v1196 = vpack.c.b16 %v1160, %v1156
        %v1197 = vpack.c.b16 %v1161, %v1157
        %v1198 = vpack.c.b16 %v1166, %v1162
        %v1199 = vpack.c.b16 %v1167, %v1163
        %v1200 = vpack.c.b16 %v1168, %v1164
        %v1201 = vpack.c.b16 %v1169, %v1165
        %1234 = vmatpush.bf16.msra.mxu0 %v1198
        %1235 = vmatpush.bf16.msra.mxu0 %v1194
        %1236 = vmatpush.bf16.msra.mxu0 %v1190
        %1237 = vmatpush.bf16.msra.mxu0 %v1186
        %1238 = vmatpush.bf16.msra.mxu0 %v1182
        %1239 = vmatpush.bf16.msra.mxu0 %v1178
        %1240 = vmatpush.bf16.msra.mxu0 %v1174
        %1241 = vmatpush.bf16.msra.mxu0 %v1170
        %1242 = vmatmul.bf16.gmra.mxu0 %v1031
        %v1243 = vpop.f32.mrf.mxu0
        %v1244 = vadd.f32 %v1066, %v1243
        %v1245 = vpop.f32.mrf.mxu0
        %1246 = vdwg.mxu0
        %1247 = vmatpush.bf16.msra.mxu0 %v1199
        %1248 = vmatpush.bf16.msra.mxu0 %v1195
        %1249 = vmatpush.bf16.msra.mxu0 %v1191
        %1250 = vmatpush.bf16.msra.mxu0 %v1187
        %1251 = vmatpush.bf16.msra.mxu0 %v1183
        %1252 = vmatpush.bf16.msra.mxu0 %v1179
        %1253 = vmatpush.bf16.msra.mxu0 %v1175
        %1254 = vmatpush.bf16.msra.mxu0 %v1171
        %1255 = vmatmul.bf16.gmra.mxu0 %v1031
        %v1256 = vpop.f32.mrf.mxu0
        %v1257 = vadd.f32 %v1067, %v1256
        %v1258 = vpop.f32.mrf.mxu0
        %1259 = vdwg.mxu0
        %1260 = vmatpush.bf16.msra.mxu0 %v1200
        %1261 = vmatpush.bf16.msra.mxu0 %v1196
        %1262 = vmatpush.bf16.msra.mxu0 %v1192
        %1263 = vmatpush.bf16.msra.mxu0 %v1188
        %1264 = vmatpush.bf16.msra.mxu0 %v1184
        %1265 = vmatpush.bf16.msra.mxu0 %v1180
        %1266 = vmatpush.bf16.msra.mxu0 %v1176
        %1267 = vmatpush.bf16.msra.mxu0 %v1172
        %1268 = vmatmul.bf16.gmra.mxu0 %v1031
        %v1269 = vpop.f32.mrf.mxu0
        %v1270 = vadd.f32 %v1068, %v1269
        %v1271 = vpop.f32.mrf.mxu0
        %1272 = vdwg.mxu0
        %1273 = vmatpush.bf16.msra.mxu0 %v1201
        %1274 = vmatpush.bf16.msra.mxu0 %v1197
        %1275 = vmatpush.bf16.msra.mxu0 %v1193
        %1276 = vmatpush.bf16.msra.mxu0 %v1189
        %1277 = vmatpush.bf16.msra.mxu0 %v1185
        %1278 = vmatpush.bf16.msra.mxu0 %v1181
        %1279 = vmatpush.bf16.msra.mxu0 %v1177
        %1280 = vmatpush.bf16.msra.mxu0 %v1173
        %1281 = vmatmul.bf16.gmra.mxu0 %v1031
        %v1282 = vpop.f32.mrf.mxu0
        %v1283 = vadd.f32 %v1069, %v1282
        %v1284 = vpop.f32.mrf.mxu0
        %1285 = vdwg.mxu0
        %v1286 = vadd.f32 %v1244, %v1257
        %v1287 = vadd.f32 %v1286, %v1270
        %v1288 = vadd.f32 %v1287, %v1283
        %1289 = vadd.xlane.f32.xlu0 %v1288
        %v1290 = vpop.xlane.xlu0 %1289
        %v1291 = vmul.f32 %v1244, %v1244
        %v1292 = vmul.f32 %v1257, %v1257
        %v1293 = vmul.f32 %v1270, %v1270
        %v1294 = vmul.f32 %v1283, %v1283
        %v1295 = vadd.f32 %v1291, %v1292
        %v1296 = vadd.f32 %v1295, %v1293
        %v1297 = vadd.f32 %v1296, %v1294
        %1298 = vadd.xlane.f32.xlu0 %v1297
        %v1299 = vpop.xlane.xlu0 %1298
        %v1300 = vmul.f32 %v1290, 0.001953125
        %v1301 = vmul.f32 %v1299, 0.001953125
        %v1302 = vmul.f32 %v1300, %v1300
        %v1303 = vsub.f32 %v1301, %v1302
        %v1304 = vmax.f32 %v1303, 0.0
        %v1305 = vadd.f32 %v1304, 1e-05
        %v1306 = vrsqrt.pop %v1305
        %v1307 = vmul.f32 %v1306, %v1305
        %v1308 = vmul.f32 %v1307, %v1306
        %v1309 = vmul.f32 0.5, %v1308
        %v1310 = vsub.f32 1.5, %v1309
        %v1311 = vmul.f32 %v1306, %v1310
        %vm1312 = vweird.f32 %v1305
        %vm1313 = vweird.f32 %v1306
        %vm1314 = vmor %vm1312, %vm1313
        %v1315 = vsel %vm1314, %v1306, %v1311
        %v1316 = vsub.f32 %v1244, %v1300
        %v1317 = vsub.f32 %v1257, %v1300
        %v1318 = vsub.f32 %v1270, %v1300
        %v1319 = vsub.f32 %v1283, %v1300
        %v1320 = vmul.f32 %v1316, %v1315
        %v1321 = vmul.f32 %v1317, %v1315
        %v1322 = vmul.f32 %v1318, %v1315
        %v1323 = vmul.f32 %v1319, %v1315
        %v1324 = vld [vmem:[#allocation8] sm:$0xf]
        %v1326 = vperm.slane %v1324, 0
        %v1327 = vperm.slane %v1324, 1
        %v1328 = vperm.slane %v1324, 2
        %v1329 = vperm.slane %v1324, 3
        %v1334 = vmul.f32 %v1320, %v1326
        %v1335 = vmul.f32 %v1321, %v1327
        %v1336 = vmul.f32 %v1322, %v1328
        %v1337 = vmul.f32 %v1323, %v1329
        %v1338 = vld [vmem:[#allocation10] sm:$0xf]
        %v1340 = vperm.slane %v1338, 0
        %v1341 = vperm.slane %v1338, 1
        %v1342 = vperm.slane %v1338, 2
        %v1343 = vperm.slane %v1338, 3
        %v1348 = vadd.f32 %v1334, %v1340
        %v1349 = vadd.f32 %v1335, %v1341
        %v1350 = vadd.f32 %v1336, %v1342
        %v1351 = vadd.f32 %v1337, %v1343
        %v1352 = vmax.f32 %v1348, 0.0
        %v1353 = vmax.f32 %v1349, 0.0
        %v1354 = vmax.f32 %v1350, 0.0
        %v1355 = vmax.f32 %v1351, 0.0
        %v1356 = vpack.c.bf16 %v1352, %v1352
        %v1357 = vpack.c.bf16 %v1353, %v1353
        %v1358 = vpack.c.bf16 %v1354, %v1354
        %v1359 = vpack.c.bf16 %v1355, %v1355
        %v1360 = vld [vmem:[#allocation11] sm:$0xff]
        %v1361 = vld [vmem:[#allocation11 + $0x8] sm:$0xff]
        %v1362 = vld [vmem:[#allocation11 + $0x10] sm:$0xff]
        %v1363 = vld [vmem:[#allocation11 + $0x18] sm:$0xff]
        %v1364 = vld [vmem:[#allocation11 + $0x20] sm:$0xff]
        %v1365 = vld [vmem:[#allocation11 + $0x28] sm:$0xff]
        %v1366 = vld [vmem:[#allocation11 + $0x30] sm:$0xff]
        %v1367 = vld [vmem:[#allocation11 + $0x38] sm:$0xff]
        %v1368 = vld [vmem:[#allocation11 + $0x40] sm:$0xff]
        %v1369 = vld [vmem:[#allocation11 + $0x48] sm:$0xff]
        %v1370 = vld [vmem:[#allocation11 + $0x50] sm:$0xff]
        %v1371 = vld [vmem:[#allocation11 + $0x58] sm:$0xff]
        %v1372 = vld [vmem:[#allocation11 + $0x60] sm:$0xff]
        %v1373 = vld [vmem:[#allocation11 + $0x68] sm:$0xff]
        %v1374 = vld [vmem:[#allocation11 + $0x70] sm:$0xff]
        %v1375 = vld [vmem:[#allocation11 + $0x78] sm:$0xff]
        %v1376 = vld [vmem:[#allocation11 + $0x80] sm:$0xff]
        %v1377 = vld [vmem:[#allocation11 + $0x88] sm:$0xff]
        %v1378 = vld [vmem:[#allocation11 + $0x90] sm:$0xff]
        %v1379 = vld [vmem:[#allocation11 + $0x98] sm:$0xff]
        %v1380 = vld [vmem:[#allocation11 + $0xa0] sm:$0xff]
        %v1381 = vld [vmem:[#allocation11 + $0xa8] sm:$0xff]
        %v1382 = vld [vmem:[#allocation11 + $0xb0] sm:$0xff]
        %v1383 = vld [vmem:[#allocation11 + $0xb8] sm:$0xff]
        %v1384 = vld [vmem:[#allocation11 + $0xc0] sm:$0xff]
        %v1385 = vld [vmem:[#allocation11 + $0xc8] sm:$0xff]
        %v1386 = vld [vmem:[#allocation11 + $0xd0] sm:$0xff]
        %v1387 = vld [vmem:[#allocation11 + $0xd8] sm:$0xff]
        %v1388 = vld [vmem:[#allocation11 + $0xe0] sm:$0xff]
        %v1389 = vld [vmem:[#allocation11 + $0xe8] sm:$0xff]
        %v1390 = vld [vmem:[#allocation11 + $0xf0] sm:$0xff]
        %v1391 = vld [vmem:[#allocation11 + $0xf8] sm:$0xff]
        %v1392 = vld [vmem:[#allocation11 + $0x100] sm:$0xff]
        %v1393 = vld [vmem:[#allocation11 + $0x108] sm:$0xff]
        %v1394 = vld [vmem:[#allocation11 + $0x110] sm:$0xff]
        %v1395 = vld [vmem:[#allocation11 + $0x118] sm:$0xff]
        %v1396 = vld [vmem:[#allocation11 + $0x120] sm:$0xff]
        %v1397 = vld [vmem:[#allocation11 + $0x128] sm:$0xff]
        %v1398 = vld [vmem:[#allocation11 + $0x130] sm:$0xff]
        %v1399 = vld [vmem:[#allocation11 + $0x138] sm:$0xff]
        %v1400 = vld [vmem:[#allocation11 + $0x140] sm:$0xff]
        %v1401 = vld [vmem:[#allocation11 + $0x148] sm:$0xff]
        %v1402 = vld [vmem:[#allocation11 + $0x150] sm:$0xff]
        %v1403 = vld [vmem:[#allocation11 + $0x158] sm:$0xff]
        %v1404 = vld [vmem:[#allocation11 + $0x160] sm:$0xff]
        %v1405 = vld [vmem:[#allocation11 + $0x168] sm:$0xff]
        %v1406 = vld [vmem:[#allocation11 + $0x170] sm:$0xff]
        %v1407 = vld [vmem:[#allocation11 + $0x178] sm:$0xff]
        %v1408 = vld [vmem:[#allocation11 + $0x180] sm:$0xff]
        %v1409 = vld [vmem:[#allocation11 + $0x188] sm:$0xff]
        %v1410 = vld [vmem:[#allocation11 + $0x190] sm:$0xff]
        %v1411 = vld [vmem:[#allocation11 + $0x198] sm:$0xff]
        %v1412 = vld [vmem:[#allocation11 + $0x1a0] sm:$0xff]
        %v1413 = vld [vmem:[#allocation11 + $0x1a8] sm:$0xff]
        %v1414 = vld [vmem:[#allocation11 + $0x1b0] sm:$0xff]
        %v1415 = vld [vmem:[#allocation11 + $0x1b8] sm:$0xff]
        %v1416 = vld [vmem:[#allocation11 + $0x1c0] sm:$0xff]
        %v1417 = vld [vmem:[#allocation11 + $0x1c8] sm:$0xff]
        %v1418 = vld [vmem:[#allocation11 + $0x1d0] sm:$0xff]
        %v1419 = vld [vmem:[#allocation11 + $0x1d8] sm:$0xff]
        %v1420 = vld [vmem:[#allocation11 + $0x1e0] sm:$0xff]
        %v1421 = vld [vmem:[#allocation11 + $0x1e8] sm:$0xff]
        %v1422 = vld [vmem:[#allocation11 + $0x1f0] sm:$0xff]
        %v1423 = vld [vmem:[#allocation11 + $0x1f8] sm:$0xff]
        %v1424 = vld [vmem:[#allocation13] sm:$0x3]
        %v1426 = vperm.slane %v1424, 0
        %v1427 = vperm.slane %v1424, 1
        %v1494 = vunpack.c.l.b16 %v1360
        %v1495 = vunpack.c.h.b16 %v1360
        %v1496 = vunpack.c.l.b16 %v1361
        %v1497 = vunpack.c.h.b16 %v1361
        %v1498 = vunpack.c.l.b16 %v1362
        %v1499 = vunpack.c.h.b16 %v1362
        %v1500 = vunpack.c.l.b16 %v1363
        %v1501 = vunpack.c.h.b16 %v1363
        %v1502 = vunpack.c.l.b16 %v1364
        %v1503 = vunpack.c.h.b16 %v1364
        %v1504 = vunpack.c.l.b16 %v1365
        %v1505 = vunpack.c.h.b16 %v1365
        %v1506 = vunpack.c.l.b16 %v1366
        %v1507 = vunpack.c.h.b16 %v1366
        %v1508 = vunpack.c.l.b16 %v1367
        %v1509 = vunpack.c.h.b16 %v1367
        %v1510 = vunpack.c.l.b16 %v1368
        %v1511 = vunpack.c.h.b16 %v1368
        %v1512 = vunpack.c.l.b16 %v1369
        %v1513 = vunpack.c.h.b16 %v1369
        %v1514 = vunpack.c.l.b16 %v1370
        %v1515 = vunpack.c.h.b16 %v1370
        %v1516 = vunpack.c.l.b16 %v1371
        %v1517 = vunpack.c.h.b16 %v1371
        %v1518 = vunpack.c.l.b16 %v1372
        %v1519 = vunpack.c.h.b16 %v1372
        %v1520 = vunpack.c.l.b16 %v1373
        %v1521 = vunpack.c.h.b16 %v1373
        %v1522 = vunpack.c.l.b16 %v1374
        %v1523 = vunpack.c.h.b16 %v1374
        %v1524 = vunpack.c.l.b16 %v1375
        %v1525 = vunpack.c.h.b16 %v1375
        %v1526 = vunpack.c.l.b16 %v1376
        %v1527 = vunpack.c.h.b16 %v1376
        %v1528 = vunpack.c.l.b16 %v1377
        %v1529 = vunpack.c.h.b16 %v1377
        %v1530 = vunpack.c.l.b16 %v1378
        %v1531 = vunpack.c.h.b16 %v1378
        %v1532 = vunpack.c.l.b16 %v1379
        %v1533 = vunpack.c.h.b16 %v1379
        %v1534 = vunpack.c.l.b16 %v1380
        %v1535 = vunpack.c.h.b16 %v1380
        %v1536 = vunpack.c.l.b16 %v1381
        %v1537 = vunpack.c.h.b16 %v1381
        %v1538 = vunpack.c.l.b16 %v1382
        %v1539 = vunpack.c.h.b16 %v1382
        %v1540 = vunpack.c.l.b16 %v1383
        %v1541 = vunpack.c.h.b16 %v1383
        %v1542 = vunpack.c.l.b16 %v1384
        %v1543 = vunpack.c.h.b16 %v1384
        %v1544 = vunpack.c.l.b16 %v1385
        %v1545 = vunpack.c.h.b16 %v1385
        %v1546 = vunpack.c.l.b16 %v1386
        %v1547 = vunpack.c.h.b16 %v1386
        %v1548 = vunpack.c.l.b16 %v1387
        %v1549 = vunpack.c.h.b16 %v1387
        %v1550 = vunpack.c.l.b16 %v1388
        %v1551 = vunpack.c.h.b16 %v1388
        %v1552 = vunpack.c.l.b16 %v1389
        %v1553 = vunpack.c.h.b16 %v1389
        %v1554 = vunpack.c.l.b16 %v1390
        %v1555 = vunpack.c.h.b16 %v1390
        %v1556 = vunpack.c.l.b16 %v1391
        %v1557 = vunpack.c.h.b16 %v1391
        %v1558 = vunpack.c.l.b16 %v1392
        %v1559 = vunpack.c.h.b16 %v1392
        %v1560 = vunpack.c.l.b16 %v1393
        %v1561 = vunpack.c.h.b16 %v1393
        %v1562 = vunpack.c.l.b16 %v1394
        %v1563 = vunpack.c.h.b16 %v1394
        %v1564 = vunpack.c.l.b16 %v1395
        %v1565 = vunpack.c.h.b16 %v1395
        %v1566 = vunpack.c.l.b16 %v1396
        %v1567 = vunpack.c.h.b16 %v1396
        %v1568 = vunpack.c.l.b16 %v1397
        %v1569 = vunpack.c.h.b16 %v1397
        %v1570 = vunpack.c.l.b16 %v1398
        %v1571 = vunpack.c.h.b16 %v1398
        %v1572 = vunpack.c.l.b16 %v1399
        %v1573 = vunpack.c.h.b16 %v1399
        %v1574 = vunpack.c.l.b16 %v1400
        %v1575 = vunpack.c.h.b16 %v1400
        %v1576 = vunpack.c.l.b16 %v1401
        %v1577 = vunpack.c.h.b16 %v1401
        %v1578 = vunpack.c.l.b16 %v1402
        %v1579 = vunpack.c.h.b16 %v1402
        %v1580 = vunpack.c.l.b16 %v1403
        %v1581 = vunpack.c.h.b16 %v1403
        %v1582 = vunpack.c.l.b16 %v1404
        %v1583 = vunpack.c.h.b16 %v1404
        %v1584 = vunpack.c.l.b16 %v1405
        %v1585 = vunpack.c.h.b16 %v1405
        %v1586 = vunpack.c.l.b16 %v1406
        %v1587 = vunpack.c.h.b16 %v1406
        %v1588 = vunpack.c.l.b16 %v1407
        %v1589 = vunpack.c.h.b16 %v1407
        %v1590 = vunpack.c.l.b16 %v1408
        %v1591 = vunpack.c.h.b16 %v1408
        %v1592 = vunpack.c.l.b16 %v1409
        %v1593 = vunpack.c.h.b16 %v1409
        %v1594 = vunpack.c.l.b16 %v1410
        %v1595 = vunpack.c.h.b16 %v1410
        %v1596 = vunpack.c.l.b16 %v1411
        %v1597 = vunpack.c.h.b16 %v1411
        %v1598 = vunpack.c.l.b16 %v1412
        %v1599 = vunpack.c.h.b16 %v1412
        %v1600 = vunpack.c.l.b16 %v1413
        %v1601 = vunpack.c.h.b16 %v1413
        %v1602 = vunpack.c.l.b16 %v1414
        %v1603 = vunpack.c.h.b16 %v1414
        %v1604 = vunpack.c.l.b16 %v1415
        %v1605 = vunpack.c.h.b16 %v1415
        %v1606 = vunpack.c.l.b16 %v1416
        %v1607 = vunpack.c.h.b16 %v1416
        %v1608 = vunpack.c.l.b16 %v1417
        %v1609 = vunpack.c.h.b16 %v1417
        %v1610 = vunpack.c.l.b16 %v1418
        %v1611 = vunpack.c.h.b16 %v1418
        %v1612 = vunpack.c.l.b16 %v1419
        %v1613 = vunpack.c.h.b16 %v1419
        %v1614 = vunpack.c.l.b16 %v1420
        %v1615 = vunpack.c.h.b16 %v1420
        %v1616 = vunpack.c.l.b16 %v1421
        %v1617 = vunpack.c.h.b16 %v1421
        %v1618 = vunpack.c.l.b16 %v1422
        %v1619 = vunpack.c.h.b16 %v1422
        %v1620 = vunpack.c.l.b16 %v1423
        %v1621 = vunpack.c.h.b16 %v1423
        %v1622 = vpack.c.b16 %v1496, %v1494
        %v1623 = vpack.c.b16 %v1497, %v1495
        %v1624 = vpack.c.b16 %v1500, %v1498
        %v1625 = vpack.c.b16 %v1501, %v1499
        %v1626 = vpack.c.b16 %v1504, %v1502
        %v1627 = vpack.c.b16 %v1505, %v1503
        %v1628 = vpack.c.b16 %v1508, %v1506
        %v1629 = vpack.c.b16 %v1509, %v1507
        %v1630 = vpack.c.b16 %v1512, %v1510
        %v1631 = vpack.c.b16 %v1513, %v1511
        %v1632 = vpack.c.b16 %v1516, %v1514
        %v1633 = vpack.c.b16 %v1517, %v1515
        %v1634 = vpack.c.b16 %v1520, %v1518
        %v1635 = vpack.c.b16 %v1521, %v1519
        %v1636 = vpack.c.b16 %v1524, %v1522
        %v1637 = vpack.c.b16 %v1525, %v1523
        %v1638 = vpack.c.b16 %v1528, %v1526
        %v1639 = vpack.c.b16 %v1529, %v1527
        %v1640 = vpack.c.b16 %v1532, %v1530
        %v1641 = vpack.c.b16 %v1533, %v1531
        %v1642 = vpack.c.b16 %v1536, %v1534
        %v1643 = vpack.c.b16 %v1537, %v1535
        %v1644 = vpack.c.b16 %v1540, %v1538
        %v1645 = vpack.c.b16 %v1541, %v1539
        %v1646 = vpack.c.b16 %v1544, %v1542
        %v1647 = vpack.c.b16 %v1545, %v1543
        %v1648 = vpack.c.b16 %v1548, %v1546
        %v1649 = vpack.c.b16 %v1549, %v1547
        %v1650 = vpack.c.b16 %v1552, %v1550
        %v1651 = vpack.c.b16 %v1553, %v1551
        %v1652 = vpack.c.b16 %v1556, %v1554
        %v1653 = vpack.c.b16 %v1557, %v1555
        %v1654 = vpack.c.b16 %v1560, %v1558
        %v1655 = vpack.c.b16 %v1561, %v1559
        %v1656 = vpack.c.b16 %v1564, %v1562
        %v1657 = vpack.c.b16 %v1565, %v1563
        %v1658 = vpack.c.b16 %v1568, %v1566
        %v1659 = vpack.c.b16 %v1569, %v1567
        %v1660 = vpack.c.b16 %v1572, %v1570
        %v1661 = vpack.c.b16 %v1573, %v1571
        %v1662 = vpack.c.b16 %v1576, %v1574
        %v1663 = vpack.c.b16 %v1577, %v1575
        %v1664 = vpack.c.b16 %v1580, %v1578
        %v1665 = vpack.c.b16 %v1581, %v1579
        %v1666 = vpack.c.b16 %v1584, %v1582
        %v1667 = vpack.c.b16 %v1585, %v1583
        %v1668 = vpack.c.b16 %v1588, %v1586
        %v1669 = vpack.c.b16 %v1589, %v1587
        %v1670 = vpack.c.b16 %v1592, %v1590
        %v1671 = vpack.c.b16 %v1593, %v1591
        %v1672 = vpack.c.b16 %v1596, %v1594
        %v1673 = vpack.c.b16 %v1597, %v1595
        %v1674 = vpack.c.b16 %v1600, %v1598
        %v1675 = vpack.c.b16 %v1601, %v1599
        %v1676 = vpack.c.b16 %v1604, %v1602
        %v1677 = vpack.c.b16 %v1605, %v1603
        %v1678 = vpack.c.b16 %v1608, %v1606
        %v1679 = vpack.c.b16 %v1609, %v1607
        %v1680 = vpack.c.b16 %v1612, %v1610
        %v1681 = vpack.c.b16 %v1613, %v1611
        %v1682 = vpack.c.b16 %v1616, %v1614
        %v1683 = vpack.c.b16 %v1617, %v1615
        %v1684 = vpack.c.b16 %v1620, %v1618
        %v1685 = vpack.c.b16 %v1621, %v1619
        %1750 = vmatpush.bf16.msra.mxu0 %v1636
        %1751 = vmatpush.bf16.msra.mxu0 %v1634
        %1752 = vmatpush.bf16.msra.mxu0 %v1632
        %1753 = vmatpush.bf16.msra.mxu0 %v1630
        %1754 = vmatpush.bf16.msra.mxu0 %v1628
        %1755 = vmatpush.bf16.msra.mxu0 %v1626
        %1756 = vmatpush.bf16.msra.mxu0 %v1624
        %1757 = vmatpush.bf16.msra.mxu0 %v1622
        %1758 = vmatmul.bf16.gmra.mxu0 %v1356
        %v1759 = vpop.f32.mrf.mxu0
        %v1760 = vadd.f32 %v1426, %v1759
        %v1761 = vpop.f32.mrf.mxu0
        %1762 = vdwg.mxu0
        %1763 = vmatpush.bf16.msra.mxu0 %v1652
        %1764 = vmatpush.bf16.msra.mxu0 %v1650
        %1765 = vmatpush.bf16.msra.mxu0 %v1648
        %1766 = vmatpush.bf16.msra.mxu0 %v1646
        %1767 = vmatpush.bf16.msra.mxu0 %v1644
        %1768 = vmatpush.bf16.msra.mxu0 %v1642
        %1769 = vmatpush.bf16.msra.mxu0 %v1640
        %1770 = vmatpush.bf16.msra.mxu0 %v1638
        %1771 = vmatmul.bf16.gmra.mxu0 %v1357
        %v1772 = vpop.f32.mrf.mxu0
        %v1773 = vadd.f32 %v1760, %v1772
        %v1774 = vpop.f32.mrf.mxu0
        %1775 = vdwg.mxu0
        %1776 = vmatpush.bf16.msra.mxu0 %v1668
        %1777 = vmatpush.bf16.msra.mxu0 %v1666
        %1778 = vmatpush.bf16.msra.mxu0 %v1664
        %1779 = vmatpush.bf16.msra.mxu0 %v1662
        %1780 = vmatpush.bf16.msra.mxu0 %v1660
        %1781 = vmatpush.bf16.msra.mxu0 %v1658
        %1782 = vmatpush.bf16.msra.mxu0 %v1656
        %1783 = vmatpush.bf16.msra.mxu0 %v1654
        %1784 = vmatmul.bf16.gmra.mxu0 %v1358
        %v1785 = vpop.f32.mrf.mxu0
        %v1786 = vadd.f32 %v1773, %v1785
        %v1787 = vpop.f32.mrf.mxu0
        %1788 = vdwg.mxu0
        %1789 = vmatpush.bf16.msra.mxu0 %v1684
        %1790 = vmatpush.bf16.msra.mxu0 %v1682
        %1791 = vmatpush.bf16.msra.mxu0 %v1680
        %1792 = vmatpush.bf16.msra.mxu0 %v1678
        %1793 = vmatpush.bf16.msra.mxu0 %v1676
        %1794 = vmatpush.bf16.msra.mxu0 %v1674
        %1795 = vmatpush.bf16.msra.mxu0 %v1672
        %1796 = vmatpush.bf16.msra.mxu0 %v1670
        %1797 = vmatmul.bf16.gmra.mxu0 %v1359
        %v1798 = vpop.f32.mrf.mxu0
        %v1799 = vadd.f32 %v1786, %v1798
        %v1800 = vpop.f32.mrf.mxu0
        %1801 = vdwg.mxu0
        %1802 = vmatpush.bf16.msra.mxu0 %v1637
        %1803 = vmatpush.bf16.msra.mxu0 %v1635
        %1804 = vmatpush.bf16.msra.mxu0 %v1633
        %1805 = vmatpush.bf16.msra.mxu0 %v1631
        %1806 = vmatpush.bf16.msra.mxu0 %v1629
        %1807 = vmatpush.bf16.msra.mxu0 %v1627
        %1808 = vmatpush.bf16.msra.mxu0 %v1625
        %1809 = vmatpush.bf16.msra.mxu0 %v1623
        %1810 = vmatmul.bf16.gmra.mxu0 %v1356
        %v1811 = vpop.f32.mrf.mxu0
        %v1812 = vadd.f32 %v1427, %v1811
        %v1813 = vpop.f32.mrf.mxu0
        %1814 = vdwg.mxu0
        %1815 = vmatpush.bf16.msra.mxu0 %v1653
        %1816 = vmatpush.bf16.msra.mxu0 %v1651
        %1817 = vmatpush.bf16.msra.mxu0 %v1649
        %1818 = vmatpush.bf16.msra.mxu0 %v1647
        %1819 = vmatpush.bf16.msra.mxu0 %v1645
        %1820 = vmatpush.bf16.msra.mxu0 %v1643
        %1821 = vmatpush.bf16.msra.mxu0 %v1641
        %1822 = vmatpush.bf16.msra.mxu0 %v1639
        %1823 = vmatmul.bf16.gmra.mxu0 %v1357
        %v1824 = vpop.f32.mrf.mxu0
        %v1825 = vadd.f32 %v1812, %v1824
        %v1826 = vpop.f32.mrf.mxu0
        %1827 = vdwg.mxu0
        %1828 = vmatpush.bf16.msra.mxu0 %v1669
        %1829 = vmatpush.bf16.msra.mxu0 %v1667
        %1830 = vmatpush.bf16.msra.mxu0 %v1665
        %1831 = vmatpush.bf16.msra.mxu0 %v1663
        %1832 = vmatpush.bf16.msra.mxu0 %v1661
        %1833 = vmatpush.bf16.msra.mxu0 %v1659
        %1834 = vmatpush.bf16.msra.mxu0 %v1657
        %1835 = vmatpush.bf16.msra.mxu0 %v1655
        %1836 = vmatmul.bf16.gmra.mxu0 %v1358
        %v1837 = vpop.f32.mrf.mxu0
        %v1838 = vadd.f32 %v1825, %v1837
        %v1839 = vpop.f32.mrf.mxu0
        %1840 = vdwg.mxu0
        %1841 = vmatpush.bf16.msra.mxu0 %v1685
        %1842 = vmatpush.bf16.msra.mxu0 %v1683
        %1843 = vmatpush.bf16.msra.mxu0 %v1681
        %1844 = vmatpush.bf16.msra.mxu0 %v1679
        %1845 = vmatpush.bf16.msra.mxu0 %v1677
        %1846 = vmatpush.bf16.msra.mxu0 %v1675
        %1847 = vmatpush.bf16.msra.mxu0 %v1673
        %1848 = vmatpush.bf16.msra.mxu0 %v1671
        %1849 = vmatmul.bf16.gmra.mxu0 %v1359
        %v1850 = vpop.f32.mrf.mxu0
        %v1851 = vadd.f32 %v1838, %v1850
        %v1852 = vpop.f32.mrf.mxu0
        %1853 = vdwg.mxu0
        %v1854 = vadd.f32 %v1799, %v1851
        %1855 = vadd.xlane.f32.xlu0 %v1854
        %v1856 = vpop.xlane.xlu0 %1855
        %v1857 = vmul.f32 %v1799, %v1799
        %v1858 = vmul.f32 %v1851, %v1851
        %v1859 = vadd.f32 %v1857, %v1858
        %1860 = vadd.xlane.f32.xlu0 %v1859
        %v1861 = vpop.xlane.xlu0 %1860
        %v1862 = vmul.f32 %v1856, 0.00390625
        %v1863 = vmul.f32 %v1861, 0.00390625
        %v1864 = vmul.f32 %v1862, %v1862
        %v1865 = vsub.f32 %v1863, %v1864
        %v1866 = vmax.f32 %v1865, 0.0
        %v1867 = vadd.f32 %v1866, 1e-05
        %v1868 = vrsqrt.pop %v1867
        %v1869 = vmul.f32 %v1868, %v1867
        %v1870 = vmul.f32 %v1869, %v1868
        %v1871 = vmul.f32 0.5, %v1870
        %v1872 = vsub.f32 1.5, %v1871
        %v1873 = vmul.f32 %v1868, %v1872
        %vm1874 = vweird.f32 %v1867
        %vm1875 = vweird.f32 %v1868
        %vm1876 = vmor %vm1874, %vm1875
        %v1877 = vsel %vm1876, %v1868, %v1873
        %v1878 = vsub.f32 %v1799, %v1862
        %v1879 = vsub.f32 %v1851, %v1862
        %v1880 = vmul.f32 %v1878, %v1877
        %v1881 = vmul.f32 %v1879, %v1877
        %v1882 = vld [vmem:[#allocation14] sm:$0x3]
        %v1884 = vperm.slane %v1882, 0
        %v1885 = vperm.slane %v1882, 1
        %v1888 = vmul.f32 %v1880, %v1884
        %v1889 = vmul.f32 %v1881, %v1885
        %v1890 = vld [vmem:[#allocation16] sm:$0x3]
        %v1892 = vperm.slane %v1890, 0
        %v1893 = vperm.slane %v1890, 1
        %v1896 = vadd.f32 %v1888, %v1892
        %v1897 = vadd.f32 %v1889, %v1893
        %v1898 = vmax.f32 %v1896, 0.0
        %v1899 = vmax.f32 %v1897, 0.0
        %v1900 = vpack.c.bf16 %v1898, %v1898
        %v1901 = vpack.c.bf16 %v1899, %v1899
        %v1902 = vld [vmem:[#allocation17] sm:$0xf]
        %v1903 = vld [vmem:[#allocation17 + $0x4] sm:$0xf]
        %v1904 = vld [vmem:[#allocation17 + $0x8] sm:$0xf]
        %v1905 = vld [vmem:[#allocation17 + $0xc] sm:$0xf]
        %v1906 = vld [vmem:[#allocation17 + $0x10] sm:$0xf]
        %v1907 = vld [vmem:[#allocation17 + $0x14] sm:$0xf]
        %v1908 = vld [vmem:[#allocation17 + $0x18] sm:$0xf]
        %v1909 = vld [vmem:[#allocation17 + $0x1c] sm:$0xf]
        %v1910 = vld [vmem:[#allocation17 + $0x20] sm:$0xf]
        %v1911 = vld [vmem:[#allocation17 + $0x24] sm:$0xf]
        %v1912 = vld [vmem:[#allocation17 + $0x28] sm:$0xf]
        %v1913 = vld [vmem:[#allocation17 + $0x2c] sm:$0xf]
        %v1914 = vld [vmem:[#allocation17 + $0x30] sm:$0xf]
        %v1915 = vld [vmem:[#allocation17 + $0x34] sm:$0xf]
        %v1916 = vld [vmem:[#allocation17 + $0x38] sm:$0xf]
        %v1917 = vld [vmem:[#allocation17 + $0x3c] sm:$0xf]
        %v1918 = vld [vmem:[#allocation17 + $0x40] sm:$0xf]
        %v1919 = vld [vmem:[#allocation17 + $0x44] sm:$0xf]
        %v1920 = vld [vmem:[#allocation17 + $0x48] sm:$0xf]
        %v1921 = vld [vmem:[#allocation17 + $0x4c] sm:$0xf]
        %v1922 = vld [vmem:[#allocation17 + $0x50] sm:$0xf]
        %v1923 = vld [vmem:[#allocation17 + $0x54] sm:$0xf]
        %v1924 = vld [vmem:[#allocation17 + $0x58] sm:$0xf]
        %v1925 = vld [vmem:[#allocation17 + $0x5c] sm:$0xf]
        %v1926 = vld [vmem:[#allocation17 + $0x60] sm:$0xf]
        %v1927 = vld [vmem:[#allocation17 + $0x64] sm:$0xf]
        %v1928 = vld [vmem:[#allocation17 + $0x68] sm:$0xf]
        %v1929 = vld [vmem:[#allocation17 + $0x6c] sm:$0xf]
        %v1930 = vld [vmem:[#allocation17 + $0x70] sm:$0xf]
        %v1931 = vld [vmem:[#allocation17 + $0x74] sm:$0xf]
        %v1932 = vld [vmem:[#allocation17 + $0x78] sm:$0xf]
        %v1933 = vld [vmem:[#allocation17 + $0x7c] sm:$0xf]
        %v1934 = vld [vmem:[#allocation19] sm:$0x1]
        %v1936 = vperm.slane %v1934, 0
        %v1970 = vunpack.c.l.b16 %v1902
        %v1971 = vunpack.c.l.b16 %v1903
        %v1972 = vunpack.c.l.b16 %v1904
        %v1973 = vunpack.c.l.b16 %v1905
        %v1974 = vunpack.c.l.b16 %v1906
        %v1975 = vunpack.c.l.b16 %v1907
        %v1976 = vunpack.c.l.b16 %v1908
        %v1977 = vunpack.c.l.b16 %v1909
        %v1978 = vunpack.c.l.b16 %v1910
        %v1979 = vunpack.c.l.b16 %v1911
        %v1980 = vunpack.c.l.b16 %v1912
        %v1981 = vunpack.c.l.b16 %v1913
        %v1982 = vunpack.c.l.b16 %v1914
        %v1983 = vunpack.c.l.b16 %v1915
        %v1984 = vunpack.c.l.b16 %v1916
        %v1985 = vunpack.c.l.b16 %v1917
        %v1986 = vunpack.c.l.b16 %v1918
        %v1987 = vunpack.c.l.b16 %v1919
        %v1988 = vunpack.c.l.b16 %v1920
        %v1989 = vunpack.c.l.b16 %v1921
        %v1990 = vunpack.c.l.b16 %v1922
        %v1991 = vunpack.c.l.b16 %v1923
        %v1992 = vunpack.c.l.b16 %v1924
        %v1993 = vunpack.c.l.b16 %v1925
        %v1994 = vunpack.c.l.b16 %v1926
        %v1995 = vunpack.c.l.b16 %v1927
        %v1996 = vunpack.c.l.b16 %v1928
        %v1997 = vunpack.c.l.b16 %v1929
        %v1998 = vunpack.c.l.b16 %v1930
        %v1999 = vunpack.c.l.b16 %v1931
        %v2000 = vunpack.c.l.b16 %v1932
        %v2001 = vunpack.c.l.b16 %v1933
        %v2002 = vpack.c.b16 %v1971, %v1970
        %v2003 = vpack.c.b16 %v1973, %v1972
        %v2004 = vpack.c.b16 %v1975, %v1974
        %v2005 = vpack.c.b16 %v1977, %v1976
        %v2006 = vpack.c.b16 %v1979, %v1978
        %v2007 = vpack.c.b16 %v1981, %v1980
        %v2008 = vpack.c.b16 %v1983, %v1982
        %v2009 = vpack.c.b16 %v1985, %v1984
        %v2010 = vpack.c.b16 %v1987, %v1986
        %v2011 = vpack.c.b16 %v1989, %v1988
        %v2012 = vpack.c.b16 %v1991, %v1990
        %v2013 = vpack.c.b16 %v1993, %v1992
        %v2014 = vpack.c.b16 %v1995, %v1994
        %v2015 = vpack.c.b16 %v1997, %v1996
        %v2016 = vpack.c.b16 %v1999, %v1998
        %v2017 = vpack.c.b16 %v2001, %v2000
        %2034 = vmatpush.bf16.msra.mxu0 %v2009
        %2035 = vmatpush.bf16.msra.mxu0 %v2008
        %2036 = vmatpush.bf16.msra.mxu0 %v2007
        %2037 = vmatpush.bf16.msra.mxu0 %v2006
        %2038 = vmatpush.bf16.msra.mxu0 %v2005
        %2039 = vmatpush.bf16.msra.mxu0 %v2004
        %2040 = vmatpush.bf16.msra.mxu0 %v2003
        %2041 = vmatpush.bf16.msra.mxu0 %v2002
        %2042 = vmatmul.bf16.gmra.mxu0 %v1900
        %v2043 = vpop.f32.mrf.mxu0
        %v2044 = vadd.f32 %v1936, %v2043
        %v2045 = vpop.f32.mrf.mxu0
        %2046 = vdwg.mxu0
        %2047 = vmatpush.bf16.msra.mxu0 %v2017
        %2048 = vmatpush.bf16.msra.mxu0 %v2016
        %2049 = vmatpush.bf16.msra.mxu0 %v2015
        %2050 = vmatpush.bf16.msra.mxu0 %v2014
        %2051 = vmatpush.bf16.msra.mxu0 %v2013
        %2052 = vmatpush.bf16.msra.mxu0 %v2012
        %2053 = vmatpush.bf16.msra.mxu0 %v2011
        %2054 = vmatpush.bf16.msra.mxu0 %v2010
        %2055 = vmatmul.bf16.gmra.mxu0 %v1901
        %v2056 = vpop.f32.mrf.mxu0
        %v2057 = vadd.f32 %v2044, %v2056
        %v2058 = vpop.f32.mrf.mxu0
        %2059 = vdwg.mxu0
        %2060 = vadd.xlane.f32.xlu0 %v2057
        %v2061 = vpop.xlane.xlu0 %2060
        %v2062 = vmul.f32 %v2057, %v2057
        %2063 = vadd.xlane.f32.xlu0 %v2062
        %v2064 = vpop.xlane.xlu0 %2063
        %v2065 = vmul.f32 %v2061, 0.0078125
        %v2066 = vmul.f32 %v2064, 0.0078125
        %v2067 = vmul.f32 %v2065, %v2065
        %v2068 = vsub.f32 %v2066, %v2067
        %v2069 = vmax.f32 %v2068, 0.0
        %v2070 = vadd.f32 %v2069, 1e-05
        %v2071 = vrsqrt.pop %v2070
        %v2072 = vmul.f32 %v2071, %v2070
        %v2073 = vmul.f32 %v2072, %v2071
        %v2074 = vmul.f32 0.5, %v2073
        %v2075 = vsub.f32 1.5, %v2074
        %v2076 = vmul.f32 %v2071, %v2075
        %vm2077 = vweird.f32 %v2070
        %vm2078 = vweird.f32 %v2071
        %vm2079 = vmor %vm2077, %vm2078
        %v2080 = vsel %vm2079, %v2071, %v2076
        %v2081 = vsub.f32 %v2057, %v2065
        %v2082 = vmul.f32 %v2081, %v2080
        %v2083 = vld [vmem:[#allocation20] sm:$0x1]
        %v2085 = vperm.slane %v2083, 0
        %v2087 = vmul.f32 %v2082, %v2085
        %v2088 = vld [vmem:[#allocation22] sm:$0x1]
        %v2090 = vperm.slane %v2088, 0
        %v2092 = vadd.f32 %v2087, %v2090
        %v2093 = vmax.f32 %v2092, 0.0
        %v2094 = vpack.c.bf16 %v2093, %v2093
        %v2095 = vld [vmem:[#allocation23] sm:$0xff]
        %v2096 = vld [vmem:[#allocation23 + $0x8] sm:$0xff]
        %v2097 = vld [vmem:[#allocation23 + $0x10] sm:$0xff]
        %v2098 = vld [vmem:[#allocation23 + $0x18] sm:$0xff]
        %v2099 = vld [vmem:[#allocation23 + $0x20] sm:$0xff]
        %v2100 = vld [vmem:[#allocation23 + $0x28] sm:$0xff]
        %v2101 = vld [vmem:[#allocation23 + $0x30] sm:$0xff]
        %v2102 = vld [vmem:[#allocation23 + $0x38] sm:$0xff]
        %v2103 = vld [vmem:[#allocation23 + $0x40] sm:$0xff]
        %v2104 = vld [vmem:[#allocation23 + $0x48] sm:$0xff]
        %v2105 = vld [vmem:[#allocation23 + $0x50] sm:$0xff]
        %v2106 = vld [vmem:[#allocation23 + $0x58] sm:$0xff]
        %v2107 = vld [vmem:[#allocation23 + $0x60] sm:$0xff]
        %v2108 = vld [vmem:[#allocation23 + $0x68] sm:$0xff]
        %v2109 = vld [vmem:[#allocation23 + $0x70] sm:$0xff]
        %v2110 = vld [vmem:[#allocation23 + $0x78] sm:$0xff]
        %v2111 = vld [vmem:[#allocation25] sm:$0x3]
        %v2113 = vperm.slane %v2111, 0
        %v2114 = vperm.slane %v2111, 1
        %v2133 = vunpack.c.l.b16 %v2095
        %v2134 = vunpack.c.h.b16 %v2095
        %v2135 = vunpack.c.l.b16 %v2096
        %v2136 = vunpack.c.h.b16 %v2096
        %v2137 = vunpack.c.l.b16 %v2097
        %v2138 = vunpack.c.h.b16 %v2097
        %v2139 = vunpack.c.l.b16 %v2098
        %v2140 = vunpack.c.h.b16 %v2098
        %v2141 = vunpack.c.l.b16 %v2099
        %v2142 = vunpack.c.h.b16 %v2099
        %v2143 = vunpack.c.l.b16 %v2100
        %v2144 = vunpack.c.h.b16 %v2100
        %v2145 = vunpack.c.l.b16 %v2101
        %v2146 = vunpack.c.h.b16 %v2101
        %v2147 = vunpack.c.l.b16 %v2102
        %v2148 = vunpack.c.h.b16 %v2102
        %v2149 = vunpack.c.l.b16 %v2103
        %v2150 = vunpack.c.h.b16 %v2103
        %v2151 = vunpack.c.l.b16 %v2104
        %v2152 = vunpack.c.h.b16 %v2104
        %v2153 = vunpack.c.l.b16 %v2105
        %v2154 = vunpack.c.h.b16 %v2105
        %v2155 = vunpack.c.l.b16 %v2106
        %v2156 = vunpack.c.h.b16 %v2106
        %v2157 = vunpack.c.l.b16 %v2107
        %v2158 = vunpack.c.h.b16 %v2107
        %v2159 = vunpack.c.l.b16 %v2108
        %v2160 = vunpack.c.h.b16 %v2108
        %v2161 = vunpack.c.l.b16 %v2109
        %v2162 = vunpack.c.h.b16 %v2109
        %v2163 = vunpack.c.l.b16 %v2110
        %v2164 = vunpack.c.h.b16 %v2110
        %v2165 = vpack.c.b16 %v2135, %v2133
        %v2166 = vpack.c.b16 %v2136, %v2134
        %v2167 = vpack.c.b16 %v2139, %v2137
        %v2168 = vpack.c.b16 %v2140, %v2138
        %v2169 = vpack.c.b16 %v2143, %v2141
        %v2170 = vpack.c.b16 %v2144, %v2142
        %v2171 = vpack.c.b16 %v2147, %v2145
        %v2172 = vpack.c.b16 %v2148, %v2146
        %v2173 = vpack.c.b16 %v2151, %v2149
        %v2174 = vpack.c.b16 %v2152, %v2150
        %v2175 = vpack.c.b16 %v2155, %v2153
        %v2176 = vpack.c.b16 %v2156, %v2154
        %v2177 = vpack.c.b16 %v2159, %v2157
        %v2178 = vpack.c.b16 %v2160, %v2158
        %v2179 = vpack.c.b16 %v2163, %v2161
        %v2180 = vpack.c.b16 %v2164, %v2162
        %2197 = vmatpush.bf16.msra.mxu0 %v2179
        %2198 = vmatpush.bf16.msra.mxu0 %v2177
        %2199 = vmatpush.bf16.msra.mxu0 %v2175
        %2200 = vmatpush.bf16.msra.mxu0 %v2173
        %2201 = vmatpush.bf16.msra.mxu0 %v2171
        %2202 = vmatpush.bf16.msra.mxu0 %v2169
        %2203 = vmatpush.bf16.msra.mxu0 %v2167
        %2204 = vmatpush.bf16.msra.mxu0 %v2165
        %2205 = vmatmul.bf16.gmra.mxu0 %v2094
        %v2206 = vpop.f32.mrf.mxu0
        %v2207 = vadd.f32 %v2113, %v2206
        %v2208 = vpop.f32.mrf.mxu0
        %2209 = vdwg.mxu0
        %2210 = vmatpush.bf16.msra.mxu0 %v2180
        %2211 = vmatpush.bf16.msra.mxu0 %v2178
        %2212 = vmatpush.bf16.msra.mxu0 %v2176
        %2213 = vmatpush.bf16.msra.mxu0 %v2174
        %2214 = vmatpush.bf16.msra.mxu0 %v2172
        %2215 = vmatpush.bf16.msra.mxu0 %v2170
        %2216 = vmatpush.bf16.msra.mxu0 %v2168
        %2217 = vmatpush.bf16.msra.mxu0 %v2166
        %2218 = vmatmul.bf16.gmra.mxu0 %v2094
        %v2219 = vpop.f32.mrf.mxu0
        %v2220 = vadd.f32 %v2114, %v2219
        %v2221 = vpop.f32.mrf.mxu0
        %2222 = vdwg.mxu0
        %v2223 = vadd.f32 %v2207, %v2220
        %2224 = vadd.xlane.f32.xlu0 %v2223
        %v2225 = vpop.xlane.xlu0 %2224
        %v2226 = vmul.f32 %v2207, %v2207
        %v2227 = vmul.f32 %v2220, %v2220
        %v2228 = vadd.f32 %v2226, %v2227
        %2229 = vadd.xlane.f32.xlu0 %v2228
        %v2230 = vpop.xlane.xlu0 %2229
        %v2231 = vmul.f32 %v2225, 0.00390625
        %v2232 = vmul.f32 %v2230, 0.00390625
        %v2233 = vmul.f32 %v2231, %v2231
        %v2234 = vsub.f32 %v2232, %v2233
        %v2235 = vmax.f32 %v2234, 0.0
        %v2236 = vadd.f32 %v2235, 1e-05
        %v2237 = vrsqrt.pop %v2236
        %v2238 = vmul.f32 %v2237, %v2236
        %v2239 = vmul.f32 %v2238, %v2237
        %v2240 = vmul.f32 0.5, %v2239
        %v2241 = vsub.f32 1.5, %v2240
        %v2242 = vmul.f32 %v2237, %v2241
        %vm2243 = vweird.f32 %v2236
        %vm2244 = vweird.f32 %v2237
        %vm2245 = vmor %vm2243, %vm2244
        %v2246 = vsel %vm2245, %v2237, %v2242
        %v2247 = vsub.f32 %v2207, %v2231
        %v2248 = vsub.f32 %v2220, %v2231
        %v2249 = vmul.f32 %v2247, %v2246
        %v2250 = vmul.f32 %v2248, %v2246
        %v2251 = vld [vmem:[%s15] sm:$0x3]
        %v2253 = vperm.slane %v2251, 0
        %v2254 = vperm.slane %v2251, 1
        %v2257 = vmul.f32 %v2249, %v2253
        %v2258 = vmul.f32 %v2250, %v2254
        %v2259 = vld [vmem:[#allocation26] sm:$0x3]
        %v2261 = vperm.slane %v2259, 0
        %v2262 = vperm.slane %v2259, 1
        %v2265 = vadd.f32 %v2257, %v2261
        %v2266 = vadd.f32 %v2258, %v2262
        %v2267 = vmax.f32 %v2265, 0.0
        %v2268 = vmax.f32 %v2266, 0.0
        %v2269 = vpack.c.bf16 %v2267, %v2267
        %v2270 = vpack.c.bf16 %v2268, %v2268
        %v2271 = vld [vmem:[#allocation28] sm:$0xff]
        %v2272 = vld [vmem:[#allocation28 + $0x8] sm:$0xff]
        %v2273 = vld [vmem:[#allocation28 + $0x10] sm:$0xff]
        %v2274 = vld [vmem:[#allocation28 + $0x18] sm:$0xff]
        %v2275 = vld [vmem:[#allocation28 + $0x20] sm:$0xff]
        %v2276 = vld [vmem:[#allocation28 + $0x28] sm:$0xff]
        %v2277 = vld [vmem:[#allocation28 + $0x30] sm:$0xff]
        %v2278 = vld [vmem:[#allocation28 + $0x38] sm:$0xff]
        %v2279 = vld [vmem:[#allocation28 + $0x40] sm:$0xff]
        %v2280 = vld [vmem:[#allocation28 + $0x48] sm:$0xff]
        %v2281 = vld [vmem:[#allocation28 + $0x50] sm:$0xff]
        %v2282 = vld [vmem:[#allocation28 + $0x58] sm:$0xff]
        %v2283 = vld [vmem:[#allocation28 + $0x60] sm:$0xff]
        %v2284 = vld [vmem:[#allocation28 + $0x68] sm:$0xff]
        %v2285 = vld [vmem:[#allocation28 + $0x70] sm:$0xff]
        %v2286 = vld [vmem:[#allocation28 + $0x78] sm:$0xff]
        %v2287 = vld [vmem:[#allocation28 + $0x80] sm:$0xff]
        %v2288 = vld [vmem:[#allocation28 + $0x88] sm:$0xff]
        %v2289 = vld [vmem:[#allocation28 + $0x90] sm:$0xff]
        %v2290 = vld [vmem:[#allocation28 + $0x98] sm:$0xff]
        %v2291 = vld [vmem:[#allocation28 + $0xa0] sm:$0xff]
        %v2292 = vld [vmem:[#allocation28 + $0xa8] sm:$0xff]
        %v2293 = vld [vmem:[#allocation28 + $0xb0] sm:$0xff]
        %v2294 = vld [vmem:[#allocation28 + $0xb8] sm:$0xff]
        %v2295 = vld [vmem:[#allocation28 + $0xc0] sm:$0xff]
        %v2296 = vld [vmem:[#allocation28 + $0xc8] sm:$0xff]
        %v2297 = vld [vmem:[#allocation28 + $0xd0] sm:$0xff]
        %v2298 = vld [vmem:[#allocation28 + $0xd8] sm:$0xff]
        %v2299 = vld [vmem:[#allocation28 + $0xe0] sm:$0xff]
        %v2300 = vld [vmem:[#allocation28 + $0xe8] sm:$0xff]
        %v2301 = vld [vmem:[#allocation28 + $0xf0] sm:$0xff]
        %v2302 = vld [vmem:[#allocation28 + $0xf8] sm:$0xff]
        %v2303 = vld [vmem:[#allocation28 + $0x100] sm:$0xff]
        %v2304 = vld [vmem:[#allocation28 + $0x108] sm:$0xff]
        %v2305 = vld [vmem:[#allocation28 + $0x110] sm:$0xff]
        %v2306 = vld [vmem:[#allocation28 + $0x118] sm:$0xff]
        %v2307 = vld [vmem:[#allocation28 + $0x120] sm:$0xff]
        %v2308 = vld [vmem:[#allocation28 + $0x128] sm:$0xff]
        %v2309 = vld [vmem:[#allocation28 + $0x130] sm:$0xff]
        %v2310 = vld [vmem:[#allocation28 + $0x138] sm:$0xff]
        %v2311 = vld [vmem:[#allocation28 + $0x140] sm:$0xff]
        %v2312 = vld [vmem:[#allocation28 + $0x148] sm:$0xff]
        %v2313 = vld [vmem:[#allocation28 + $0x150] sm:$0xff]
        %v2314 = vld [vmem:[#allocation28 + $0x158] sm:$0xff]
        %v2315 = vld [vmem:[#allocation28 + $0x160] sm:$0xff]
        %v2316 = vld [vmem:[#allocation28 + $0x168] sm:$0xff]
        %v2317 = vld [vmem:[#allocation28 + $0x170] sm:$0xff]
        %v2318 = vld [vmem:[#allocation28 + $0x178] sm:$0xff]
        %v2319 = vld [vmem:[#allocation28 + $0x180] sm:$0xff]
        %v2320 = vld [vmem:[#allocation28 + $0x188] sm:$0xff]
        %v2321 = vld [vmem:[#allocation28 + $0x190] sm:$0xff]
        %v2322 = vld [vmem:[#allocation28 + $0x198] sm:$0xff]
        %v2323 = vld [vmem:[#allocation28 + $0x1a0] sm:$0xff]
        %v2324 = vld [vmem:[#allocation28 + $0x1a8] sm:$0xff]
        %v2325 = vld [vmem:[#allocation28 + $0x1b0] sm:$0xff]
        %v2326 = vld [vmem:[#allocation28 + $0x1b8] sm:$0xff]
        %v2327 = vld [vmem:[#allocation28 + $0x1c0] sm:$0xff]
        %v2328 = vld [vmem:[#allocation28 + $0x1c8] sm:$0xff]
        %v2329 = vld [vmem:[#allocation28 + $0x1d0] sm:$0xff]
        %v2330 = vld [vmem:[#allocation28 + $0x1d8] sm:$0xff]
        %v2331 = vld [vmem:[#allocation28 + $0x1e0] sm:$0xff]
        %v2332 = vld [vmem:[#allocation28 + $0x1e8] sm:$0xff]
        %v2333 = vld [vmem:[#allocation28 + $0x1f0] sm:$0xff]
        %v2334 = vld [vmem:[#allocation28 + $0x1f8] sm:$0xff]
        %v2335 = vld [vmem:[%s18] sm:$0xf]
        %v2337 = vperm.slane %v2335, 0
        %v2338 = vperm.slane %v2335, 1
        %v2339 = vperm.slane %v2335, 2
        %v2340 = vperm.slane %v2335, 3
        %v2409 = vunpack.c.l.b16 %v2271
        %v2410 = vunpack.c.h.b16 %v2271
        %v2411 = vunpack.c.l.b16 %v2272
        %v2412 = vunpack.c.h.b16 %v2272
        %v2413 = vunpack.c.l.b16 %v2273
        %v2414 = vunpack.c.h.b16 %v2273
        %v2415 = vunpack.c.l.b16 %v2274
        %v2416 = vunpack.c.h.b16 %v2274
        %v2417 = vunpack.c.l.b16 %v2275
        %v2418 = vunpack.c.h.b16 %v2275
        %v2419 = vunpack.c.l.b16 %v2276
        %v2420 = vunpack.c.h.b16 %v2276
        %v2421 = vunpack.c.l.b16 %v2277
        %v2422 = vunpack.c.h.b16 %v2277
        %v2423 = vunpack.c.l.b16 %v2278
        %v2424 = vunpack.c.h.b16 %v2278
        %v2425 = vunpack.c.l.b16 %v2279
        %v2426 = vunpack.c.h.b16 %v2279
        %v2427 = vunpack.c.l.b16 %v2280
        %v2428 = vunpack.c.h.b16 %v2280
        %v2429 = vunpack.c.l.b16 %v2281
        %v2430 = vunpack.c.h.b16 %v2281
        %v2431 = vunpack.c.l.b16 %v2282
        %v2432 = vunpack.c.h.b16 %v2282
        %v2433 = vunpack.c.l.b16 %v2283
        %v2434 = vunpack.c.h.b16 %v2283
        %v2435 = vunpack.c.l.b16 %v2284
        %v2436 = vunpack.c.h.b16 %v2284
        %v2437 = vunpack.c.l.b16 %v2285
        %v2438 = vunpack.c.h.b16 %v2285
        %v2439 = vunpack.c.l.b16 %v2286
        %v2440 = vunpack.c.h.b16 %v2286
        %v2441 = vunpack.c.l.b16 %v2287
        %v2442 = vunpack.c.h.b16 %v2287
        %v2443 = vunpack.c.l.b16 %v2288
        %v2444 = vunpack.c.h.b16 %v2288
        %v2445 = vunpack.c.l.b16 %v2289
        %v2446 = vunpack.c.h.b16 %v2289
        %v2447 = vunpack.c.l.b16 %v2290
        %v2448 = vunpack.c.h.b16 %v2290
        %v2449 = vunpack.c.l.b16 %v2291
        %v2450 = vunpack.c.h.b16 %v2291
        %v2451 = vunpack.c.l.b16 %v2292
        %v2452 = vunpack.c.h.b16 %v2292
        %v2453 = vunpack.c.l.b16 %v2293
        %v2454 = vunpack.c.h.b16 %v2293
        %v2455 = vunpack.c.l.b16 %v2294
        %v2456 = vunpack.c.h.b16 %v2294
        %v2457 = vunpack.c.l.b16 %v2295
        %v2458 = vunpack.c.h.b16 %v2295
        %v2459 = vunpack.c.l.b16 %v2296
        %v2460 = vunpack.c.h.b16 %v2296
        %v2461 = vunpack.c.l.b16 %v2297
        %v2462 = vunpack.c.h.b16 %v2297
        %v2463 = vunpack.c.l.b16 %v2298
        %v2464 = vunpack.c.h.b16 %v2298
        %v2465 = vunpack.c.l.b16 %v2299
        %v2466 = vunpack.c.h.b16 %v2299
        %v2467 = vunpack.c.l.b16 %v2300
        %v2468 = vunpack.c.h.b16 %v2300
        %v2469 = vunpack.c.l.b16 %v2301
        %v2470 = vunpack.c.h.b16 %v2301
        %v2471 = vunpack.c.l.b16 %v2302
        %v2472 = vunpack.c.h.b16 %v2302
        %v2473 = vunpack.c.l.b16 %v2303
        %v2474 = vunpack.c.h.b16 %v2303
        %v2475 = vunpack.c.l.b16 %v2304
        %v2476 = vunpack.c.h.b16 %v2304
        %v2477 = vunpack.c.l.b16 %v2305
        %v2478 = vunpack.c.h.b16 %v2305
        %v2479 = vunpack.c.l.b16 %v2306
        %v2480 = vunpack.c.h.b16 %v2306
        %v2481 = vunpack.c.l.b16 %v2307
        %v2482 = vunpack.c.h.b16 %v2307
        %v2483 = vunpack.c.l.b16 %v2308
        %v2484 = vunpack.c.h.b16 %v2308
        %v2485 = vunpack.c.l.b16 %v2309
        %v2486 = vunpack.c.h.b16 %v2309
        %v2487 = vunpack.c.l.b16 %v2310
        %v2488 = vunpack.c.h.b16 %v2310
        %v2489 = vunpack.c.l.b16 %v2311
        %v2490 = vunpack.c.h.b16 %v2311
        %v2491 = vunpack.c.l.b16 %v2312
        %v2492 = vunpack.c.h.b16 %v2312
        %v2493 = vunpack.c.l.b16 %v2313
        %v2494 = vunpack.c.h.b16 %v2313
        %v2495 = vunpack.c.l.b16 %v2314
        %v2496 = vunpack.c.h.b16 %v2314
        %v2497 = vunpack.c.l.b16 %v2315
        %v2498 = vunpack.c.h.b16 %v2315
        %v2499 = vunpack.c.l.b16 %v2316
        %v2500 = vunpack.c.h.b16 %v2316
        %v2501 = vunpack.c.l.b16 %v2317
        %v2502 = vunpack.c.h.b16 %v2317
        %v2503 = vunpack.c.l.b16 %v2318
        %v2504 = vunpack.c.h.b16 %v2318
        %v2505 = vunpack.c.l.b16 %v2319
        %v2506 = vunpack.c.h.b16 %v2319
        %v2507 = vunpack.c.l.b16 %v2320
        %v2508 = vunpack.c.h.b16 %v2320
        %v2509 = vunpack.c.l.b16 %v2321
        %v2510 = vunpack.c.h.b16 %v2321
        %v2511 = vunpack.c.l.b16 %v2322
        %v2512 = vunpack.c.h.b16 %v2322
        %v2513 = vunpack.c.l.b16 %v2323
        %v2514 = vunpack.c.h.b16 %v2323
        %v2515 = vunpack.c.l.b16 %v2324
        %v2516 = vunpack.c.h.b16 %v2324
        %v2517 = vunpack.c.l.b16 %v2325
        %v2518 = vunpack.c.h.b16 %v2325
        %v2519 = vunpack.c.l.b16 %v2326
        %v2520 = vunpack.c.h.b16 %v2326
        %v2521 = vunpack.c.l.b16 %v2327
        %v2522 = vunpack.c.h.b16 %v2327
        %v2523 = vunpack.c.l.b16 %v2328
        %v2524 = vunpack.c.h.b16 %v2328
        %v2525 = vunpack.c.l.b16 %v2329
        %v2526 = vunpack.c.h.b16 %v2329
        %v2527 = vunpack.c.l.b16 %v2330
        %v2528 = vunpack.c.h.b16 %v2330
        %v2529 = vunpack.c.l.b16 %v2331
        %v2530 = vunpack.c.h.b16 %v2331
        %v2531 = vunpack.c.l.b16 %v2332
        %v2532 = vunpack.c.h.b16 %v2332
        %v2533 = vunpack.c.l.b16 %v2333
        %v2534 = vunpack.c.h.b16 %v2333
        %v2535 = vunpack.c.l.b16 %v2334
        %v2536 = vunpack.c.h.b16 %v2334
        %v2537 = vpack.c.b16 %v2413, %v2409
        %v2538 = vpack.c.b16 %v2414, %v2410
        %v2539 = vpack.c.b16 %v2415, %v2411
        %v2540 = vpack.c.b16 %v2416, %v2412
        %v2541 = vpack.c.b16 %v2421, %v2417
        %v2542 = vpack.c.b16 %v2422, %v2418
        %v2543 = vpack.c.b16 %v2423, %v2419
        %v2544 = vpack.c.b16 %v2424, %v2420
        %v2545 = vpack.c.b16 %v2429, %v2425
        %v2546 = vpack.c.b16 %v2430, %v2426
        %v2547 = vpack.c.b16 %v2431, %v2427
        %v2548 = vpack.c.b16 %v2432, %v2428
        %v2549 = vpack.c.b16 %v2437, %v2433
        %v2550 = vpack.c.b16 %v2438, %v2434
        %v2551 = vpack.c.b16 %v2439, %v2435
        %v2552 = vpack.c.b16 %v2440, %v2436
        %v2553 = vpack.c.b16 %v2445, %v2441
        %v2554 = vpack.c.b16 %v2446, %v2442
        %v2555 = vpack.c.b16 %v2447, %v2443
        %v2556 = vpack.c.b16 %v2448, %v2444
        %v2557 = vpack.c.b16 %v2453, %v2449
        %v2558 = vpack.c.b16 %v2454, %v2450
        %v2559 = vpack.c.b16 %v2455, %v2451
        %v2560 = vpack.c.b16 %v2456, %v2452
        %v2561 = vpack.c.b16 %v2461, %v2457
        %v2562 = vpack.c.b16 %v2462, %v2458
        %v2563 = vpack.c.b16 %v2463, %v2459
        %v2564 = vpack.c.b16 %v2464, %v2460
        %v2565 = vpack.c.b16 %v2469, %v2465
        %v2566 = vpack.c.b16 %v2470, %v2466
        %v2567 = vpack.c.b16 %v2471, %v2467
        %v2568 = vpack.c.b16 %v2472, %v2468
        %v2569 = vpack.c.b16 %v2477, %v2473
        %v2570 = vpack.c.b16 %v2478, %v2474
        %v2571 = vpack.c.b16 %v2479, %v2475
        %v2572 = vpack.c.b16 %v2480, %v2476
        %v2573 = vpack.c.b16 %v2485, %v2481
        %v2574 = vpack.c.b16 %v2486, %v2482
        %v2575 = vpack.c.b16 %v2487, %v2483
        %v2576 = vpack.c.b16 %v2488, %v2484
        %v2577 = vpack.c.b16 %v2493, %v2489
        %v2578 = vpack.c.b16 %v2494, %v2490
        %v2579 = vpack.c.b16 %v2495, %v2491
        %v2580 = vpack.c.b16 %v2496, %v2492
        %v2581 = vpack.c.b16 %v2501, %v2497
        %v2582 = vpack.c.b16 %v2502, %v2498
        %v2583 = vpack.c.b16 %v2503, %v2499
        %v2584 = vpack.c.b16 %v2504, %v2500
        %v2585 = vpack.c.b16 %v2509, %v2505
        %v2586 = vpack.c.b16 %v2510, %v2506
        %v2587 = vpack.c.b16 %v2511, %v2507
        %v2588 = vpack.c.b16 %v2512, %v2508
        %v2589 = vpack.c.b16 %v2517, %v2513
        %v2590 = vpack.c.b16 %v2518, %v2514
        %v2591 = vpack.c.b16 %v2519, %v2515
        %v2592 = vpack.c.b16 %v2520, %v2516
        %v2593 = vpack.c.b16 %v2525, %v2521
        %v2594 = vpack.c.b16 %v2526, %v2522
        %v2595 = vpack.c.b16 %v2527, %v2523
        %v2596 = vpack.c.b16 %v2528, %v2524
        %v2597 = vpack.c.b16 %v2533, %v2529
        %v2598 = vpack.c.b16 %v2534, %v2530
        %v2599 = vpack.c.b16 %v2535, %v2531
        %v2600 = vpack.c.b16 %v2536, %v2532
        %2665 = vmatpush.bf16.msra.mxu0 %v2565
        %2666 = vmatpush.bf16.msra.mxu0 %v2561
        %2667 = vmatpush.bf16.msra.mxu0 %v2557
        %2668 = vmatpush.bf16.msra.mxu0 %v2553
        %2669 = vmatpush.bf16.msra.mxu0 %v2549
        %2670 = vmatpush.bf16.msra.mxu0 %v2545
        %2671 = vmatpush.bf16.msra.mxu0 %v2541
        %2672 = vmatpush.bf16.msra.mxu0 %v2537
        %2673 = vmatmul.bf16.gmra.mxu0 %v2269
        %v2674 = vpop.f32.mrf.mxu0
        %v2675 = vadd.f32 %v2337, %v2674
        %v2676 = vpop.f32.mrf.mxu0
        %2677 = vdwg.mxu0
        %2678 = vmatpush.bf16.msra.mxu0 %v2597
        %2679 = vmatpush.bf16.msra.mxu0 %v2593
        %2680 = vmatpush.bf16.msra.mxu0 %v2589
        %2681 = vmatpush.bf16.msra.mxu0 %v2585
        %2682 = vmatpush.bf16.msra.mxu0 %v2581
        %2683 = vmatpush.bf16.msra.mxu0 %v2577
        %2684 = vmatpush.bf16.msra.mxu0 %v2573
        %2685 = vmatpush.bf16.msra.mxu0 %v2569
        %2686 = vmatmul.bf16.gmra.mxu0 %v2270
        %v2687 = vpop.f32.mrf.mxu0
        %v2688 = vadd.f32 %v2675, %v2687
        %v2689 = vpop.f32.mrf.mxu0
        %2690 = vdwg.mxu0
        %2691 = vmatpush.bf16.msra.mxu0 %v2566
        %2692 = vmatpush.bf16.msra.mxu0 %v2562
        %2693 = vmatpush.bf16.msra.mxu0 %v2558
        %2694 = vmatpush.bf16.msra.mxu0 %v2554
        %2695 = vmatpush.bf16.msra.mxu0 %v2550
        %2696 = vmatpush.bf16.msra.mxu0 %v2546
        %2697 = vmatpush.bf16.msra.mxu0 %v2542
        %2698 = vmatpush.bf16.msra.mxu0 %v2538
        %2699 = vmatmul.bf16.gmra.mxu0 %v2269
        %v2700 = vpop.f32.mrf.mxu0
        %v2701 = vadd.f32 %v2338, %v2700
        %v2702 = vpop.f32.mrf.mxu0
        %2703 = vdwg.mxu0
        %2704 = vmatpush.bf16.msra.mxu0 %v2598
        %2705 = vmatpush.bf16.msra.mxu0 %v2594
        %2706 = vmatpush.bf16.msra.mxu0 %v2590
        %2707 = vmatpush.bf16.msra.mxu0 %v2586
        %2708 = vmatpush.bf16.msra.mxu0 %v2582
        %2709 = vmatpush.bf16.msra.mxu0 %v2578
        %2710 = vmatpush.bf16.msra.mxu0 %v2574
        %2711 = vmatpush.bf16.msra.mxu0 %v2570
        %2712 = vmatmul.bf16.gmra.mxu0 %v2270
        %v2713 = vpop.f32.mrf.mxu0
        %v2714 = vadd.f32 %v2701, %v2713
        %v2715 = vpop.f32.mrf.mxu0
        %2716 = vdwg.mxu0
        %2717 = vmatpush.bf16.msra.mxu0 %v2567
        %2718 = vmatpush.bf16.msra.mxu0 %v2563
        %2719 = vmatpush.bf16.msra.mxu0 %v2559
        %2720 = vmatpush.bf16.msra.mxu0 %v2555
        %2721 = vmatpush.bf16.msra.mxu0 %v2551
        %2722 = vmatpush.bf16.msra.mxu0 %v2547
        %2723 = vmatpush.bf16.msra.mxu0 %v2543
        %2724 = vmatpush.bf16.msra.mxu0 %v2539
        %2725 = vmatmul.bf16.gmra.mxu0 %v2269
        %v2726 = vpop.f32.mrf.mxu0
        %v2727 = vadd.f32 %v2339, %v2726
        %v2728 = vpop.f32.mrf.mxu0
        %2729 = vdwg.mxu0
        %2730 = vmatpush.bf16.msra.mxu0 %v2599
        %2731 = vmatpush.bf16.msra.mxu0 %v2595
        %2732 = vmatpush.bf16.msra.mxu0 %v2591
        %2733 = vmatpush.bf16.msra.mxu0 %v2587
        %2734 = vmatpush.bf16.msra.mxu0 %v2583
        %2735 = vmatpush.bf16.msra.mxu0 %v2579
        %2736 = vmatpush.bf16.msra.mxu0 %v2575
        %2737 = vmatpush.bf16.msra.mxu0 %v2571
        %2738 = vmatmul.bf16.gmra.mxu0 %v2270
        %v2739 = vpop.f32.mrf.mxu0
        %v2740 = vadd.f32 %v2727, %v2739
        %v2741 = vpop.f32.mrf.mxu0
        %2742 = vdwg.mxu0
        %2743 = vmatpush.bf16.msra.mxu0 %v2568
        %2744 = vmatpush.bf16.msra.mxu0 %v2564
        %2745 = vmatpush.bf16.msra.mxu0 %v2560
        %2746 = vmatpush.bf16.msra.mxu0 %v2556
        %2747 = vmatpush.bf16.msra.mxu0 %v2552
        %2748 = vmatpush.bf16.msra.mxu0 %v2548
        %2749 = vmatpush.bf16.msra.mxu0 %v2544
        %2750 = vmatpush.bf16.msra.mxu0 %v2540
        %2751 = vmatmul.bf16.gmra.mxu0 %v2269
        %v2752 = vpop.f32.mrf.mxu0
        %v2753 = vadd.f32 %v2340, %v2752
        %v2754 = vpop.f32.mrf.mxu0
        %2755 = vdwg.mxu0
        %2756 = vmatpush.bf16.msra.mxu0 %v2600
        %2757 = vmatpush.bf16.msra.mxu0 %v2596
        %2758 = vmatpush.bf16.msra.mxu0 %v2592
        %2759 = vmatpush.bf16.msra.mxu0 %v2588
        %2760 = vmatpush.bf16.msra.mxu0 %v2584
        %2761 = vmatpush.bf16.msra.mxu0 %v2580
        %2762 = vmatpush.bf16.msra.mxu0 %v2576
        %2763 = vmatpush.bf16.msra.mxu0 %v2572
        %2764 = vmatmul.bf16.gmra.mxu0 %v2270
        %v2765 = vpop.f32.mrf.mxu0
        %v2766 = vadd.f32 %v2753, %v2765
        %v2767 = vpop.f32.mrf.mxu0
        %2768 = vdwg.mxu0
        %v2769 = vadd.f32 %v2688, %v2714
        %v2770 = vadd.f32 %v2769, %v2740
        %v2771 = vadd.f32 %v2770, %v2766
        %2772 = vadd.xlane.f32.xlu0 %v2771
        %v2773 = vpop.xlane.xlu0 %2772
        %v2774 = vmul.f32 %v2688, %v2688
        %v2775 = vmul.f32 %v2714, %v2714
        %v2776 = vmul.f32 %v2740, %v2740
        %v2777 = vmul.f32 %v2766, %v2766
        %v2778 = vadd.f32 %v2774, %v2775
        %v2779 = vadd.f32 %v2778, %v2776
        %v2780 = vadd.f32 %v2779, %v2777
        %2781 = vadd.xlane.f32.xlu0 %v2780
        %v2782 = vpop.xlane.xlu0 %2781
        %v2783 = vmul.f32 %v2773, 0.001953125
        %v2784 = vmul.f32 %v2782, 0.001953125
        %v2785 = vmul.f32 %v2783, %v2783
        %v2786 = vsub.f32 %v2784, %v2785
        %v2787 = vmax.f32 %v2786, 0.0
        %v2788 = vadd.f32 %v2787, 1e-05
        %v2789 = vrsqrt.pop %v2788
        %v2790 = vmul.f32 %v2789, %v2788
        %v2791 = vmul.f32 %v2790, %v2789
        %v2792 = vmul.f32 0.5, %v2791
        %v2793 = vsub.f32 1.5, %v2792
        %v2794 = vmul.f32 %v2789, %v2793
        %vm2795 = vweird.f32 %v2788
        %vm2796 = vweird.f32 %v2789
        %vm2797 = vmor %vm2795, %vm2796
        %v2798 = vsel %vm2797, %v2789, %v2794
        %v2799 = vsub.f32 %v2688, %v2783
        %v2800 = vsub.f32 %v2714, %v2783
        %v2801 = vsub.f32 %v2740, %v2783
        %v2802 = vsub.f32 %v2766, %v2783
        %v2803 = vmul.f32 %v2799, %v2798
        %v2804 = vmul.f32 %v2800, %v2798
        %v2805 = vmul.f32 %v2801, %v2798
        %v2806 = vmul.f32 %v2802, %v2798
        %v2807 = vld [vmem:[%s19] sm:$0xf]
        %v2809 = vperm.slane %v2807, 0
        %v2810 = vperm.slane %v2807, 1
        %v2811 = vperm.slane %v2807, 2
        %v2812 = vperm.slane %v2807, 3
        %v2817 = vmul.f32 %v2803, %v2809
        %v2818 = vmul.f32 %v2804, %v2810
        %v2819 = vmul.f32 %v2805, %v2811
        %v2820 = vmul.f32 %v2806, %v2812
        %v2821 = vld [vmem:[%s20] sm:$0xf]
        %v2823 = vperm.slane %v2821, 0
        %v2824 = vperm.slane %v2821, 1
        %v2825 = vperm.slane %v2821, 2
        %v2826 = vperm.slane %v2821, 3
        %v2831 = vadd.f32 %v2817, %v2823
        %v2832 = vadd.f32 %v2818, %v2824
        %v2833 = vadd.f32 %v2819, %v2825
        %v2834 = vadd.f32 %v2820, %v2826
        %v2835 = vmax.f32 %v2831, 0.0
        %v2836 = vmax.f32 %v2832, 0.0
        %v2837 = vmax.f32 %v2833, 0.0
        %v2838 = vmax.f32 %v2834, 0.0
        %v2839 = vpack.c.bf16 %v2835, %v2835
        %v2840 = vpack.c.bf16 %v2836, %v2836
        %v2841 = vpack.c.bf16 %v2837, %v2837
        %v2842 = vpack.c.bf16 %v2838, %v2838
        %v2843 = vld [vmem:[#allocation29] sm:$0xf]
        %v2844 = vld [vmem:[#allocation29 + $0x4] sm:$0xf]
        %v2845 = vld [vmem:[#allocation29 + $0x8] sm:$0xf]
        %v2846 = vld [vmem:[#allocation29 + $0xc] sm:$0xf]
        %v2847 = vld [vmem:[#allocation29 + $0x10] sm:$0xf]
        %v2848 = vld [vmem:[#allocation29 + $0x14] sm:$0xf]
        %v2849 = vld [vmem:[#allocation29 + $0x18] sm:$0xf]
        %v2850 = vld [vmem:[#allocation29 + $0x1c] sm:$0xf]
        %v2851 = vld [vmem:[#allocation29 + $0x20] sm:$0xf]
        %v2852 = vld [vmem:[#allocation29 + $0x24] sm:$0xf]
        %v2853 = vld [vmem:[#allocation29 + $0x28] sm:$0xf]
        %v2854 = vld [vmem:[#allocation29 + $0x2c] sm:$0xf]
        %v2855 = vld [vmem:[#allocation29 + $0x30] sm:$0xf]
        %v2856 = vld [vmem:[#allocation29 + $0x34] sm:$0xf]
        %v2857 = vld [vmem:[#allocation29 + $0x38] sm:$0xf]
        %v2858 = vld [vmem:[#allocation29 + $0x3c] sm:$0xf]
        %v2859 = vld [vmem:[#allocation29 + $0x40] sm:$0xf]
        %v2860 = vld [vmem:[#allocation29 + $0x44] sm:$0xf]
        %v2861 = vld [vmem:[#allocation29 + $0x48] sm:$0xf]
        %v2862 = vld [vmem:[#allocation29 + $0x4c] sm:$0xf]
        %v2863 = vld [vmem:[#allocation29 + $0x50] sm:$0xf]
        %v2864 = vld [vmem:[#allocation29 + $0x54] sm:$0xf]
        %v2865 = vld [vmem:[#allocation29 + $0x58] sm:$0xf]
        %v2866 = vld [vmem:[#allocation29 + $0x5c] sm:$0xf]
        %v2867 = vld [vmem:[#allocation29 + $0x60] sm:$0xf]
        %v2868 = vld [vmem:[#allocation29 + $0x64] sm:$0xf]
        %v2869 = vld [vmem:[#allocation29 + $0x68] sm:$0xf]
        %v2870 = vld [vmem:[#allocation29 + $0x6c] sm:$0xf]
        %v2871 = vld [vmem:[#allocation29 + $0x70] sm:$0xf]
        %v2872 = vld [vmem:[#allocation29 + $0x74] sm:$0xf]
        %v2873 = vld [vmem:[#allocation29 + $0x78] sm:$0xf]
        %v2874 = vld [vmem:[#allocation29 + $0x7c] sm:$0xf]
        %v2875 = vld [vmem:[#allocation29 + $0x80] sm:$0xf]
        %v2876 = vld [vmem:[#allocation29 + $0x84] sm:$0xf]
        %v2877 = vld [vmem:[#allocation29 + $0x88] sm:$0xf]
        %v2878 = vld [vmem:[#allocation29 + $0x8c] sm:$0xf]
        %v2879 = vld [vmem:[#allocation29 + $0x90] sm:$0xf]
        %v2880 = vld [vmem:[#allocation29 + $0x94] sm:$0xf]
        %v2881 = vld [vmem:[#allocation29 + $0x98] sm:$0xf]
        %v2882 = vld [vmem:[#allocation29 + $0x9c] sm:$0xf]
        %v2883 = vld [vmem:[#allocation29 + $0xa0] sm:$0xf]
        %v2884 = vld [vmem:[#allocation29 + $0xa4] sm:$0xf]
        %v2885 = vld [vmem:[#allocation29 + $0xa8] sm:$0xf]
        %v2886 = vld [vmem:[#allocation29 + $0xac] sm:$0xf]
        %v2887 = vld [vmem:[#allocation29 + $0xb0] sm:$0xf]
        %v2888 = vld [vmem:[#allocation29 + $0xb4] sm:$0xf]
        %v2889 = vld [vmem:[#allocation29 + $0xb8] sm:$0xf]
        %v2890 = vld [vmem:[#allocation29 + $0xbc] sm:$0xf]
        %v2891 = vld [vmem:[#allocation29 + $0xc0] sm:$0xf]
        %v2892 = vld [vmem:[#allocation29 + $0xc4] sm:$0xf]
        %v2893 = vld [vmem:[#allocation29 + $0xc8] sm:$0xf]
        %v2894 = vld [vmem:[#allocation29 + $0xcc] sm:$0xf]
        %v2895 = vld [vmem:[#allocation29 + $0xd0] sm:$0xf]
        %v2896 = vld [vmem:[#allocation29 + $0xd4] sm:$0xf]
        %v2897 = vld [vmem:[#allocation29 + $0xd8] sm:$0xf]
        %v2898 = vld [vmem:[#allocation29 + $0xdc] sm:$0xf]
        %v2899 = vld [vmem:[#allocation29 + $0xe0] sm:$0xf]
        %v2900 = vld [vmem:[#allocation29 + $0xe4] sm:$0xf]
        %v2901 = vld [vmem:[#allocation29 + $0xe8] sm:$0xf]
        %v2902 = vld [vmem:[#allocation29 + $0xec] sm:$0xf]
        %v2903 = vld [vmem:[#allocation29 + $0xf0] sm:$0xf]
        %v2904 = vld [vmem:[#allocation29 + $0xf4] sm:$0xf]
        %v2905 = vld [vmem:[#allocation29 + $0xf8] sm:$0xf]
        %v2906 = vld [vmem:[#allocation29 + $0xfc] sm:$0xf]
        %v2907 = vld [vmem:[#allocation31] sm:$0xf]
        %v2908 = vld [vmem:[#allocation31 + $0x4] sm:$0xf]
        %v2909 = vld [vmem:[#allocation31 + $0x8] sm:$0xf]
        %v2910 = vld [vmem:[#allocation31 + $0xc] sm:$0xf]
        %v2911 = vld [vmem:[#allocation31 + $0x10] sm:$0xf]
        %v2912 = vld [vmem:[#allocation31 + $0x14] sm:$0xf]
        %v2913 = vld [vmem:[#allocation31 + $0x18] sm:$0xf]
        %v2914 = vld [vmem:[#allocation31 + $0x1c] sm:$0xf]
        %v2915 = vld [vmem:[#allocation31 + $0x20] sm:$0xf]
        %v2916 = vld [vmem:[#allocation31 + $0x24] sm:$0xf]
        %v2917 = vld [vmem:[#allocation31 + $0x28] sm:$0xf]
        %v2918 = vld [vmem:[#allocation31 + $0x2c] sm:$0xf]
        %v2919 = vld [vmem:[#allocation31 + $0x30] sm:$0xf]
        %v2920 = vld [vmem:[#allocation31 + $0x34] sm:$0xf]
        %v2921 = vld [vmem:[#allocation31 + $0x38] sm:$0xf]
        %v2922 = vld [vmem:[#allocation31 + $0x3c] sm:$0xf]
        %v2939 = vunpack.c.l.b16 %v2907
        %v2940 = vunpack.c.l.b16 %v2908
        %v2941 = vunpack.c.l.b16 %v2909
        %v2942 = vunpack.c.l.b16 %v2910
        %v2943 = vunpack.c.l.b16 %v2911
        %v2944 = vunpack.c.l.b16 %v2912
        %v2945 = vunpack.c.l.b16 %v2913
        %v2946 = vunpack.c.l.b16 %v2914
        %v2947 = vunpack.c.l.b16 %v2915
        %v2948 = vunpack.c.l.b16 %v2916
        %v2949 = vunpack.c.l.b16 %v2917
        %v2950 = vunpack.c.l.b16 %v2918
        %v2951 = vunpack.c.l.b16 %v2919
        %v2952 = vunpack.c.l.b16 %v2920
        %v2953 = vunpack.c.l.b16 %v2921
        %v2954 = vunpack.c.l.b16 %v2922
        %v2955 = vpack.c.b16 %v2940, %v2939
        %v2956 = vpack.c.b16 %v2942, %v2941
        %v2957 = vpack.c.b16 %v2944, %v2943
        %v2958 = vpack.c.b16 %v2946, %v2945
        %v2959 = vpack.c.b16 %v2948, %v2947
        %v2960 = vpack.c.b16 %v2950, %v2949
        %v2961 = vpack.c.b16 %v2952, %v2951
        %v2962 = vpack.c.b16 %v2954, %v2953
        %2971 = vmatpush.bf16.msra.mxu0 %v2962
        %2972 = vmatpush.bf16.msra.mxu0 %v2961
        %2973 = vmatpush.bf16.msra.mxu0 %v2960
        %2974 = vmatpush.bf16.msra.mxu0 %v2959
        %2975 = vmatpush.bf16.msra.mxu0 %v2958
        %2976 = vmatpush.bf16.msra.mxu0 %v2957
        %2977 = vmatpush.bf16.msra.mxu0 %v2956
        %2978 = vmatpush.bf16.msra.mxu0 %v2955
        %2979 = vmatmul.bf16.gmra.mxu0 %v1031
        %v2980 = vpop.f32.mrf.mxu0
        %v2981 = vadd.f32 0.0, %v2980
        %v2982 = vpop.f32.mrf.mxu0
        %2983 = vdwg.mxu0
        %v3048 = vunpack.c.l.b16 %v2843
        %v3049 = vunpack.c.l.b16 %v2844
        %v3050 = vunpack.c.l.b16 %v2845
        %v3051 = vunpack.c.l.b16 %v2846
        %v3052 = vunpack.c.l.b16 %v2847
        %v3053 = vunpack.c.l.b16 %v2848
        %v3054 = vunpack.c.l.b16 %v2849
        %v3055 = vunpack.c.l.b16 %v2850
        %v3056 = vunpack.c.l.b16 %v2851
        %v3057 = vunpack.c.l.b16 %v2852
        %v3058 = vunpack.c.l.b16 %v2853
        %v3059 = vunpack.c.l.b16 %v2854
        %v3060 = vunpack.c.l.b16 %v2855
        %v3061 = vunpack.c.l.b16 %v2856
        %v3062 = vunpack.c.l.b16 %v2857
        %v3063 = vunpack.c.l.b16 %v2858
        %v3064 = vunpack.c.l.b16 %v2859
        %v3065 = vunpack.c.l.b16 %v2860
        %v3066 = vunpack.c.l.b16 %v2861
        %v3067 = vunpack.c.l.b16 %v2862
        %v3068 = vunpack.c.l.b16 %v2863
        %v3069 = vunpack.c.l.b16 %v2864
        %v3070 = vunpack.c.l.b16 %v2865
        %v3071 = vunpack.c.l.b16 %v2866
        %v3072 = vunpack.c.l.b16 %v2867
        %v3073 = vunpack.c.l.b16 %v2868
        %v3074 = vunpack.c.l.b16 %v2869
        %v3075 = vunpack.c.l.b16 %v2870
        %v3076 = vunpack.c.l.b16 %v2871
        %v3077 = vunpack.c.l.b16 %v2872
        %v3078 = vunpack.c.l.b16 %v2873
        %v3079 = vunpack.c.l.b16 %v2874
        %v3080 = vunpack.c.l.b16 %v2875
        %v3081 = vunpack.c.l.b16 %v2876
        %v3082 = vunpack.c.l.b16 %v2877
        %v3083 = vunpack.c.l.b16 %v2878
        %v3084 = vunpack.c.l.b16 %v2879
        %v3085 = vunpack.c.l.b16 %v2880
        %v3086 = vunpack.c.l.b16 %v2881
        %v3087 = vunpack.c.l.b16 %v2882
        %v3088 = vunpack.c.l.b16 %v2883
        %v3089 = vunpack.c.l.b16 %v2884
        %v3090 = vunpack.c.l.b16 %v2885
        %v3091 = vunpack.c.l.b16 %v2886
        %v3092 = vunpack.c.l.b16 %v2887
        %v3093 = vunpack.c.l.b16 %v2888
        %v3094 = vunpack.c.l.b16 %v2889
        %v3095 = vunpack.c.l.b16 %v2890
        %v3096 = vunpack.c.l.b16 %v2891
        %v3097 = vunpack.c.l.b16 %v2892
        %v3098 = vunpack.c.l.b16 %v2893
        %v3099 = vunpack.c.l.b16 %v2894
        %v3100 = vunpack.c.l.b16 %v2895
        %v3101 = vunpack.c.l.b16 %v2896
        %v3102 = vunpack.c.l.b16 %v2897
        %v3103 = vunpack.c.l.b16 %v2898
        %v3104 = vunpack.c.l.b16 %v2899
        %v3105 = vunpack.c.l.b16 %v2900
        %v3106 = vunpack.c.l.b16 %v2901
        %v3107 = vunpack.c.l.b16 %v2902
        %v3108 = vunpack.c.l.b16 %v2903
        %v3109 = vunpack.c.l.b16 %v2904
        %v3110 = vunpack.c.l.b16 %v2905
        %v3111 = vunpack.c.l.b16 %v2906
        %v3112 = vpack.c.b16 %v3049, %v3048
        %v3113 = vpack.c.b16 %v3051, %v3050
        %v3114 = vpack.c.b16 %v3053, %v3052
        %v3115 = vpack.c.b16 %v3055, %v3054
        %v3116 = vpack.c.b16 %v3057, %v3056
        %v3117 = vpack.c.b16 %v3059, %v3058
        %v3118 = vpack.c.b16 %v3061, %v3060
        %v3119 = vpack.c.b16 %v3063, %v3062
        %v3120 = vpack.c.b16 %v3065, %v3064
        %v3121 = vpack.c.b16 %v3067, %v3066
        %v3122 = vpack.c.b16 %v3069, %v3068
        %v3123 = vpack.c.b16 %v3071, %v3070
        %v3124 = vpack.c.b16 %v3073, %v3072
        %v3125 = vpack.c.b16 %v3075, %v3074
        %v3126 = vpack.c.b16 %v3077, %v3076
        %v3127 = vpack.c.b16 %v3079, %v3078
        %v3128 = vpack.c.b16 %v3081, %v3080
        %v3129 = vpack.c.b16 %v3083, %v3082
        %v3130 = vpack.c.b16 %v3085, %v3084
        %v3131 = vpack.c.b16 %v3087, %v3086
        %v3132 = vpack.c.b16 %v3089, %v3088
        %v3133 = vpack.c.b16 %v3091, %v3090
        %v3134 = vpack.c.b16 %v3093, %v3092
        %v3135 = vpack.c.b16 %v3095, %v3094
        %v3136 = vpack.c.b16 %v3097, %v3096
        %v3137 = vpack.c.b16 %v3099, %v3098
        %v3138 = vpack.c.b16 %v3101, %v3100
        %v3139 = vpack.c.b16 %v3103, %v3102
        %v3140 = vpack.c.b16 %v3105, %v3104
        %v3141 = vpack.c.b16 %v3107, %v3106
        %v3142 = vpack.c.b16 %v3109, %v3108
        %v3143 = vpack.c.b16 %v3111, %v3110
        %3176 = vmatpush.bf16.msra.mxu0 %v3119
        %3177 = vmatpush.bf16.msra.mxu0 %v3118
        %3178 = vmatpush.bf16.msra.mxu0 %v3117
        %3179 = vmatpush.bf16.msra.mxu0 %v3116
        %3180 = vmatpush.bf16.msra.mxu0 %v3115
        %3181 = vmatpush.bf16.msra.mxu0 %v3114
        %3182 = vmatpush.bf16.msra.mxu0 %v3113
        %3183 = vmatpush.bf16.msra.mxu0 %v3112
        %3184 = vmatmul.bf16.gmra.mxu0 %v2839
        %v3185 = vpop.f32.mrf.mxu0
        %v3186 = vadd.f32 %v2981, %v3185
        %v3187 = vpop.f32.mrf.mxu0
        %3188 = vdwg.mxu0
        %3189 = vmatpush.bf16.msra.mxu0 %v3127
        %3190 = vmatpush.bf16.msra.mxu0 %v3126
        %3191 = vmatpush.bf16.msra.mxu0 %v3125
        %3192 = vmatpush.bf16.msra.mxu0 %v3124
        %3193 = vmatpush.bf16.msra.mxu0 %v3123
        %3194 = vmatpush.bf16.msra.mxu0 %v3122
        %3195 = vmatpush.bf16.msra.mxu0 %v3121
        %3196 = vmatpush.bf16.msra.mxu0 %v3120
        %3197 = vmatmul.bf16.gmra.mxu0 %v2840
        %v3198 = vpop.f32.mrf.mxu0
        %v3199 = vadd.f32 %v3186, %v3198
        %v3200 = vpop.f32.mrf.mxu0
        %3201 = vdwg.mxu0
        %3202 = vmatpush.bf16.msra.mxu0 %v3135
        %3203 = vmatpush.bf16.msra.mxu0 %v3134
        %3204 = vmatpush.bf16.msra.mxu0 %v3133
        %3205 = vmatpush.bf16.msra.mxu0 %v3132
        %3206 = vmatpush.bf16.msra.mxu0 %v3131
        %3207 = vmatpush.bf16.msra.mxu0 %v3130
        %3208 = vmatpush.bf16.msra.mxu0 %v3129
        %3209 = vmatpush.bf16.msra.mxu0 %v3128
        %3210 = vmatmul.bf16.gmra.mxu0 %v2841
        %v3211 = vpop.f32.mrf.mxu0
        %v3212 = vadd.f32 %v3199, %v3211
        %v3213 = vpop.f32.mrf.mxu0
        %3214 = vdwg.mxu0
        %3215 = vmatpush.bf16.msra.mxu0 %v3143
        %3216 = vmatpush.bf16.msra.mxu0 %v3142
        %3217 = vmatpush.bf16.msra.mxu0 %v3141
        %3218 = vmatpush.bf16.msra.mxu0 %v3140
        %3219 = vmatpush.bf16.msra.mxu0 %v3139
        %3220 = vmatpush.bf16.msra.mxu0 %v3138
        %3221 = vmatpush.bf16.msra.mxu0 %v3137
        %3222 = vmatpush.bf16.msra.mxu0 %v3136
        %3223 = vmatmul.bf16.gmra.mxu0 %v2842
        %v3224 = vpop.f32.mrf.mxu0
        %v3225 = vadd.f32 %v3212, %v3224
        %v3226 = vpop.f32.mrf.mxu0
        %3227 = vdwg.mxu0
        %v3228 = vld [vmem:[%s23] sm:$0x1]
        %v3230 = vperm.slane %v3228, 0
        %v3232 = vadd.f32 %v3225, %v3230
        %3233 = vst [vmem:[%s1029] sm:$0xff] %v3232
        %s3234 = sand.u32 %s567, 1
        %s3235 = scalar_lea.sflag [#allocation4], %s3234
        %s3236 = sand.u32 %s567, 1
        %s3237 = smul.addr %s3236, 8
        %s3238 = scalar_lea.vmem [#allocation32], %s3237
        // Predicated region
        $region193: #{tpu_custom_call.1} parent=115 // pred_check
          %p3239 = pneg %p577
        $region194: #{tpu_custom_call.1} parent=115 // pred_check_branch
          %3241 = sbr.rel (%p3239) target = $region196
        $region195: #{tpu_custom_call.1} parent=115 // pred_region
          %3243 = vsyncadd %s3235, 0
          %s3244 = smul.addr %s50, 8
          %s3245 = scalar_lea.hbm %s24, %s3244
          %s3247 = sshll.u32 %s3238, 4
          %s3248 = int_to_ptr.vmem [resolvable:$true] %s3247
          %s3249 = sshll.u32 %s3245, 4
          %s3250 = int_to_ptr.hbm [resolvable:$true] %s3249
          %3252 = dma.vmem_to_hbm [thread:$0]  %s3248, 128, %s3250, %s3235
        $region196: #{tpu_custom_call.1} parent=115 // pred_fallthru
          _
      $region116: #{tpu_custom_call.1} parent=5 // pred_fallthru
        _
      %p3253 = scmp.le.s32.totalorder 2, %s45
      // Predicated region
      $region197: #{tpu_custom_call.1} parent=5 // pred_check
        %p3254 = pneg %p3253
      $region198: #{tpu_custom_call.1} parent=5 // pred_check_branch
        %3256 = sbr.rel (%p3254) target = $region200
      $region199: #{tpu_custom_call.1} parent=5 // pred_region
        %s3257 = ssub.s32 %s45, 2
        // Predicated region
        $region201: #{tpu_custom_call.1} parent=199 // pred_check
          %p3258 = pneg %p583
        $region202: #{tpu_custom_call.1} parent=199 // pred_check_branch
          %3260 = sbr.rel (%p3258) target = $region204
        $region203: #{tpu_custom_call.1} parent=199 // pred_region
          %s3261 = sand.u32 %s568, 1
          %s3262 = scalar_lea.sflag [#allocation4], %s3261
          %s3263 = sand.u32 %s568, 1
          %s3264 = smul.addr %s3263, 8
          %s3265 = scalar_lea.vmem [#allocation32], %s3264
          %3267 = dma.done %s3262, 128
        $region204: #{tpu_custom_call.1} parent=199 // pred_fallthru
          _
      $region200: #{tpu_custom_call.1} parent=5 // pred_fallthru
        _
    $region6: #{tpu_custom_call.1} parent=1 // loop_footer
      %s49 = sadd.s32 1, %s45
    $region7: #{tpu_custom_call.1} parent=1 // loop_footer_branch
      %44 = sbr.rel target = $region3
    $region8: #{tpu_custom_call.1} parent=1 // loop_exit
      _
    %3268 = vsyncpa [#allocation3], 1
    %s3269 = scalar_lea.sflag [#allocation3], 1
    %3270 = vsyncpa %s3269, 1
    %3271 = vsyncpa [#allocation6], 1
    %3272 = vsyncpa [#allocation9], 1
    %3273 = vsyncpa [#allocation12], 1
    %3274 = vsyncpa [#allocation15], 1
    %3275 = vsyncpa [#allocation18], 1
    %3276 = vsyncpa [#allocation21], 1
    %3277 = vsyncpa [#allocation24], 1
    %3278 = vsyncpa [#allocation27], 1
    %3279 = vsyncpa [#allocation30], 1
    %3280 = vsyncpa [#allocation4], 1
    %s3281 = scalar_lea.sflag [#allocation4], 1
    %3282 = vsyncpa %s3281, 1

</llo_original>
